<compile_context>
chip_gen: v6e
topology: v6e:2x2x1
jax: 0.10.0
libtpu: 0.0.40
codegen_flags: <defaults>
</compile_context>

<pallas_src>
import functools

import jax
import jax.numpy as jnp
from jax.experimental import pallas as pl
from jax.experimental.pallas import tpu as pltpu


def _sigmoid_via_tanh(x):
    # sigmoid(x) == 0.5 * (1 + tanh(0.5 * x)); one EUP tanh instead of
    # exp + reciprocal on the per-step critical path.
    return 0.5 * jnp.tanh(0.5 * x) + 0.5


def _lstm_recurrence_kernel(xp_ref, whh_ref, out_ref, cn_ref, h_scr, c_scr, *,
                            seq_len, time_chunk, hidden_pad):
    """Processes `time_chunk` LSTM timesteps per grid iteration.

    Refs:
      xp_ref:  (Bb, Tc, 4*Hp) bf16  precomputed x_t @ W_ih^T + bias (chunk)
      whh_ref: (Hp, 4*Hp)     bf16  recurrent weights, gate-blocked, VMEM-resident
      out_ref: (Bb, Tc, Hp)   f32   hidden states for this chunk
      cn_ref:  (Bb, Hp)       f32   final cell state (written once, at t == T-1)
      h_scr:   (Bb, Hp)       f32   hidden carry across chunks
      c_scr:   (Bb, Hp)       f32   cell carry across chunks
    """
    chunk = pl.program_id(1)

    @pl.when(chunk == 0)
    def _():
        h_scr[...] = jnp.zeros_like(h_scr)
        c_scr[...] = jnp.zeros_like(c_scr)

    hp = hidden_pad
    h = h_scr[...]
    c = c_scr[...]

    last_chunk = (seq_len - 1) // time_chunk
    last_j = (seq_len - 1) % time_chunk

    hs = []
    for j in range(time_chunk):                      # fully unrolled at trace time
        # One bf16 recurrent GEMM per step (f32 accumulate); W_hh streams from
        # its resident VMEM ref (never bound to a value outside the loop).
        # TODO(synk): hold W_hh stationary across the whole chunk via
        # pltpu.matmul_push_rhs / matmul_acc_lhs / matmul_pop to amortize the
        # MXU weight push over all Tc steps (tiny-batch LHS case).
        gates = (xp_ref[:, j, :].astype(jnp.float32) +
                 jnp.dot(h.astype(jnp.bfloat16), whh_ref[...],
                         preferred_element_type=jnp.float32))
        # Gate slices are whole 128-lane blocks (hp % 128 == 0).
        i_g = _sigmoid_via_tanh(gates[:, 0 * hp:1 * hp])
        f_g = _sigmoid_via_tanh(gates[:, 1 * hp:2 * hp])
        g_g = jnp.tanh(gates[:, 2 * hp:3 * hp])
        o_g = _sigmoid_via_tanh(gates[:, 3 * hp:4 * hp])
        c = f_g * c + i_g * g_g
        h = o_g * jnp.tanh(c)
        hs.append(h)

        if j == last_j:                              # only this step can be t == T-1
            @pl.when(chunk == last_chunk)
            def _(c_final=c):
                cn_ref[...] = c_final.astype(cn_ref.dtype)

    # Single lane-dense AND sublane-dense store of the whole chunk (replaces
    # Tc masked per-timestep vst read-modify-writes).
    out_ref[...] = jnp.stack(hs, axis=1).astype(out_ref.dtype)

    h_scr[...] = h
    c_scr[...] = c


def _pad_gate_blocks(m, hidden, hidden_pad, rows_pad=0):
    """(R, 4H) with gate-blocked columns -> (R + rows_pad, 4*H_pad), zero padded."""
    blocks = []
    for g in range(4):
        blk = m[:, g * hidden:(g + 1) * hidden]
        blocks.append(jnp.pad(blk, ((0, rows_pad), (0, hidden_pad - hidden))))
    return jnp.concatenate(blocks, axis=1)


@functools.partial(jax.jit, static_argnames=("hidden_size", "time_chunk"))
def protein_lstm_layer(x, w_ih, w_hh, b_ih, b_hh, *, hidden_size, time_chunk=32):
    """Forward pass of ProteinLSTMLayer (dropout p=0.0 -> identity).

    Args:
      x:    (B, T, D) float32, batch_first input.
      w_ih: (4H, D)  PyTorch weight_ih_l0 (gate order i, f, g, o).
      w_hh: (4H, H)  PyTorch weight_hh_l0.
      b_ih: (4H,)    PyTorch bias_ih_l0.
      b_hh: (4H,)    PyTorch bias_hh_l0.
    Returns:
      (output, (h_n, c_n)) with output (B, T, H), h_n/c_n (1, B, H).
    """
    B, T, D = x.shape
    H = hidden_size
    # TODO(synk): if production H < 128, packing all 4 gates into ceil(4H/128)
    # lane blocks (instead of a full 128-lane block per gate) cuts padded work.
    Hp = max(128, -(-H // 128) * 128)          # lane-dense / gate-aligned hidden
    G = 4 * Hp

    # Time chunk: multiple of 8 sublanes, no larger than the padded sequence.
    Tc = max(8, (time_chunk // 8) * 8)
    Tc = min(Tc, -(-T // 8) * 8)
    n_chunks = -(-T // Tc)
    T_pad = n_chunks * Tc

    # Batch blocking: split batch across a leading "parallel" grid axis (v7x
    # second TensorCore) only when blocks stay sublane-aligned.
    Bb = 8 if (B >= 16 and B % 8 == 0) else B
    nb = B // Bb

    f32, bf16 = jnp.float32, jnp.bfloat16
    x = x.astype(f32)
    w_ih = jnp.asarray(w_ih, f32)
    w_hh = jnp.asarray(w_hh, f32)
    bias = jnp.asarray(b_ih, f32) + jnp.asarray(b_hh, f32)            # (4H,)

    # Gate-blocked, lane-padded weights: each gate occupies an Hp-wide block.
    wih_p = _pad_gate_blocks(w_ih.T, H, Hp)                           # (D, G)
    whh_p = _pad_gate_blocks(w_hh.T, H, Hp, rows_pad=Hp - H).astype(bf16)  # (Hp, G)
    bias_p = _pad_gate_blocks(bias[None, :], H, Hp)[0]                # (G,)

    # Hoisted input projection over ALL timesteps: one bf16 MXU matmul with
    # f32 accumulation, bias folded; stored in bf16 to halve HBM traffic.
    # TODO(synk): fuse this projection into the kernel (one (B*Tc, D) @ (D, G)
    # dot per chunk) so x_proj never round-trips HBM (biggest win on v5e).
    x_proj = jnp.dot(x.reshape(B * T, D).astype(bf16), wih_p.astype(bf16),
                     preferred_element_type=f32) + bias_p
    x_proj = x_proj.reshape(B, T, G).astype(bf16)
    if T_pad != T:
        x_proj = jnp.pad(x_proj, ((0, 0), (0, T_pad - T), (0, 0)))

    kernel = functools.partial(_lstm_recurrence_kernel, seq_len=T,
                               time_chunk=Tc, hidden_pad=Hp)

    out_pad, c_n_pad = pl.pallas_call(
        kernel,
        out_shape=(
            jax.ShapeDtypeStruct((B, T_pad, Hp), f32),   # batch_first hiddens
            jax.ShapeDtypeStruct((B, Hp), f32),          # final cell state
        ),
        grid_spec=pltpu.PrefetchScalarGridSpec(
            num_scalar_prefetch=0,
            grid=(nb, n_chunks),
            in_specs=[
                pl.BlockSpec((Bb, Tc, G), lambda b, t: (b, t, 0)),    # x_proj chunk
                # W_hh^T: whole bf16 array resident in VMEM for the entire
                # kernel (no double-buffered per-step DMA of an invariant).
                pl.BlockSpec(memory_space=pltpu.MemorySpace.VMEM),
            ],
            out_specs=[
                pl.BlockSpec((Bb, Tc, Hp), lambda b, t: (b, t, 0)),   # hidden chunk
                pl.BlockSpec((Bb, Hp), lambda b, t: (b, 0)),          # c_n (resident)
            ],
            scratch_shapes=[
                pltpu.VMEM((Bb, Hp), f32),   # h carry
                pltpu.VMEM((Bb, Hp), f32),   # c carry
            ],
        ),
        compiler_params=pltpu.CompilerParams(
            dimension_semantics=("parallel", "arbitrary"),  # batch || , time serial
            vmem_limit_bytes=32 * 1024 * 1024,
        ),
    )(x_proj, whh_p)

    output = out_pad[:, :T, :H]
    h_n = output[:, T - 1, :][None]                  # (1, B, H)
    c_n = c_n_pad[:, :H][None]                       # (1, B, H)
    return output, (h_n, c_n)


def _lstm_reference(x, w_ih, w_hh, b_ih, b_hh, hidden_size):
    """Pure-JAX f32 reference matching torch.nn.LSTM semantics."""
    B, T, D = x.shape
    H = hidden_size
    wih_t = w_ih.T
    whh_t = w_hh.T
    bias = b_ih + b_hh

    def step(carry, x_t):
        h, c = carry
        gates = x_t @ wih_t + h @ whh_t + bias
        i = jax.nn.sigmoid(gates[:, 0 * H:1 * H])
        f = jax.nn.sigmoid(gates[:, 1 * H:2 * H])
        g = jnp.tanh(gates[:, 2 * H:3 * H])
        o = jax.nn.sigmoid(gates[:, 3 * H:4 * H])
        c = f * c + i * g
        h = o * jnp.tanh(c)
        return (h, c), h

    init = (jnp.zeros((B, H), jnp.float32), jnp.zeros((B, H), jnp.float32))
    (h_n, c_n), hs = jax.lax.scan(step, init, jnp.transpose(x, (1, 0, 2)))
    return jnp.transpose(hs, (1, 0, 2)), (h_n[None], c_n[None])


if __name__ == "__main__":
    B, T, D, H = 2, 16, 16, 32

    key = jax.random.PRNGKey(0)
    kx, k1, k2, k3, k4 = jax.random.split(key, 5)

    # Deterministic parameter init, mimicking PyTorch's U(-1/sqrt(H), 1/sqrt(H)).
    bound = 1.0 / jnp.sqrt(jnp.float32(H))
    w_ih = jax.random.uniform(k1, (4 * H, D), jnp.float32, -bound, bound)
    w_hh = jax.random.uniform(k2, (4 * H, H), jnp.float32, -bound, bound)
    b_ih = jax.random.uniform(k3, (4 * H,), jnp.float32, -bound, bound)
    b_hh = jax.random.uniform(k4, (4 * H,), jnp.float32, -bound, bound)

    x = jax.random.normal(kx, (B, T, D), jnp.float32)

    out, (h_n, c_n) = protein_lstm_layer(
        x, w_ih, w_hh, b_ih, b_hh, hidden_size=H, time_chunk=32)
    jax.block_until_ready((out, h_n, c_n))

    ref_out, (ref_h, ref_c) = _lstm_reference(x, w_ih, w_hh, b_ih, b_hh, H)
    assert out.shape == (B, T, H)
    assert h_n.shape == (1, B, H) and c_n.shape == (1, B, H)
    # bf16 MXU matmuls (kernel + hoisted projection) vs. f32 reference:
    # tolerance loosened to 2e-2 per the performance review.
    assert jnp.allclose(out, ref_out, atol=2e-2, rtol=2e-2)
    assert jnp.allclose(h_n, ref_h, atol=2e-2, rtol=2e-2)
    assert jnp.allclose(c_n, ref_c, atol=2e-2, rtol=2e-2)

    print("KERNEL_OK")
</pallas_src>

<mosaic_0001>
module attributes {stable_mosaic.version = 11 : i64} {
  func.func @_lstm_recurrence_kernel(%arg0: i32, %arg1: i32, %arg2: memref<2x16x512xbf16, #tpu.memory_space<vmem>>, %arg3: memref<128x512xbf16, #tpu.memory_space<vmem>>, %arg4: memref<2x16x128xf32, #tpu.memory_space<vmem>>, %arg5: memref<2x128xf32, #tpu.memory_space<vmem>>, %arg6: memref<2x128xf32, #tpu.memory_space<vmem>>, %arg7: memref<2x128xf32, #tpu.memory_space<vmem>>) attributes {dimension_semantics = [#tpu.dimension_semantics<parallel>, #tpu.dimension_semantics<arbitrary>], iteration_bounds = array<i64: 1, 1>, scalar_prefetch = 0 : i64, scratch_operands = 2 : i64, tpu.core_type = #tpu.core_type<tc>, window_params = [{transform_indices = @transform_0, window_bounds = array<i64: 2, 16, 512>}, {pipeline_mode = #tpu.pipeline_mode<synchronous>, transform_indices = @transform_1, window_bounds = array<i64: 128, 512>}, {transform_indices = @transform_2, window_bounds = array<i64: 2, 16, 128>}, {transform_indices = @transform_3, window_bounds = array<i64: 2, 128>}]} {
    %c0_i32 = arith.constant 0 : i32
    %0 = arith.cmpi eq, %arg1, %c0_i32 : i32
    %1 = arith.extui %0 : i1 to i32
    %c0_i32_0 = arith.constant 0 : i32
    %2 = arith.cmpi ne, %1, %c0_i32_0 : i32
    scf.if %2 {
      %cst_237 = arith.constant 0.000000e+00 : f32
      %636 = vector.broadcast %cst_237 : f32 to vector<2x128xf32>
      %c0_238 = arith.constant 0 : index
      %c0_239 = arith.constant 0 : index
      %637 = vector.load %arg6[%c0_238, %c0_239] : memref<2x128xf32, #tpu.memory_space<vmem>>, vector<2x128xf32>
      tpu.vector_store %arg6[%c0_238, %c0_239], %636 {strides = array<i32>} : memref<2x128xf32, #tpu.memory_space<vmem>>, vector<2x128xf32>,
      %cst_240 = arith.constant 0.000000e+00 : f32
      %638 = vector.broadcast %cst_240 : f32 to vector<2x128xf32>
      %c0_241 = arith.constant 0 : index
      %c0_242 = arith.constant 0 : index
      %639 = vector.load %arg7[%c0_241, %c0_242] : memref<2x128xf32, #tpu.memory_space<vmem>>, vector<2x128xf32>
      tpu.vector_store %arg7[%c0_241, %c0_242], %638 {strides = array<i32>} : memref<2x128xf32, #tpu.memory_space<vmem>>, vector<2x128xf32>,
    } else {
    }
    %c0 = arith.constant 0 : index
    %c0_1 = arith.constant 0 : index
    %3 = vector.load %arg6[%c0, %c0_1] : memref<2x128xf32, #tpu.memory_space<vmem>>, vector<2x128xf32>
    %c0_2 = arith.constant 0 : index
    %c0_3 = arith.constant 0 : index
    %4 = vector.load %arg7[%c0_2, %c0_3] : memref<2x128xf32, #tpu.memory_space<vmem>>, vector<2x128xf32>
    %c0_4 = arith.constant 0 : index
    %c0_5 = arith.constant 0 : index
    %c0_6 = arith.constant 0 : index
    %5 = vector.load %arg2[%c0_4, %c0_5, %c0_6] : memref<2x16x512xbf16, #tpu.memory_space<vmem>>, vector<2x1x512xbf16>
    %6 = vector.shape_cast %5 : vector<2x1x512xbf16> to vector<2x512xbf16>
    %7 = arith.extf %6 : vector<2x512xbf16> to vector<2x512xf32>
    %8 = arith.truncf %3 : vector<2x128xf32> to vector<2x128xbf16>
    %c0_7 = arith.constant 0 : index
    %c0_8 = arith.constant 0 : index
    %9 = vector.load %arg3[%c0_7, %c0_8] : memref<128x512xbf16, #tpu.memory_space<vmem>>, vector<128x512xbf16>
    %cst = arith.constant dense<0.000000e+00> : vector<2x512xf32>
    %10 = tpu.matmul %8, %9, %cst {dimension_numbers = #tpu.dot_dimension_numbers<[1], [0], [0], [1], [0, 0, 1, 1], [], []>} : vector<2x128xbf16>, vector<128x512xbf16>, vector<2x512xf32> -> vector<2x512xf32>
    %11 = arith.addf %7, %10 : vector<2x512xf32>
    %12 = vector.extract_strided_slice %11 {offsets = [0, 0], sizes = [2, 128], strides = [1, 1]} : vector<2x512xf32> to vector<2x128xf32>
    %cst_9 = arith.constant 5.000000e-01 : f32
    %13 = vector.broadcast %cst_9 : f32 to vector<2x128xf32>
    %14 = arith.mulf %13, %12 : vector<2x128xf32>
    %15 = math.tanh %14 : vector<2x128xf32>
    %cst_10 = arith.constant 5.000000e-01 : f32
    %16 = vector.broadcast %cst_10 : f32 to vector<2x128xf32>
    %17 = arith.mulf %16, %15 : vector<2x128xf32>
    %cst_11 = arith.constant 5.000000e-01 : f32
    %18 = vector.broadcast %cst_11 : f32 to vector<2x128xf32>
    %19 = arith.addf %17, %18 : vector<2x128xf32>
    %20 = vector.extract_strided_slice %11 {offsets = [0, 128], sizes = [2, 128], strides = [1, 1]} : vector<2x512xf32> to vector<2x128xf32>
    %cst_12 = arith.constant 5.000000e-01 : f32
    %21 = vector.broadcast %cst_12 : f32 to vector<2x128xf32>
    %22 = arith.mulf %21, %20 : vector<2x128xf32>
    %23 = math.tanh %22 : vector<2x128xf32>
    %cst_13 = arith.constant 5.000000e-01 : f32
    %24 = vector.broadcast %cst_13 : f32 to vector<2x128xf32>
    %25 = arith.mulf %24, %23 : vector<2x128xf32>
    %cst_14 = arith.constant 5.000000e-01 : f32
    %26 = vector.broadcast %cst_14 : f32 to vector<2x128xf32>
    %27 = arith.addf %25, %26 : vector<2x128xf32>
    %28 = vector.extract_strided_slice %11 {offsets = [0, 256], sizes = [2, 128], strides = [1, 1]} : vector<2x512xf32> to vector<2x128xf32>
    %29 = math.tanh %28 : vector<2x128xf32>
    %30 = vector.extract_strided_slice %11 {offsets = [0, 384], sizes = [2, 128], strides = [1, 1]} : vector<2x512xf32> to vector<2x128xf32>
    %cst_15 = arith.constant 5.000000e-01 : f32
    %31 = vector.broadcast %cst_15 : f32 to vector<2x128xf32>
    %32 = arith.mulf %31, %30 : vector<2x128xf32>
    %33 = math.tanh %32 : vector<2x128xf32>
    %cst_16 = arith.constant 5.000000e-01 : f32
    %34 = vector.broadcast %cst_16 : f32 to vector<2x128xf32>
    %35 = arith.mulf %34, %33 : vector<2x128xf32>
    %cst_17 = arith.constant 5.000000e-01 : f32
    %36 = vector.broadcast %cst_17 : f32 to vector<2x128xf32>
    %37 = arith.addf %35, %36 : vector<2x128xf32>
    %38 = arith.mulf %27, %4 : vector<2x128xf32>
    %39 = arith.mulf %19, %29 : vector<2x128xf32>
    %40 = arith.addf %38, %39 : vector<2x128xf32>
    %41 = math.tanh %40 : vector<2x128xf32>
    %42 = arith.mulf %37, %41 : vector<2x128xf32>
    %c0_18 = arith.constant 0 : index
    %c1 = arith.constant 1 : index
    %c0_19 = arith.constant 0 : index
    %43 = vector.load %arg2[%c0_18, %c1, %c0_19] : memref<2x16x512xbf16, #tpu.memory_space<vmem>>, vector<2x1x512xbf16>
    %44 = vector.shape_cast %43 : vector<2x1x512xbf16> to vector<2x512xbf16>
    %45 = arith.extf %44 : vector<2x512xbf16> to vector<2x512xf32>
    %46 = arith.truncf %42 : vector<2x128xf32> to vector<2x128xbf16>
    %c0_20 = arith.constant 0 : index
    %c0_21 = arith.constant 0 : index
    %47 = vector.load %arg3[%c0_20, %c0_21] : memref<128x512xbf16, #tpu.memory_space<vmem>>, vector<128x512xbf16>
    %cst_22 = arith.constant dense<0.000000e+00> : vector<2x512xf32>
    %48 = tpu.matmul %46, %47, %cst_22 {dimension_numbers = #tpu.dot_dimension_numbers<[1], [0], [0], [1], [0, 0, 1, 1], [], []>} : vector<2x128xbf16>, vector<128x512xbf16>, vector<2x512xf32> -> vector<2x512xf32>
    %49 = arith.addf %45, %48 : vector<2x512xf32>
    %50 = vector.extract_strided_slice %49 {offsets = [0, 0], sizes = [2, 128], strides = [1, 1]} : vector<2x512xf32> to vector<2x128xf32>
    %cst_23 = arith.constant 5.000000e-01 : f32
    %51 = vector.broadcast %cst_23 : f32 to vector<2x128xf32>
    %52 = arith.mulf %51, %50 : vector<2x128xf32>
    %53 = math.tanh %52 : vector<2x128xf32>
    %cst_24 = arith.constant 5.000000e-01 : f32
    %54 = vector.broadcast %cst_24 : f32 to vector<2x128xf32>
    %55 = arith.mulf %54, %53 : vector<2x128xf32>
    %cst_25 = arith.constant 5.000000e-01 : f32
    %56 = vector.broadcast %cst_25 : f32 to vector<2x128xf32>
    %57 = arith.addf %55, %56 : vector<2x128xf32>
    %58 = vector.extract_strided_slice %49 {offsets = [0, 128], sizes = [2, 128], strides = [1, 1]} : vector<2x512xf32> to vector<2x128xf32>
    %cst_26 = arith.constant 5.000000e-01 : f32
    %59 = vector.broadcast %cst_26 : f32 to vector<2x128xf32>
    %60 = arith.mulf %59, %58 : vector<2x128xf32>
    %61 = math.tanh %60 : vector<2x128xf32>
    %cst_27 = arith.constant 5.000000e-01 : f32
    %62 = vector.broadcast %cst_27 : f32 to vector<2x128xf32>
    %63 = arith.mulf %62, %61 : vector<2x128xf32>
    %cst_28 = arith.constant 5.000000e-01 : f32
    %64 = vector.broadcast %cst_28 : f32 to vector<2x128xf32>
    %65 = arith.addf %63, %64 : vector<2x128xf32>
    %66 = vector.extract_strided_slice %49 {offsets = [0, 256], sizes = [2, 128], strides = [1, 1]} : vector<2x512xf32> to vector<2x128xf32>
    %67 = math.tanh %66 : vector<2x128xf32>
    %68 = vector.extract_strided_slice %49 {offsets = [0, 384], sizes = [2, 128], strides = [1, 1]} : vector<2x512xf32> to vector<2x128xf32>
    %cst_29 = arith.constant 5.000000e-01 : f32
    %69 = vector.broadcast %cst_29 : f32 to vector<2x128xf32>
    %70 = arith.mulf %69, %68 : vector<2x128xf32>
    %71 = math.tanh %70 : vector<2x128xf32>
    %cst_30 = arith.constant 5.000000e-01 : f32
    %72 = vector.broadcast %cst_30 : f32 to vector<2x128xf32>
    %73 = arith.mulf %72, %71 : vector<2x128xf32>
    %cst_31 = arith.constant 5.000000e-01 : f32
    %74 = vector.broadcast %cst_31 : f32 to vector<2x128xf32>
    %75 = arith.addf %73, %74 : vector<2x128xf32>
    %76 = arith.mulf %65, %40 : vector<2x128xf32>
    %77 = arith.mulf %57, %67 : vector<2x128xf32>
    %78 = arith.addf %76, %77 : vector<2x128xf32>
    %79 = math.tanh %78 : vector<2x128xf32>
    %80 = arith.mulf %75, %79 : vector<2x128xf32>
    %c0_32 = arith.constant 0 : index
    %c2 = arith.constant 2 : index
    %c0_33 = arith.constant 0 : index
    %81 = vector.load %arg2[%c0_32, %c2, %c0_33] : memref<2x16x512xbf16, #tpu.memory_space<vmem>>, vector<2x1x512xbf16>
    %82 = vector.shape_cast %81 : vector<2x1x512xbf16> to vector<2x512xbf16>
    %83 = arith.extf %82 : vector<2x512xbf16> to vector<2x512xf32>
    %84 = arith.truncf %80 : vector<2x128xf32> to vector<2x128xbf16>
    %c0_34 = arith.constant 0 : index
    %c0_35 = arith.constant 0 : index
    %85 = vector.load %arg3[%c0_34, %c0_35] : memref<128x512xbf16, #tpu.memory_space<vmem>>, vector<128x512xbf16>
    %cst_36 = arith.constant dense<0.000000e+00> : vector<2x512xf32>
    %86 = tpu.matmul %84, %85, %cst_36 {dimension_numbers = #tpu.dot_dimension_numbers<[1], [0], [0], [1], [0, 0, 1, 1], [], []>} : vector<2x128xbf16>, vector<128x512xbf16>, vector<2x512xf32> -> vector<2x512xf32>
    %87 = arith.addf %83, %86 : vector<2x512xf32>
    %88 = vector.extract_strided_slice %87 {offsets = [0, 0], sizes = [2, 128], strides = [1, 1]} : vector<2x512xf32> to vector<2x128xf32>
    %cst_37 = arith.constant 5.000000e-01 : f32
    %89 = vector.broadcast %cst_37 : f32 to vector<2x128xf32>
    %90 = arith.mulf %89, %88 : vector<2x128xf32>
    %91 = math.tanh %90 : vector<2x128xf32>
    %cst_38 = arith.constant 5.000000e-01 : f32
    %92 = vector.broadcast %cst_38 : f32 to vector<2x128xf32>
    %93 = arith.mulf %92, %91 : vector<2x128xf32>
    %cst_39 = arith.constant 5.000000e-01 : f32
    %94 = vector.broadcast %cst_39 : f32 to vector<2x128xf32>
    %95 = arith.addf %93, %94 : vector<2x128xf32>
    %96 = vector.extract_strided_slice %87 {offsets = [0, 128], sizes = [2, 128], strides = [1, 1]} : vector<2x512xf32> to vector<2x128xf32>
    %cst_40 = arith.constant 5.000000e-01 : f32
    %97 = vector.broadcast %cst_40 : f32 to vector<2x128xf32>
    %98 = arith.mulf %97, %96 : vector<2x128xf32>
    %99 = math.tanh %98 : vector<2x128xf32>
    %cst_41 = arith.constant 5.000000e-01 : f32
    %100 = vector.broadcast %cst_41 : f32 to vector<2x128xf32>
    %101 = arith.mulf %100, %99 : vector<2x128xf32>
    %cst_42 = arith.constant 5.000000e-01 : f32
    %102 = vector.broadcast %cst_42 : f32 to vector<2x128xf32>
    %103 = arith.addf %101, %102 : vector<2x128xf32>
    %104 = vector.extract_strided_slice %87 {offsets = [0, 256], sizes = [2, 128], strides = [1, 1]} : vector<2x512xf32> to vector<2x128xf32>
    %105 = math.tanh %104 : vector<2x128xf32>
    %106 = vector.extract_strided_slice %87 {offsets = [0, 384], sizes = [2, 128], strides = [1, 1]} : vector<2x512xf32> to vector<2x128xf32>
    %cst_43 = arith.constant 5.000000e-01 : f32
    %107 = vector.broadcast %cst_43 : f32 to vector<2x128xf32>
    %108 = arith.mulf %107, %106 : vector<2x128xf32>
    %109 = math.tanh %108 : vector<2x128xf32>
    %cst_44 = arith.constant 5.000000e-01 : f32
    %110 = vector.broadcast %cst_44 : f32 to vector<2x128xf32>
    %111 = arith.mulf %110, %109 : vector<2x128xf32>
    %cst_45 = arith.constant 5.000000e-01 : f32
    %112 = vector.broadcast %cst_45 : f32 to vector<2x128xf32>
    %113 = arith.addf %111, %112 : vector<2x128xf32>
    %114 = arith.mulf %103, %78 : vector<2x128xf32>
    %115 = arith.mulf %95, %105 : vector<2x128xf32>
    %116 = arith.addf %114, %115 : vector<2x128xf32>
    %117 = math.tanh %116 : vector<2x128xf32>
    %118 = arith.mulf %113, %117 : vector<2x128xf32>
    %c0_46 = arith.constant 0 : index
    %c3 = arith.constant 3 : index
    %c0_47 = arith.constant 0 : index
    %119 = vector.load %arg2[%c0_46, %c3, %c0_47] : memref<2x16x512xbf16, #tpu.memory_space<vmem>>, vector<2x1x512xbf16>
    %120 = vector.shape_cast %119 : vector<2x1x512xbf16> to vector<2x512xbf16>
    %121 = arith.extf %120 : vector<2x512xbf16> to vector<2x512xf32>
    %122 = arith.truncf %118 : vector<2x128xf32> to vector<2x128xbf16>
    %c0_48 = arith.constant 0 : index
    %c0_49 = arith.constant 0 : index
    %123 = vector.load %arg3[%c0_48, %c0_49] : memref<128x512xbf16, #tpu.memory_space<vmem>>, vector<128x512xbf16>
    %cst_50 = arith.constant dense<0.000000e+00> : vector<2x512xf32>
    %124 = tpu.matmul %122, %123, %cst_50 {dimension_numbers = #tpu.dot_dimension_numbers<[1], [0], [0], [1], [0, 0, 1, 1], [], []>} : vector<2x128xbf16>, vector<128x512xbf16>, vector<2x512xf32> -> vector<2x512xf32>
    %125 = arith.addf %121, %124 : vector<2x512xf32>
    %126 = vector.extract_strided_slice %125 {offsets = [0, 0], sizes = [2, 128], strides = [1, 1]} : vector<2x512xf32> to vector<2x128xf32>
    %cst_51 = arith.constant 5.000000e-01 : f32
    %127 = vector.broadcast %cst_51 : f32 to vector<2x128xf32>
    %128 = arith.mulf %127, %126 : vector<2x128xf32>
    %129 = math.tanh %128 : vector<2x128xf32>
    %cst_52 = arith.constant 5.000000e-01 : f32
    %130 = vector.broadcast %cst_52 : f32 to vector<2x128xf32>
    %131 = arith.mulf %130, %129 : vector<2x128xf32>
    %cst_53 = arith.constant 5.000000e-01 : f32
    %132 = vector.broadcast %cst_53 : f32 to vector<2x128xf32>
    %133 = arith.addf %131, %132 : vector<2x128xf32>
    %134 = vector.extract_strided_slice %125 {offsets = [0, 128], sizes = [2, 128], strides = [1, 1]} : vector<2x512xf32> to vector<2x128xf32>
    %cst_54 = arith.constant 5.000000e-01 : f32
    %135 = vector.broadcast %cst_54 : f32 to vector<2x128xf32>
    %136 = arith.mulf %135, %134 : vector<2x128xf32>
    %137 = math.tanh %136 : vector<2x128xf32>
    %cst_55 = arith.constant 5.000000e-01 : f32
    %138 = vector.broadcast %cst_55 : f32 to vector<2x128xf32>
    %139 = arith.mulf %138, %137 : vector<2x128xf32>
    %cst_56 = arith.constant 5.000000e-01 : f32
    %140 = vector.broadcast %cst_56 : f32 to vector<2x128xf32>
    %141 = arith.addf %139, %140 : vector<2x128xf32>
    %142 = vector.extract_strided_slice %125 {offsets = [0, 256], sizes = [2, 128], strides = [1, 1]} : vector<2x512xf32> to vector<2x128xf32>
    %143 = math.tanh %142 : vector<2x128xf32>
    %144 = vector.extract_strided_slice %125 {offsets = [0, 384], sizes = [2, 128], strides = [1, 1]} : vector<2x512xf32> to vector<2x128xf32>
    %cst_57 = arith.constant 5.000000e-01 : f32
    %145 = vector.broadcast %cst_57 : f32 to vector<2x128xf32>
    %146 = arith.mulf %145, %144 : vector<2x128xf32>
    %147 = math.tanh %146 : vector<2x128xf32>
    %cst_58 = arith.constant 5.000000e-01 : f32
    %148 = vector.broadcast %cst_58 : f32 to vector<2x128xf32>
    %149 = arith.mulf %148, %147 : vector<2x128xf32>
    %cst_59 = arith.constant 5.000000e-01 : f32
    %150 = vector.broadcast %cst_59 : f32 to vector<2x128xf32>
    %151 = arith.addf %149, %150 : vector<2x128xf32>
    %152 = arith.mulf %141, %116 : vector<2x128xf32>
    %153 = arith.mulf %133, %143 : vector<2x128xf32>
    %154 = arith.addf %152, %153 : vector<2x128xf32>
    %155 = math.tanh %154 : vector<2x128xf32>
    %156 = arith.mulf %151, %155 : vector<2x128xf32>
    %c0_60 = arith.constant 0 : index
    %c4 = arith.constant 4 : index
    %c0_61 = arith.constant 0 : index
    %157 = vector.load %arg2[%c0_60, %c4, %c0_61] : memref<2x16x512xbf16, #tpu.memory_space<vmem>>, vector<2x1x512xbf16>
    %158 = vector.shape_cast %157 : vector<2x1x512xbf16> to vector<2x512xbf16>
    %159 = arith.extf %158 : vector<2x512xbf16> to vector<2x512xf32>
    %160 = arith.truncf %156 : vector<2x128xf32> to vector<2x128xbf16>
    %c0_62 = arith.constant 0 : index
    %c0_63 = arith.constant 0 : index
    %161 = vector.load %arg3[%c0_62, %c0_63] : memref<128x512xbf16, #tpu.memory_space<vmem>>, vector<128x512xbf16>
    %cst_64 = arith.constant dense<0.000000e+00> : vector<2x512xf32>
    %162 = tpu.matmul %160, %161, %cst_64 {dimension_numbers = #tpu.dot_dimension_numbers<[1], [0], [0], [1], [0, 0, 1, 1], [], []>} : vector<2x128xbf16>, vector<128x512xbf16>, vector<2x512xf32> -> vector<2x512xf32>
    %163 = arith.addf %159, %162 : vector<2x512xf32>
    %164 = vector.extract_strided_slice %163 {offsets = [0, 0], sizes = [2, 128], strides = [1, 1]} : vector<2x512xf32> to vector<2x128xf32>
    %cst_65 = arith.constant 5.000000e-01 : f32
    %165 = vector.broadcast %cst_65 : f32 to vector<2x128xf32>
    %166 = arith.mulf %165, %164 : vector<2x128xf32>
    %167 = math.tanh %166 : vector<2x128xf32>
    %cst_66 = arith.constant 5.000000e-01 : f32
    %168 = vector.broadcast %cst_66 : f32 to vector<2x128xf32>
    %169 = arith.mulf %168, %167 : vector<2x128xf32>
    %cst_67 = arith.constant 5.000000e-01 : f32
    %170 = vector.broadcast %cst_67 : f32 to vector<2x128xf32>
    %171 = arith.addf %169, %170 : vector<2x128xf32>
    %172 = vector.extract_strided_slice %163 {offsets = [0, 128], sizes = [2, 128], strides = [1, 1]} : vector<2x512xf32> to vector<2x128xf32>
    %cst_68 = arith.constant 5.000000e-01 : f32
    %173 = vector.broadcast %cst_68 : f32 to vector<2x128xf32>
    %174 = arith.mulf %173, %172 : vector<2x128xf32>
    %175 = math.tanh %174 : vector<2x128xf32>
    %cst_69 = arith.constant 5.000000e-01 : f32
    %176 = vector.broadcast %cst_69 : f32 to vector<2x128xf32>
    %177 = arith.mulf %176, %175 : vector<2x128xf32>
    %cst_70 = arith.constant 5.000000e-01 : f32
    %178 = vector.broadcast %cst_70 : f32 to vector<2x128xf32>
    %179 = arith.addf %177, %178 : vector<2x128xf32>
    %180 = vector.extract_strided_slice %163 {offsets = [0, 256], sizes = [2, 128], strides = [1, 1]} : vector<2x512xf32> to vector<2x128xf32>
    %181 = math.tanh %180 : vector<2x128xf32>
    %182 = vector.extract_strided_slice %163 {offsets = [0, 384], sizes = [2, 128], strides = [1, 1]} : vector<2x512xf32> to vector<2x128xf32>
    %cst_71 = arith.constant 5.000000e-01 : f32
    %183 = vector.broadcast %cst_71 : f32 to vector<2x128xf32>
    %184 = arith.mulf %183, %182 : vector<2x128xf32>
    %185 = math.tanh %184 : vector<2x128xf32>
    %cst_72 = arith.constant 5.000000e-01 : f32
    %186 = vector.broadcast %cst_72 : f32 to vector<2x128xf32>
    %187 = arith.mulf %186, %185 : vector<2x128xf32>
    %cst_73 = arith.constant 5.000000e-01 : f32
    %188 = vector.broadcast %cst_73 : f32 to vector<2x128xf32>
    %189 = arith.addf %187, %188 : vector<2x128xf32>
    %190 = arith.mulf %179, %154 : vector<2x128xf32>
    %191 = arith.mulf %171, %181 : vector<2x128xf32>
    %192 = arith.addf %190, %191 : vector<2x128xf32>
    %193 = math.tanh %192 : vector<2x128xf32>
    %194 = arith.mulf %189, %193 : vector<2x128xf32>
    %c0_74 = arith.constant 0 : index
    %c5 = arith.constant 5 : index
    %c0_75 = arith.constant 0 : index
    %195 = vector.load %arg2[%c0_74, %c5, %c0_75] : memref<2x16x512xbf16, #tpu.memory_space<vmem>>, vector<2x1x512xbf16>
    %196 = vector.shape_cast %195 : vector<2x1x512xbf16> to vector<2x512xbf16>
    %197 = arith.extf %196 : vector<2x512xbf16> to vector<2x512xf32>
    %198 = arith.truncf %194 : vector<2x128xf32> to vector<2x128xbf16>
    %c0_76 = arith.constant 0 : index
    %c0_77 = arith.constant 0 : index
    %199 = vector.load %arg3[%c0_76, %c0_77] : memref<128x512xbf16, #tpu.memory_space<vmem>>, vector<128x512xbf16>
    %cst_78 = arith.constant dense<0.000000e+00> : vector<2x512xf32>
    %200 = tpu.matmul %198, %199, %cst_78 {dimension_numbers = #tpu.dot_dimension_numbers<[1], [0], [0], [1], [0, 0, 1, 1], [], []>} : vector<2x128xbf16>, vector<128x512xbf16>, vector<2x512xf32> -> vector<2x512xf32>
    %201 = arith.addf %197, %200 : vector<2x512xf32>
    %202 = vector.extract_strided_slice %201 {offsets = [0, 0], sizes = [2, 128], strides = [1, 1]} : vector<2x512xf32> to vector<2x128xf32>
    %cst_79 = arith.constant 5.000000e-01 : f32
    %203 = vector.broadcast %cst_79 : f32 to vector<2x128xf32>
    %204 = arith.mulf %203, %202 : vector<2x128xf32>
    %205 = math.tanh %204 : vector<2x128xf32>
    %cst_80 = arith.constant 5.000000e-01 : f32
    %206 = vector.broadcast %cst_80 : f32 to vector<2x128xf32>
    %207 = arith.mulf %206, %205 : vector<2x128xf32>
    %cst_81 = arith.constant 5.000000e-01 : f32
    %208 = vector.broadcast %cst_81 : f32 to vector<2x128xf32>
    %209 = arith.addf %207, %208 : vector<2x128xf32>
    %210 = vector.extract_strided_slice %201 {offsets = [0, 128], sizes = [2, 128], strides = [1, 1]} : vector<2x512xf32> to vector<2x128xf32>
    %cst_82 = arith.constant 5.000000e-01 : f32
    %211 = vector.broadcast %cst_82 : f32 to vector<2x128xf32>
    %212 = arith.mulf %211, %210 : vector<2x128xf32>
    %213 = math.tanh %212 : vector<2x128xf32>
    %cst_83 = arith.constant 5.000000e-01 : f32
    %214 = vector.broadcast %cst_83 : f32 to vector<2x128xf32>
    %215 = arith.mulf %214, %213 : vector<2x128xf32>
    %cst_84 = arith.constant 5.000000e-01 : f32
    %216 = vector.broadcast %cst_84 : f32 to vector<2x128xf32>
    %217 = arith.addf %215, %216 : vector<2x128xf32>
    %218 = vector.extract_strided_slice %201 {offsets = [0, 256], sizes = [2, 128], strides = [1, 1]} : vector<2x512xf32> to vector<2x128xf32>
    %219 = math.tanh %218 : vector<2x128xf32>
    %220 = vector.extract_strided_slice %201 {offsets = [0, 384], sizes = [2, 128], strides = [1, 1]} : vector<2x512xf32> to vector<2x128xf32>
    %cst_85 = arith.constant 5.000000e-01 : f32
    %221 = vector.broadcast %cst_85 : f32 to vector<2x128xf32>
    %222 = arith.mulf %221, %220 : vector<2x128xf32>
    %223 = math.tanh %222 : vector<2x128xf32>
    %cst_86 = arith.constant 5.000000e-01 : f32
    %224 = vector.broadcast %cst_86 : f32 to vector<2x128xf32>
    %225 = arith.mulf %224, %223 : vector<2x128xf32>
    %cst_87 = arith.constant 5.000000e-01 : f32
    %226 = vector.broadcast %cst_87 : f32 to vector<2x128xf32>
    %227 = arith.addf %225, %226 : vector<2x128xf32>
    %228 = arith.mulf %217, %192 : vector<2x128xf32>
    %229 = arith.mulf %209, %219 : vector<2x128xf32>
    %230 = arith.addf %228, %229 : vector<2x128xf32>
    %231 = math.tanh %230 : vector<2x128xf32>
    %232 = arith.mulf %227, %231 : vector<2x128xf32>
    %c0_88 = arith.constant 0 : index
    %c6 = arith.constant 6 : index
    %c0_89 = arith.constant 0 : index
    %233 = vector.load %arg2[%c0_88, %c6, %c0_89] : memref<2x16x512xbf16, #tpu.memory_space<vmem>>, vector<2x1x512xbf16>
    %234 = vector.shape_cast %233 : vector<2x1x512xbf16> to vector<2x512xbf16>
    %235 = arith.extf %234 : vector<2x512xbf16> to vector<2x512xf32>
    %236 = arith.truncf %232 : vector<2x128xf32> to vector<2x128xbf16>
    %c0_90 = arith.constant 0 : index
    %c0_91 = arith.constant 0 : index
    %237 = vector.load %arg3[%c0_90, %c0_91] : memref<128x512xbf16, #tpu.memory_space<vmem>>, vector<128x512xbf16>
    %cst_92 = arith.constant dense<0.000000e+00> : vector<2x512xf32>
    %238 = tpu.matmul %236, %237, %cst_92 {dimension_numbers = #tpu.dot_dimension_numbers<[1], [0], [0], [1], [0, 0, 1, 1], [], []>} : vector<2x128xbf16>, vector<128x512xbf16>, vector<2x512xf32> -> vector<2x512xf32>
    %239 = arith.addf %235, %238 : vector<2x512xf32>
    %240 = vector.extract_strided_slice %239 {offsets = [0, 0], sizes = [2, 128], strides = [1, 1]} : vector<2x512xf32> to vector<2x128xf32>
    %cst_93 = arith.constant 5.000000e-01 : f32
    %241 = vector.broadcast %cst_93 : f32 to vector<2x128xf32>
    %242 = arith.mulf %241, %240 : vector<2x128xf32>
    %243 = math.tanh %242 : vector<2x128xf32>
    %cst_94 = arith.constant 5.000000e-01 : f32
    %244 = vector.broadcast %cst_94 : f32 to vector<2x128xf32>
    %245 = arith.mulf %244, %243 : vector<2x128xf32>
    %cst_95 = arith.constant 5.000000e-01 : f32
    %246 = vector.broadcast %cst_95 : f32 to vector<2x128xf32>
    %247 = arith.addf %245, %246 : vector<2x128xf32>
    %248 = vector.extract_strided_slice %239 {offsets = [0, 128], sizes = [2, 128], strides = [1, 1]} : vector<2x512xf32> to vector<2x128xf32>
    %cst_96 = arith.constant 5.000000e-01 : f32
    %249 = vector.broadcast %cst_96 : f32 to vector<2x128xf32>
    %250 = arith.mulf %249, %248 : vector<2x128xf32>
    %251 = math.tanh %250 : vector<2x128xf32>
    %cst_97 = arith.constant 5.000000e-01 : f32
    %252 = vector.broadcast %cst_97 : f32 to vector<2x128xf32>
    %253 = arith.mulf %252, %251 : vector<2x128xf32>
    %cst_98 = arith.constant 5.000000e-01 : f32
    %254 = vector.broadcast %cst_98 : f32 to vector<2x128xf32>
    %255 = arith.addf %253, %254 : vector<2x128xf32>
    %256 = vector.extract_strided_slice %239 {offsets = [0, 256], sizes = [2, 128], strides = [1, 1]} : vector<2x512xf32> to vector<2x128xf32>
    %257 = math.tanh %256 : vector<2x128xf32>
    %258 = vector.extract_strided_slice %239 {offsets = [0, 384], sizes = [2, 128], strides = [1, 1]} : vector<2x512xf32> to vector<2x128xf32>
    %cst_99 = arith.constant 5.000000e-01 : f32
    %259 = vector.broadcast %cst_99 : f32 to vector<2x128xf32>
    %260 = arith.mulf %259, %258 : vector<2x128xf32>
    %261 = math.tanh %260 : vector<2x128xf32>
    %cst_100 = arith.constant 5.000000e-01 : f32
    %262 = vector.broadcast %cst_100 : f32 to vector<2x128xf32>
    %263 = arith.mulf %262, %261 : vector<2x128xf32>
    %cst_101 = arith.constant 5.000000e-01 : f32
    %264 = vector.broadcast %cst_101 : f32 to vector<2x128xf32>
    %265 = arith.addf %263, %264 : vector<2x128xf32>
    %266 = arith.mulf %255, %230 : vector<2x128xf32>
    %267 = arith.mulf %247, %257 : vector<2x128xf32>
    %268 = arith.addf %266, %267 : vector<2x128xf32>
    %269 = math.tanh %268 : vector<2x128xf32>
    %270 = arith.mulf %265, %269 : vector<2x128xf32>
    %c0_102 = arith.constant 0 : index
    %c7 = arith.constant 7 : index
    %c0_103 = arith.constant 0 : index
    %271 = vector.load %arg2[%c0_102, %c7, %c0_103] : memref<2x16x512xbf16, #tpu.memory_space<vmem>>, vector<2x1x512xbf16>
    %272 = vector.shape_cast %271 : vector<2x1x512xbf16> to vector<2x512xbf16>
    %273 = arith.extf %272 : vector<2x512xbf16> to vector<2x512xf32>
    %274 = arith.truncf %270 : vector<2x128xf32> to vector<2x128xbf16>
    %c0_104 = arith.constant 0 : index
    %c0_105 = arith.constant 0 : index
    %275 = vector.load %arg3[%c0_104, %c0_105] : memref<128x512xbf16, #tpu.memory_space<vmem>>, vector<128x512xbf16>
    %cst_106 = arith.constant dense<0.000000e+00> : vector<2x512xf32>
    %276 = tpu.matmul %274, %275, %cst_106 {dimension_numbers = #tpu.dot_dimension_numbers<[1], [0], [0], [1], [0, 0, 1, 1], [], []>} : vector<2x128xbf16>, vector<128x512xbf16>, vector<2x512xf32> -> vector<2x512xf32>
    %277 = arith.addf %273, %276 : vector<2x512xf32>
    %278 = vector.extract_strided_slice %277 {offsets = [0, 0], sizes = [2, 128], strides = [1, 1]} : vector<2x512xf32> to vector<2x128xf32>
    %cst_107 = arith.constant 5.000000e-01 : f32
    %279 = vector.broadcast %cst_107 : f32 to vector<2x128xf32>
    %280 = arith.mulf %279, %278 : vector<2x128xf32>
    %281 = math.tanh %280 : vector<2x128xf32>
    %cst_108 = arith.constant 5.000000e-01 : f32
    %282 = vector.broadcast %cst_108 : f32 to vector<2x128xf32>
    %283 = arith.mulf %282, %281 : vector<2x128xf32>
    %cst_109 = arith.constant 5.000000e-01 : f32
    %284 = vector.broadcast %cst_109 : f32 to vector<2x128xf32>
    %285 = arith.addf %283, %284 : vector<2x128xf32>
    %286 = vector.extract_strided_slice %277 {offsets = [0, 128], sizes = [2, 128], strides = [1, 1]} : vector<2x512xf32> to vector<2x128xf32>
    %cst_110 = arith.constant 5.000000e-01 : f32
    %287 = vector.broadcast %cst_110 : f32 to vector<2x128xf32>
    %288 = arith.mulf %287, %286 : vector<2x128xf32>
    %289 = math.tanh %288 : vector<2x128xf32>
    %cst_111 = arith.constant 5.000000e-01 : f32
    %290 = vector.broadcast %cst_111 : f32 to vector<2x128xf32>
    %291 = arith.mulf %290, %289 : vector<2x128xf32>
    %cst_112 = arith.constant 5.000000e-01 : f32
    %292 = vector.broadcast %cst_112 : f32 to vector<2x128xf32>
    %293 = arith.addf %291, %292 : vector<2x128xf32>
    %294 = vector.extract_strided_slice %277 {offsets = [0, 256], sizes = [2, 128], strides = [1, 1]} : vector<2x512xf32> to vector<2x128xf32>
    %295 = math.tanh %294 : vector<2x128xf32>
    %296 = vector.extract_strided_slice %277 {offsets = [0, 384], sizes = [2, 128], strides = [1, 1]} : vector<2x512xf32> to vector<2x128xf32>
    %cst_113 = arith.constant 5.000000e-01 : f32
    %297 = vector.broadcast %cst_113 : f32 to vector<2x128xf32>
    %298 = arith.mulf %297, %296 : vector<2x128xf32>
    %299 = math.tanh %298 : vector<2x128xf32>
    %cst_114 = arith.constant 5.000000e-01 : f32
    %300 = vector.broadcast %cst_114 : f32 to vector<2x128xf32>
    %301 = arith.mulf %300, %299 : vector<2x128xf32>
    %cst_115 = arith.constant 5.000000e-01 : f32
    %302 = vector.broadcast %cst_115 : f32 to vector<2x128xf32>
    %303 = arith.addf %301, %302 : vector<2x128xf32>
    %304 = arith.mulf %293, %268 : vector<2x128xf32>
    %305 = arith.mulf %285, %295 : vector<2x128xf32>
    %306 = arith.addf %304, %305 : vector<2x128xf32>
    %307 = math.tanh %306 : vector<2x128xf32>
    %308 = arith.mulf %303, %307 : vector<2x128xf32>
    %c0_116 = arith.constant 0 : index
    %c8 = arith.constant 8 : index
    %c0_117 = arith.constant 0 : index
    %309 = vector.load %arg2[%c0_116, %c8, %c0_117] : memref<2x16x512xbf16, #tpu.memory_space<vmem>>, vector<2x1x512xbf16>
    %310 = vector.shape_cast %309 : vector<2x1x512xbf16> to vector<2x512xbf16>
    %311 = arith.extf %310 : vector<2x512xbf16> to vector<2x512xf32>
    %312 = arith.truncf %308 : vector<2x128xf32> to vector<2x128xbf16>
    %c0_118 = arith.constant 0 : index
    %c0_119 = arith.constant 0 : index
    %313 = vector.load %arg3[%c0_118, %c0_119] : memref<128x512xbf16, #tpu.memory_space<vmem>>, vector<128x512xbf16>
    %cst_120 = arith.constant dense<0.000000e+00> : vector<2x512xf32>
    %314 = tpu.matmul %312, %313, %cst_120 {dimension_numbers = #tpu.dot_dimension_numbers<[1], [0], [0], [1], [0, 0, 1, 1], [], []>} : vector<2x128xbf16>, vector<128x512xbf16>, vector<2x512xf32> -> vector<2x512xf32>
    %315 = arith.addf %311, %314 : vector<2x512xf32>
    %316 = vector.extract_strided_slice %315 {offsets = [0, 0], sizes = [2, 128], strides = [1, 1]} : vector<2x512xf32> to vector<2x128xf32>
    %cst_121 = arith.constant 5.000000e-01 : f32
    %317 = vector.broadcast %cst_121 : f32 to vector<2x128xf32>
    %318 = arith.mulf %317, %316 : vector<2x128xf32>
    %319 = math.tanh %318 : vector<2x128xf32>
    %cst_122 = arith.constant 5.000000e-01 : f32
    %320 = vector.broadcast %cst_122 : f32 to vector<2x128xf32>
    %321 = arith.mulf %320, %319 : vector<2x128xf32>
    %cst_123 = arith.constant 5.000000e-01 : f32
    %322 = vector.broadcast %cst_123 : f32 to vector<2x128xf32>
    %323 = arith.addf %321, %322 : vector<2x128xf32>
    %324 = vector.extract_strided_slice %315 {offsets = [0, 128], sizes = [2, 128], strides = [1, 1]} : vector<2x512xf32> to vector<2x128xf32>
    %cst_124 = arith.constant 5.000000e-01 : f32
    %325 = vector.broadcast %cst_124 : f32 to vector<2x128xf32>
    %326 = arith.mulf %325, %324 : vector<2x128xf32>
    %327 = math.tanh %326 : vector<2x128xf32>
    %cst_125 = arith.constant 5.000000e-01 : f32
    %328 = vector.broadcast %cst_125 : f32 to vector<2x128xf32>
    %329 = arith.mulf %328, %327 : vector<2x128xf32>
    %cst_126 = arith.constant 5.000000e-01 : f32
    %330 = vector.broadcast %cst_126 : f32 to vector<2x128xf32>
    %331 = arith.addf %329, %330 : vector<2x128xf32>
    %332 = vector.extract_strided_slice %315 {offsets = [0, 256], sizes = [2, 128], strides = [1, 1]} : vector<2x512xf32> to vector<2x128xf32>
    %333 = math.tanh %332 : vector<2x128xf32>
    %334 = vector.extract_strided_slice %315 {offsets = [0, 384], sizes = [2, 128], strides = [1, 1]} : vector<2x512xf32> to vector<2x128xf32>
    %cst_127 = arith.constant 5.000000e-01 : f32
    %335 = vector.broadcast %cst_127 : f32 to vector<2x128xf32>
    %336 = arith.mulf %335, %334 : vector<2x128xf32>
    %337 = math.tanh %336 : vector<2x128xf32>
    %cst_128 = arith.constant 5.000000e-01 : f32
    %338 = vector.broadcast %cst_128 : f32 to vector<2x128xf32>
    %339 = arith.mulf %338, %337 : vector<2x128xf32>
    %cst_129 = arith.constant 5.000000e-01 : f32
    %340 = vector.broadcast %cst_129 : f32 to vector<2x128xf32>
    %341 = arith.addf %339, %340 : vector<2x128xf32>
    %342 = arith.mulf %331, %306 : vector<2x128xf32>
    %343 = arith.mulf %323, %333 : vector<2x128xf32>
    %344 = arith.addf %342, %343 : vector<2x128xf32>
    %345 = math.tanh %344 : vector<2x128xf32>
    %346 = arith.mulf %341, %345 : vector<2x128xf32>
    %c0_130 = arith.constant 0 : index
    %c9 = arith.constant 9 : index
    %c0_131 = arith.constant 0 : index
    %347 = vector.load %arg2[%c0_130, %c9, %c0_131] : memref<2x16x512xbf16, #tpu.memory_space<vmem>>, vector<2x1x512xbf16>
    %348 = vector.shape_cast %347 : vector<2x1x512xbf16> to vector<2x512xbf16>
    %349 = arith.extf %348 : vector<2x512xbf16> to vector<2x512xf32>
    %350 = arith.truncf %346 : vector<2x128xf32> to vector<2x128xbf16>
    %c0_132 = arith.constant 0 : index
    %c0_133 = arith.constant 0 : index
    %351 = vector.load %arg3[%c0_132, %c0_133] : memref<128x512xbf16, #tpu.memory_space<vmem>>, vector<128x512xbf16>
    %cst_134 = arith.constant dense<0.000000e+00> : vector<2x512xf32>
    %352 = tpu.matmul %350, %351, %cst_134 {dimension_numbers = #tpu.dot_dimension_numbers<[1], [0], [0], [1], [0, 0, 1, 1], [], []>} : vector<2x128xbf16>, vector<128x512xbf16>, vector<2x512xf32> -> vector<2x512xf32>
    %353 = arith.addf %349, %352 : vector<2x512xf32>
    %354 = vector.extract_strided_slice %353 {offsets = [0, 0], sizes = [2, 128], strides = [1, 1]} : vector<2x512xf32> to vector<2x128xf32>
    %cst_135 = arith.constant 5.000000e-01 : f32
    %355 = vector.broadcast %cst_135 : f32 to vector<2x128xf32>
    %356 = arith.mulf %355, %354 : vector<2x128xf32>
    %357 = math.tanh %356 : vector<2x128xf32>
    %cst_136 = arith.constant 5.000000e-01 : f32
    %358 = vector.broadcast %cst_136 : f32 to vector<2x128xf32>
    %359 = arith.mulf %358, %357 : vector<2x128xf32>
    %cst_137 = arith.constant 5.000000e-01 : f32
    %360 = vector.broadcast %cst_137 : f32 to vector<2x128xf32>
    %361 = arith.addf %359, %360 : vector<2x128xf32>
    %362 = vector.extract_strided_slice %353 {offsets = [0, 128], sizes = [2, 128], strides = [1, 1]} : vector<2x512xf32> to vector<2x128xf32>
    %cst_138 = arith.constant 5.000000e-01 : f32
    %363 = vector.broadcast %cst_138 : f32 to vector<2x128xf32>
    %364 = arith.mulf %363, %362 : vector<2x128xf32>
    %365 = math.tanh %364 : vector<2x128xf32>
    %cst_139 = arith.constant 5.000000e-01 : f32
    %366 = vector.broadcast %cst_139 : f32 to vector<2x128xf32>
    %367 = arith.mulf %366, %365 : vector<2x128xf32>
    %cst_140 = arith.constant 5.000000e-01 : f32
    %368 = vector.broadcast %cst_140 : f32 to vector<2x128xf32>
    %369 = arith.addf %367, %368 : vector<2x128xf32>
    %370 = vector.extract_strided_slice %353 {offsets = [0, 256], sizes = [2, 128], strides = [1, 1]} : vector<2x512xf32> to vector<2x128xf32>
    %371 = math.tanh %370 : vector<2x128xf32>
    %372 = vector.extract_strided_slice %353 {offsets = [0, 384], sizes = [2, 128], strides = [1, 1]} : vector<2x512xf32> to vector<2x128xf32>
    %cst_141 = arith.constant 5.000000e-01 : f32
    %373 = vector.broadcast %cst_141 : f32 to vector<2x128xf32>
    %374 = arith.mulf %373, %372 : vector<2x128xf32>
    %375 = math.tanh %374 : vector<2x128xf32>
    %cst_142 = arith.constant 5.000000e-01 : f32
    %376 = vector.broadcast %cst_142 : f32 to vector<2x128xf32>
    %377 = arith.mulf %376, %375 : vector<2x128xf32>
    %cst_143 = arith.constant 5.000000e-01 : f32
    %378 = vector.broadcast %cst_143 : f32 to vector<2x128xf32>
    %379 = arith.addf %377, %378 : vector<2x128xf32>
    %380 = arith.mulf %369, %344 : vector<2x128xf32>
    %381 = arith.mulf %361, %371 : vector<2x128xf32>
    %382 = arith.addf %380, %381 : vector<2x128xf32>
    %383 = math.tanh %382 : vector<2x128xf32>
    %384 = arith.mulf %379, %383 : vector<2x128xf32>
    %c0_144 = arith.constant 0 : index
    %c10 = arith.constant 10 : index
    %c0_145 = arith.constant 0 : index
    %385 = vector.load %arg2[%c0_144, %c10, %c0_145] : memref<2x16x512xbf16, #tpu.memory_space<vmem>>, vector<2x1x512xbf16>
    %386 = vector.shape_cast %385 : vector<2x1x512xbf16> to vector<2x512xbf16>
    %387 = arith.extf %386 : vector<2x512xbf16> to vector<2x512xf32>
    %388 = arith.truncf %384 : vector<2x128xf32> to vector<2x128xbf16>
    %c0_146 = arith.constant 0 : index
    %c0_147 = arith.constant 0 : index
    %389 = vector.load %arg3[%c0_146, %c0_147] : memref<128x512xbf16, #tpu.memory_space<vmem>>, vector<128x512xbf16>
    %cst_148 = arith.constant dense<0.000000e+00> : vector<2x512xf32>
    %390 = tpu.matmul %388, %389, %cst_148 {dimension_numbers = #tpu.dot_dimension_numbers<[1], [0], [0], [1], [0, 0, 1, 1], [], []>} : vector<2x128xbf16>, vector<128x512xbf16>, vector<2x512xf32> -> vector<2x512xf32>
    %391 = arith.addf %387, %390 : vector<2x512xf32>
    %392 = vector.extract_strided_slice %391 {offsets = [0, 0], sizes = [2, 128], strides = [1, 1]} : vector<2x512xf32> to vector<2x128xf32>
    %cst_149 = arith.constant 5.000000e-01 : f32
    %393 = vector.broadcast %cst_149 : f32 to vector<2x128xf32>
    %394 = arith.mulf %393, %392 : vector<2x128xf32>
    %395 = math.tanh %394 : vector<2x128xf32>
    %cst_150 = arith.constant 5.000000e-01 : f32
    %396 = vector.broadcast %cst_150 : f32 to vector<2x128xf32>
    %397 = arith.mulf %396, %395 : vector<2x128xf32>
    %cst_151 = arith.constant 5.000000e-01 : f32
    %398 = vector.broadcast %cst_151 : f32 to vector<2x128xf32>
    %399 = arith.addf %397, %398 : vector<2x128xf32>
    %400 = vector.extract_strided_slice %391 {offsets = [0, 128], sizes = [2, 128], strides = [1, 1]} : vector<2x512xf32> to vector<2x128xf32>
    %cst_152 = arith.constant 5.000000e-01 : f32
    %401 = vector.broadcast %cst_152 : f32 to vector<2x128xf32>
    %402 = arith.mulf %401, %400 : vector<2x128xf32>
    %403 = math.tanh %402 : vector<2x128xf32>
    %cst_153 = arith.constant 5.000000e-01 : f32
    %404 = vector.broadcast %cst_153 : f32 to vector<2x128xf32>
    %405 = arith.mulf %404, %403 : vector<2x128xf32>
    %cst_154 = arith.constant 5.000000e-01 : f32
    %406 = vector.broadcast %cst_154 : f32 to vector<2x128xf32>
    %407 = arith.addf %405, %406 : vector<2x128xf32>
    %408 = vector.extract_strided_slice %391 {offsets = [0, 256], sizes = [2, 128], strides = [1, 1]} : vector<2x512xf32> to vector<2x128xf32>
    %409 = math.tanh %408 : vector<2x128xf32>
    %410 = vector.extract_strided_slice %391 {offsets = [0, 384], sizes = [2, 128], strides = [1, 1]} : vector<2x512xf32> to vector<2x128xf32>
    %cst_155 = arith.constant 5.000000e-01 : f32
    %411 = vector.broadcast %cst_155 : f32 to vector<2x128xf32>
    %412 = arith.mulf %411, %410 : vector<2x128xf32>
    %413 = math.tanh %412 : vector<2x128xf32>
    %cst_156 = arith.constant 5.000000e-01 : f32
    %414 = vector.broadcast %cst_156 : f32 to vector<2x128xf32>
    %415 = arith.mulf %414, %413 : vector<2x128xf32>
    %cst_157 = arith.constant 5.000000e-01 : f32
    %416 = vector.broadcast %cst_157 : f32 to vector<2x128xf32>
    %417 = arith.addf %415, %416 : vector<2x128xf32>
    %418 = arith.mulf %407, %382 : vector<2x128xf32>
    %419 = arith.mulf %399, %409 : vector<2x128xf32>
    %420 = arith.addf %418, %419 : vector<2x128xf32>
    %421 = math.tanh %420 : vector<2x128xf32>
    %422 = arith.mulf %417, %421 : vector<2x128xf32>
    %c0_158 = arith.constant 0 : index
    %c11 = arith.constant 11 : index
    %c0_159 = arith.constant 0 : index
    %423 = vector.load %arg2[%c0_158, %c11, %c0_159] : memref<2x16x512xbf16, #tpu.memory_space<vmem>>, vector<2x1x512xbf16>
    %424 = vector.shape_cast %423 : vector<2x1x512xbf16> to vector<2x512xbf16>
    %425 = arith.extf %424 : vector<2x512xbf16> to vector<2x512xf32>
    %426 = arith.truncf %422 : vector<2x128xf32> to vector<2x128xbf16>
    %c0_160 = arith.constant 0 : index
    %c0_161 = arith.constant 0 : index
    %427 = vector.load %arg3[%c0_160, %c0_161] : memref<128x512xbf16, #tpu.memory_space<vmem>>, vector<128x512xbf16>
    %cst_162 = arith.constant dense<0.000000e+00> : vector<2x512xf32>
    %428 = tpu.matmul %426, %427, %cst_162 {dimension_numbers = #tpu.dot_dimension_numbers<[1], [0], [0], [1], [0, 0, 1, 1], [], []>} : vector<2x128xbf16>, vector<128x512xbf16>, vector<2x512xf32> -> vector<2x512xf32>
    %429 = arith.addf %425, %428 : vector<2x512xf32>
    %430 = vector.extract_strided_slice %429 {offsets = [0, 0], sizes = [2, 128], strides = [1, 1]} : vector<2x512xf32> to vector<2x128xf32>
    %cst_163 = arith.constant 5.000000e-01 : f32
    %431 = vector.broadcast %cst_163 : f32 to vector<2x128xf32>
    %432 = arith.mulf %431, %430 : vector<2x128xf32>
    %433 = math.tanh %432 : vector<2x128xf32>
    %cst_164 = arith.constant 5.000000e-01 : f32
    %434 = vector.broadcast %cst_164 : f32 to vector<2x128xf32>
    %435 = arith.mulf %434, %433 : vector<2x128xf32>
    %cst_165 = arith.constant 5.000000e-01 : f32
    %436 = vector.broadcast %cst_165 : f32 to vector<2x128xf32>
    %437 = arith.addf %435, %436 : vector<2x128xf32>
    %438 = vector.extract_strided_slice %429 {offsets = [0, 128], sizes = [2, 128], strides = [1, 1]} : vector<2x512xf32> to vector<2x128xf32>
    %cst_166 = arith.constant 5.000000e-01 : f32
    %439 = vector.broadcast %cst_166 : f32 to vector<2x128xf32>
    %440 = arith.mulf %439, %438 : vector<2x128xf32>
    %441 = math.tanh %440 : vector<2x128xf32>
    %cst_167 = arith.constant 5.000000e-01 : f32
    %442 = vector.broadcast %cst_167 : f32 to vector<2x128xf32>
    %443 = arith.mulf %442, %441 : vector<2x128xf32>
    %cst_168 = arith.constant 5.000000e-01 : f32
    %444 = vector.broadcast %cst_168 : f32 to vector<2x128xf32>
    %445 = arith.addf %443, %444 : vector<2x128xf32>
    %446 = vector.extract_strided_slice %429 {offsets = [0, 256], sizes = [2, 128], strides = [1, 1]} : vector<2x512xf32> to vector<2x128xf32>
    %447 = math.tanh %446 : vector<2x128xf32>
    %448 = vector.extract_strided_slice %429 {offsets = [0, 384], sizes = [2, 128], strides = [1, 1]} : vector<2x512xf32> to vector<2x128xf32>
    %cst_169 = arith.constant 5.000000e-01 : f32
    %449 = vector.broadcast %cst_169 : f32 to vector<2x128xf32>
    %450 = arith.mulf %449, %448 : vector<2x128xf32>
    %451 = math.tanh %450 : vector<2x128xf32>
    %cst_170 = arith.constant 5.000000e-01 : f32
    %452 = vector.broadcast %cst_170 : f32 to vector<2x128xf32>
    %453 = arith.mulf %452, %451 : vector<2x128xf32>
    %cst_171 = arith.constant 5.000000e-01 : f32
    %454 = vector.broadcast %cst_171 : f32 to vector<2x128xf32>
    %455 = arith.addf %453, %454 : vector<2x128xf32>
    %456 = arith.mulf %445, %420 : vector<2x128xf32>
    %457 = arith.mulf %437, %447 : vector<2x128xf32>
    %458 = arith.addf %456, %457 : vector<2x128xf32>
    %459 = math.tanh %458 : vector<2x128xf32>
    %460 = arith.mulf %455, %459 : vector<2x128xf32>
    %c0_172 = arith.constant 0 : index
    %c12 = arith.constant 12 : index
    %c0_173 = arith.constant 0 : index
    %461 = vector.load %arg2[%c0_172, %c12, %c0_173] : memref<2x16x512xbf16, #tpu.memory_space<vmem>>, vector<2x1x512xbf16>
    %462 = vector.shape_cast %461 : vector<2x1x512xbf16> to vector<2x512xbf16>
    %463 = arith.extf %462 : vector<2x512xbf16> to vector<2x512xf32>
    %464 = arith.truncf %460 : vector<2x128xf32> to vector<2x128xbf16>
    %c0_174 = arith.constant 0 : index
    %c0_175 = arith.constant 0 : index
    %465 = vector.load %arg3[%c0_174, %c0_175] : memref<128x512xbf16, #tpu.memory_space<vmem>>, vector<128x512xbf16>
    %cst_176 = arith.constant dense<0.000000e+00> : vector<2x512xf32>
    %466 = tpu.matmul %464, %465, %cst_176 {dimension_numbers = #tpu.dot_dimension_numbers<[1], [0], [0], [1], [0, 0, 1, 1], [], []>} : vector<2x128xbf16>, vector<128x512xbf16>, vector<2x512xf32> -> vector<2x512xf32>
    %467 = arith.addf %463, %466 : vector<2x512xf32>
    %468 = vector.extract_strided_slice %467 {offsets = [0, 0], sizes = [2, 128], strides = [1, 1]} : vector<2x512xf32> to vector<2x128xf32>
    %cst_177 = arith.constant 5.000000e-01 : f32
    %469 = vector.broadcast %cst_177 : f32 to vector<2x128xf32>
    %470 = arith.mulf %469, %468 : vector<2x128xf32>
    %471 = math.tanh %470 : vector<2x128xf32>
    %cst_178 = arith.constant 5.000000e-01 : f32
    %472 = vector.broadcast %cst_178 : f32 to vector<2x128xf32>
    %473 = arith.mulf %472, %471 : vector<2x128xf32>
    %cst_179 = arith.constant 5.000000e-01 : f32
    %474 = vector.broadcast %cst_179 : f32 to vector<2x128xf32>
    %475 = arith.addf %473, %474 : vector<2x128xf32>
    %476 = vector.extract_strided_slice %467 {offsets = [0, 128], sizes = [2, 128], strides = [1, 1]} : vector<2x512xf32> to vector<2x128xf32>
    %cst_180 = arith.constant 5.000000e-01 : f32
    %477 = vector.broadcast %cst_180 : f32 to vector<2x128xf32>
    %478 = arith.mulf %477, %476 : vector<2x128xf32>
    %479 = math.tanh %478 : vector<2x128xf32>
    %cst_181 = arith.constant 5.000000e-01 : f32
    %480 = vector.broadcast %cst_181 : f32 to vector<2x128xf32>
    %481 = arith.mulf %480, %479 : vector<2x128xf32>
    %cst_182 = arith.constant 5.000000e-01 : f32
    %482 = vector.broadcast %cst_182 : f32 to vector<2x128xf32>
    %483 = arith.addf %481, %482 : vector<2x128xf32>
    %484 = vector.extract_strided_slice %467 {offsets = [0, 256], sizes = [2, 128], strides = [1, 1]} : vector<2x512xf32> to vector<2x128xf32>
    %485 = math.tanh %484 : vector<2x128xf32>
    %486 = vector.extract_strided_slice %467 {offsets = [0, 384], sizes = [2, 128], strides = [1, 1]} : vector<2x512xf32> to vector<2x128xf32>
    %cst_183 = arith.constant 5.000000e-01 : f32
    %487 = vector.broadcast %cst_183 : f32 to vector<2x128xf32>
    %488 = arith.mulf %487, %486 : vector<2x128xf32>
    %489 = math.tanh %488 : vector<2x128xf32>
    %cst_184 = arith.constant 5.000000e-01 : f32
    %490 = vector.broadcast %cst_184 : f32 to vector<2x128xf32>
    %491 = arith.mulf %490, %489 : vector<2x128xf32>
    %cst_185 = arith.constant 5.000000e-01 : f32
    %492 = vector.broadcast %cst_185 : f32 to vector<2x128xf32>
    %493 = arith.addf %491, %492 : vector<2x128xf32>
    %494 = arith.mulf %483, %458 : vector<2x128xf32>
    %495 = arith.mulf %475, %485 : vector<2x128xf32>
    %496 = arith.addf %494, %495 : vector<2x128xf32>
    %497 = math.tanh %496 : vector<2x128xf32>
    %498 = arith.mulf %493, %497 : vector<2x128xf32>
    %c0_186 = arith.constant 0 : index
    %c13 = arith.constant 13 : index
    %c0_187 = arith.constant 0 : index
    %499 = vector.load %arg2[%c0_186, %c13, %c0_187] : memref<2x16x512xbf16, #tpu.memory_space<vmem>>, vector<2x1x512xbf16>
    %500 = vector.shape_cast %499 : vector<2x1x512xbf16> to vector<2x512xbf16>
    %501 = arith.extf %500 : vector<2x512xbf16> to vector<2x512xf32>
    %502 = arith.truncf %498 : vector<2x128xf32> to vector<2x128xbf16>
    %c0_188 = arith.constant 0 : index
    %c0_189 = arith.constant 0 : index
    %503 = vector.load %arg3[%c0_188, %c0_189] : memref<128x512xbf16, #tpu.memory_space<vmem>>, vector<128x512xbf16>
    %cst_190 = arith.constant dense<0.000000e+00> : vector<2x512xf32>
    %504 = tpu.matmul %502, %503, %cst_190 {dimension_numbers = #tpu.dot_dimension_numbers<[1], [0], [0], [1], [0, 0, 1, 1], [], []>} : vector<2x128xbf16>, vector<128x512xbf16>, vector<2x512xf32> -> vector<2x512xf32>
    %505 = arith.addf %501, %504 : vector<2x512xf32>
    %506 = vector.extract_strided_slice %505 {offsets = [0, 0], sizes = [2, 128], strides = [1, 1]} : vector<2x512xf32> to vector<2x128xf32>
    %cst_191 = arith.constant 5.000000e-01 : f32
    %507 = vector.broadcast %cst_191 : f32 to vector<2x128xf32>
    %508 = arith.mulf %507, %506 : vector<2x128xf32>
    %509 = math.tanh %508 : vector<2x128xf32>
    %cst_192 = arith.constant 5.000000e-01 : f32
    %510 = vector.broadcast %cst_192 : f32 to vector<2x128xf32>
    %511 = arith.mulf %510, %509 : vector<2x128xf32>
    %cst_193 = arith.constant 5.000000e-01 : f32
    %512 = vector.broadcast %cst_193 : f32 to vector<2x128xf32>
    %513 = arith.addf %511, %512 : vector<2x128xf32>
    %514 = vector.extract_strided_slice %505 {offsets = [0, 128], sizes = [2, 128], strides = [1, 1]} : vector<2x512xf32> to vector<2x128xf32>
    %cst_194 = arith.constant 5.000000e-01 : f32
    %515 = vector.broadcast %cst_194 : f32 to vector<2x128xf32>
    %516 = arith.mulf %515, %514 : vector<2x128xf32>
    %517 = math.tanh %516 : vector<2x128xf32>
    %cst_195 = arith.constant 5.000000e-01 : f32
    %518 = vector.broadcast %cst_195 : f32 to vector<2x128xf32>
    %519 = arith.mulf %518, %517 : vector<2x128xf32>
    %cst_196 = arith.constant 5.000000e-01 : f32
    %520 = vector.broadcast %cst_196 : f32 to vector<2x128xf32>
    %521 = arith.addf %519, %520 : vector<2x128xf32>
    %522 = vector.extract_strided_slice %505 {offsets = [0, 256], sizes = [2, 128], strides = [1, 1]} : vector<2x512xf32> to vector<2x128xf32>
    %523 = math.tanh %522 : vector<2x128xf32>
    %524 = vector.extract_strided_slice %505 {offsets = [0, 384], sizes = [2, 128], strides = [1, 1]} : vector<2x512xf32> to vector<2x128xf32>
    %cst_197 = arith.constant 5.000000e-01 : f32
    %525 = vector.broadcast %cst_197 : f32 to vector<2x128xf32>
    %526 = arith.mulf %525, %524 : vector<2x128xf32>
    %527 = math.tanh %526 : vector<2x128xf32>
    %cst_198 = arith.constant 5.000000e-01 : f32
    %528 = vector.broadcast %cst_198 : f32 to vector<2x128xf32>
    %529 = arith.mulf %528, %527 : vector<2x128xf32>
    %cst_199 = arith.constant 5.000000e-01 : f32
    %530 = vector.broadcast %cst_199 : f32 to vector<2x128xf32>
    %531 = arith.addf %529, %530 : vector<2x128xf32>
    %532 = arith.mulf %521, %496 : vector<2x128xf32>
    %533 = arith.mulf %513, %523 : vector<2x128xf32>
    %534 = arith.addf %532, %533 : vector<2x128xf32>
    %535 = math.tanh %534 : vector<2x128xf32>
    %536 = arith.mulf %531, %535 : vector<2x128xf32>
    %c0_200 = arith.constant 0 : index
    %c14 = arith.constant 14 : index
    %c0_201 = arith.constant 0 : index
    %537 = vector.load %arg2[%c0_200, %c14, %c0_201] : memref<2x16x512xbf16, #tpu.memory_space<vmem>>, vector<2x1x512xbf16>
    %538 = vector.shape_cast %537 : vector<2x1x512xbf16> to vector<2x512xbf16>
    %539 = arith.extf %538 : vector<2x512xbf16> to vector<2x512xf32>
    %540 = arith.truncf %536 : vector<2x128xf32> to vector<2x128xbf16>
    %c0_202 = arith.constant 0 : index
    %c0_203 = arith.constant 0 : index
    %541 = vector.load %arg3[%c0_202, %c0_203] : memref<128x512xbf16, #tpu.memory_space<vmem>>, vector<128x512xbf16>
    %cst_204 = arith.constant dense<0.000000e+00> : vector<2x512xf32>
    %542 = tpu.matmul %540, %541, %cst_204 {dimension_numbers = #tpu.dot_dimension_numbers<[1], [0], [0], [1], [0, 0, 1, 1], [], []>} : vector<2x128xbf16>, vector<128x512xbf16>, vector<2x512xf32> -> vector<2x512xf32>
    %543 = arith.addf %539, %542 : vector<2x512xf32>
    %544 = vector.extract_strided_slice %543 {offsets = [0, 0], sizes = [2, 128], strides = [1, 1]} : vector<2x512xf32> to vector<2x128xf32>
    %cst_205 = arith.constant 5.000000e-01 : f32
    %545 = vector.broadcast %cst_205 : f32 to vector<2x128xf32>
    %546 = arith.mulf %545, %544 : vector<2x128xf32>
    %547 = math.tanh %546 : vector<2x128xf32>
    %cst_206 = arith.constant 5.000000e-01 : f32
    %548 = vector.broadcast %cst_206 : f32 to vector<2x128xf32>
    %549 = arith.mulf %548, %547 : vector<2x128xf32>
    %cst_207 = arith.constant 5.000000e-01 : f32
    %550 = vector.broadcast %cst_207 : f32 to vector<2x128xf32>
    %551 = arith.addf %549, %550 : vector<2x128xf32>
    %552 = vector.extract_strided_slice %543 {offsets = [0, 128], sizes = [2, 128], strides = [1, 1]} : vector<2x512xf32> to vector<2x128xf32>
    %cst_208 = arith.constant 5.000000e-01 : f32
    %553 = vector.broadcast %cst_208 : f32 to vector<2x128xf32>
    %554 = arith.mulf %553, %552 : vector<2x128xf32>
    %555 = math.tanh %554 : vector<2x128xf32>
    %cst_209 = arith.constant 5.000000e-01 : f32
    %556 = vector.broadcast %cst_209 : f32 to vector<2x128xf32>
    %557 = arith.mulf %556, %555 : vector<2x128xf32>
    %cst_210 = arith.constant 5.000000e-01 : f32
    %558 = vector.broadcast %cst_210 : f32 to vector<2x128xf32>
    %559 = arith.addf %557, %558 : vector<2x128xf32>
    %560 = vector.extract_strided_slice %543 {offsets = [0, 256], sizes = [2, 128], strides = [1, 1]} : vector<2x512xf32> to vector<2x128xf32>
    %561 = math.tanh %560 : vector<2x128xf32>
    %562 = vector.extract_strided_slice %543 {offsets = [0, 384], sizes = [2, 128], strides = [1, 1]} : vector<2x512xf32> to vector<2x128xf32>
    %cst_211 = arith.constant 5.000000e-01 : f32
    %563 = vector.broadcast %cst_211 : f32 to vector<2x128xf32>
    %564 = arith.mulf %563, %562 : vector<2x128xf32>
    %565 = math.tanh %564 : vector<2x128xf32>
    %cst_212 = arith.constant 5.000000e-01 : f32
    %566 = vector.broadcast %cst_212 : f32 to vector<2x128xf32>
    %567 = arith.mulf %566, %565 : vector<2x128xf32>
    %cst_213 = arith.constant 5.000000e-01 : f32
    %568 = vector.broadcast %cst_213 : f32 to vector<2x128xf32>
    %569 = arith.addf %567, %568 : vector<2x128xf32>
    %570 = arith.mulf %559, %534 : vector<2x128xf32>
    %571 = arith.mulf %551, %561 : vector<2x128xf32>
    %572 = arith.addf %570, %571 : vector<2x128xf32>
    %573 = math.tanh %572 : vector<2x128xf32>
    %574 = arith.mulf %569, %573 : vector<2x128xf32>
    %c0_214 = arith.constant 0 : index
    %c15 = arith.constant 15 : index
    %c0_215 = arith.constant 0 : index
    %575 = vector.load %arg2[%c0_214, %c15, %c0_215] : memref<2x16x512xbf16, #tpu.memory_space<vmem>>, vector<2x1x512xbf16>
    %576 = vector.shape_cast %575 : vector<2x1x512xbf16> to vector<2x512xbf16>
    %577 = arith.extf %576 : vector<2x512xbf16> to vector<2x512xf32>
    %578 = arith.truncf %574 : vector<2x128xf32> to vector<2x128xbf16>
    %c0_216 = arith.constant 0 : index
    %c0_217 = arith.constant 0 : index
    %579 = vector.load %arg3[%c0_216, %c0_217] : memref<128x512xbf16, #tpu.memory_space<vmem>>, vector<128x512xbf16>
    %cst_218 = arith.constant dense<0.000000e+00> : vector<2x512xf32>
    %580 = tpu.matmul %578, %579, %cst_218 {dimension_numbers = #tpu.dot_dimension_numbers<[1], [0], [0], [1], [0, 0, 1, 1], [], []>} : vector<2x128xbf16>, vector<128x512xbf16>, vector<2x512xf32> -> vector<2x512xf32>
    %581 = arith.addf %577, %580 : vector<2x512xf32>
    %582 = vector.extract_strided_slice %581 {offsets = [0, 0], sizes = [2, 128], strides = [1, 1]} : vector<2x512xf32> to vector<2x128xf32>
    %cst_219 = arith.constant 5.000000e-01 : f32
    %583 = vector.broadcast %cst_219 : f32 to vector<2x128xf32>
    %584 = arith.mulf %583, %582 : vector<2x128xf32>
    %585 = math.tanh %584 : vector<2x128xf32>
    %cst_220 = arith.constant 5.000000e-01 : f32
    %586 = vector.broadcast %cst_220 : f32 to vector<2x128xf32>
    %587 = arith.mulf %586, %585 : vector<2x128xf32>
    %cst_221 = arith.constant 5.000000e-01 : f32
    %588 = vector.broadcast %cst_221 : f32 to vector<2x128xf32>
    %589 = arith.addf %587, %588 : vector<2x128xf32>
    %590 = vector.extract_strided_slice %581 {offsets = [0, 128], sizes = [2, 128], strides = [1, 1]} : vector<2x512xf32> to vector<2x128xf32>
    %cst_222 = arith.constant 5.000000e-01 : f32
    %591 = vector.broadcast %cst_222 : f32 to vector<2x128xf32>
    %592 = arith.mulf %591, %590 : vector<2x128xf32>
    %593 = math.tanh %592 : vector<2x128xf32>
    %cst_223 = arith.constant 5.000000e-01 : f32
    %594 = vector.broadcast %cst_223 : f32 to vector<2x128xf32>
    %595 = arith.mulf %594, %593 : vector<2x128xf32>
    %cst_224 = arith.constant 5.000000e-01 : f32
    %596 = vector.broadcast %cst_224 : f32 to vector<2x128xf32>
    %597 = arith.addf %595, %596 : vector<2x128xf32>
    %598 = vector.extract_strided_slice %581 {offsets = [0, 256], sizes = [2, 128], strides = [1, 1]} : vector<2x512xf32> to vector<2x128xf32>
    %599 = math.tanh %598 : vector<2x128xf32>
    %600 = vector.extract_strided_slice %581 {offsets = [0, 384], sizes = [2, 128], strides = [1, 1]} : vector<2x512xf32> to vector<2x128xf32>
    %cst_225 = arith.constant 5.000000e-01 : f32
    %601 = vector.broadcast %cst_225 : f32 to vector<2x128xf32>
    %602 = arith.mulf %601, %600 : vector<2x128xf32>
    %603 = math.tanh %602 : vector<2x128xf32>
    %cst_226 = arith.constant 5.000000e-01 : f32
    %604 = vector.broadcast %cst_226 : f32 to vector<2x128xf32>
    %605 = arith.mulf %604, %603 : vector<2x128xf32>
    %cst_227 = arith.constant 5.000000e-01 : f32
    %606 = vector.broadcast %cst_227 : f32 to vector<2x128xf32>
    %607 = arith.addf %605, %606 : vector<2x128xf32>
    %608 = arith.mulf %597, %572 : vector<2x128xf32>
    %609 = arith.mulf %589, %599 : vector<2x128xf32>
    %610 = arith.addf %608, %609 : vector<2x128xf32>
    %611 = math.tanh %610 : vector<2x128xf32>
    %612 = arith.mulf %607, %611 : vector<2x128xf32>
    %c0_i32_228 = arith.constant 0 : i32
    %613 = arith.cmpi eq, %arg1, %c0_i32_228 : i32
    %614 = arith.extui %613 : i1 to i32
    %c0_i32_229 = arith.constant 0 : i32
    %615 = arith.cmpi ne, %614, %c0_i32_229 : i32
    scf.if %615 {
      %c0_237 = arith.constant 0 : index
      %c0_238 = arith.constant 0 : index
      %636 = vector.load %arg5[%c0_237, %c0_238] : memref<2x128xf32, #tpu.memory_space<vmem>>, vector<2x128xf32>
      tpu.vector_store %arg5[%c0_237, %c0_238], %610 {strides = array<i32>} : memref<2x128xf32, #tpu.memory_space<vmem>>, vector<2x128xf32>,
    } else {
    }
    %616 = vector.shape_cast %42 : vector<2x128xf32> to vector<2x1x128xf32>
    %617 = vector.shape_cast %80 : vector<2x128xf32> to vector<2x1x128xf32>
    %618 = vector.shape_cast %118 : vector<2x128xf32> to vector<2x1x128xf32>
    %619 = vector.shape_cast %156 : vector<2x128xf32> to vector<2x1x128xf32>
    %620 = vector.shape_cast %194 : vector<2x128xf32> to vector<2x1x128xf32>
    %621 = vector.shape_cast %232 : vector<2x128xf32> to vector<2x1x128xf32>
    %622 = vector.shape_cast %270 : vector<2x128xf32> to vector<2x1x128xf32>
    %623 = vector.shape_cast %308 : vector<2x128xf32> to vector<2x1x128xf32>
    %624 = vector.shape_cast %346 : vector<2x128xf32> to vector<2x1x128xf32>
    %625 = vector.shape_cast %384 : vector<2x128xf32> to vector<2x1x128xf32>
    %626 = vector.shape_cast %422 : vector<2x128xf32> to vector<2x1x128xf32>
    %627 = vector.shape_cast %460 : vector<2x128xf32> to vector<2x1x128xf32>
    %628 = vector.shape_cast %498 : vector<2x128xf32> to vector<2x1x128xf32>
    %629 = vector.shape_cast %536 : vector<2x128xf32> to vector<2x1x128xf32>
    %630 = vector.shape_cast %574 : vector<2x128xf32> to vector<2x1x128xf32>
    %631 = vector.shape_cast %612 : vector<2x128xf32> to vector<2x1x128xf32>
    %632 = tpu.concatenate %616, %617, %618, %619, %620, %621, %622, %623, %624, %625, %626, %627, %628, %629, %630, %631 in 1 : vector<2x1x128xf32>, vector<2x1x128xf32>, vector<2x1x128xf32>, vector<2x1x128xf32>, vector<2x1x128xf32>, vector<2x1x128xf32>, vector<2x1x128xf32>, vector<2x1x128xf32>, vector<2x1x128xf32>, vector<2x1x128xf32>, vector<2x1x128xf32>, vector<2x1x128xf32>, vector<2x1x128xf32>, vector<2x1x128xf32>, vector<2x1x128xf32>, vector<2x1x128xf32> -> vector<2x16x128xf32>
    %c0_230 = arith.constant 0 : index
    %c0_231 = arith.constant 0 : index
    %c0_232 = arith.constant 0 : index
    %633 = vector.load %arg4[%c0_230, %c0_231, %c0_232] : memref<2x16x128xf32, #tpu.memory_space<vmem>>, vector<2x16x128xf32>
    tpu.vector_store %arg4[%c0_230, %c0_231, %c0_232], %632 {strides = array<i32>} : memref<2x16x128xf32, #tpu.memory_space<vmem>>, vector<2x16x128xf32>,
    %c0_233 = arith.constant 0 : index
    %c0_234 = arith.constant 0 : index
    %634 = vector.load %arg6[%c0_233, %c0_234] : memref<2x128xf32, #tpu.memory_space<vmem>>, vector<2x128xf32>
    tpu.vector_store %arg6[%c0_233, %c0_234], %612 {strides = array<i32>} : memref<2x128xf32, #tpu.memory_space<vmem>>, vector<2x128xf32>,
    %c0_235 = arith.constant 0 : index
    %c0_236 = arith.constant 0 : index
    %635 = vector.load %arg7[%c0_235, %c0_236] : memref<2x128xf32, #tpu.memory_space<vmem>>, vector<2x128xf32>
    tpu.vector_store %arg7[%c0_235, %c0_236], %610 {strides = array<i32>} : memref<2x128xf32, #tpu.memory_space<vmem>>, vector<2x128xf32>,
    return
  }
  func.func @transform_0(%arg0: i32, %arg1: i32) -> (i32, i32, i32) {
    %c0_i32 = arith.constant 0 : i32
    %c0_i32_0 = arith.constant 0 : i32
    return %arg0, %arg1, %c0_i32 : i32, i32, i32
  }
  func.func @transform_1(%arg0: i32, %arg1: i32) -> (i32, i32) {
    %c0_i32 = arith.constant 0 : i32
    %c0_i32_0 = arith.constant 0 : i32
    %c0_i32_1 = arith.constant 0 : i32
    return %c0_i32, %c0_i32_0 : i32, i32
  }
  func.func @transform_2(%arg0: i32, %arg1: i32) -> (i32, i32, i32) {
    %c0_i32 = arith.constant 0 : i32
    %c0_i32_0 = arith.constant 0 : i32
    return %arg0, %arg1, %c0_i32 : i32, i32, i32
  }
  func.func @transform_3(%arg0: i32, %arg1: i32) -> (i32, i32) {
    %c0_i32 = arith.constant 0 : i32
    %c0_i32_0 = arith.constant 0 : i32
    return %arg0, %c0_i32 : i32, i32
  }
}

</mosaic_0001>

<llo_original>
// kernel: protein_lstm_layer.1
$region0: #{protein_lstm_layer.1}
  #allocation0 [shape = 'u32[]', space=smem, size = 0x4, offset = 0x4, fixed_abs, tag = 'smem constant byte address 0x4 - core index']
  #allocation1 [shape = 'u32[144,128]{1,0:T(1,128)}', space=vmem, size = 0x12000, scoped, tag = 'internal scratch']
  #allocation2 [shape = 'f32[2,128]{1,0:T(2,128)}', space=vmem, size = 0x400, scoped, tag = 'scratch operand']
  #allocation3 [shape = 'f32[2,128]{1,0:T(2,128)}', space=vmem, size = 0x400, scoped, tag = 'scratch operand']
  %s0 = inlined_call_operand.vmem [shape: bf16[2,16,512], index: 0, kind: input, shape index: {}]
  %s1 = inlined_call_operand.vmem [shape: bf16[128,512], index: 1, kind: input, shape index: {}]
  %s2 = inlined_call_operand.vmem [shape: f32[2,16,128], index: 2, kind: output, shape index: {0}]
  %s3 = inlined_call_operand.vmem [shape: f32[2,128], index: 3, kind: output, shape index: {1}]
  %4 = xla_tuple %s2, %s3
  %s5 = sld [smem:[#allocation0]]
  $region34: #{protein_lstm_layer.1} parent=0
    _
  %s7 = ssub.s32 1, %s5
  %s8 = scalar_select 0, %s7, %s5
  // Predicated region
  $region2: #{protein_lstm_layer.1} parent=0 // pred_check
    _
  $region3: #{protein_lstm_layer.1} parent=0 // pred_check_branch
    %10 = sbr.rel (0) target = $region5
  $region4: #{protein_lstm_layer.1} parent=0 // pred_region
    _
  $region5: #{protein_lstm_layer.1} parent=0 // pred_fallthru
    _
  // Predicated region
  $region6: #{protein_lstm_layer.1} parent=0 // pred_check
    _
  $region7: #{protein_lstm_layer.1} parent=0 // pred_check_branch
    %12 = sbr.rel (0) target = $region9
  $region8: #{protein_lstm_layer.1} parent=0 // pred_region
    _
  $region9: #{protein_lstm_layer.1} parent=0 // pred_fallthru
    _
  %p14 = scmp.eq.s32.totalorder 0, 0
  // Predicated region
  $region10: #{protein_lstm_layer.1} parent=0 // pred_check
    %p15 = pneg %p14
  $region11: #{protein_lstm_layer.1} parent=0 // pred_check_branch
    %17 = sbr.rel (%p15) target = $region13
  $region12: #{protein_lstm_layer.1} parent=0 // pred_region
    %18 = vst [vmem:[#allocation2] sm:$0x3] 0.0
    %19 = vst [vmem:[#allocation3] sm:$0x3] 0.0
  $region13: #{protein_lstm_layer.1} parent=0 // pred_fallthru
    _
  %v20 = vld [vmem:[#allocation2] sm:$0x3]
  %v21 = vld [vmem:[#allocation3] sm:$0x3]
  %v22 = vld [vmem:[%s0] sm:$0x11]
  %v23 = vld [vmem:[%s0 + $0x8] sm:$0x11]
  %v24 = vld [vmem:[%s0 + $0x20] sm:$0x11]
  %v25 = vld [vmem:[%s0 + $0x28] sm:$0x11]
  %v26 = vunpack.c.l.bf16 %v22
  %v27 = vunpack.c.h.bf16 %v22
  %v28 = vunpack.c.l.bf16 %v23
  %v29 = vunpack.c.h.bf16 %v23
  %v30 = vunpack.c.l.bf16 %v24
  %v31 = vunpack.c.h.bf16 %v24
  %v32 = vunpack.c.l.bf16 %v25
  %v33 = vunpack.c.h.bf16 %v25
  %v34 = vpack.c.bf16 %v20, %v20
  %v35 = vld [vmem:[%s1] sm:$0xff]
  %v36 = vld [vmem:[%s1 + $0x8] sm:$0xff]
  %v37 = vld [vmem:[%s1 + $0x10] sm:$0xff]
  %v38 = vld [vmem:[%s1 + $0x18] sm:$0xff]
  %v39 = vld [vmem:[%s1 + $0x20] sm:$0xff]
  %v40 = vld [vmem:[%s1 + $0x28] sm:$0xff]
  %v41 = vld [vmem:[%s1 + $0x30] sm:$0xff]
  %v42 = vld [vmem:[%s1 + $0x38] sm:$0xff]
  %v43 = vld [vmem:[%s1 + $0x40] sm:$0xff]
  %v44 = vld [vmem:[%s1 + $0x48] sm:$0xff]
  %v45 = vld [vmem:[%s1 + $0x50] sm:$0xff]
  %v46 = vld [vmem:[%s1 + $0x58] sm:$0xff]
  %v47 = vld [vmem:[%s1 + $0x60] sm:$0xff]
  %v48 = vld [vmem:[%s1 + $0x68] sm:$0xff]
  %v49 = vld [vmem:[%s1 + $0x70] sm:$0xff]
  %v50 = vld [vmem:[%s1 + $0x78] sm:$0xff]
  %v51 = vld [vmem:[%s1 + $0x80] sm:$0xff]
  %v52 = vld [vmem:[%s1 + $0x88] sm:$0xff]
  %v53 = vld [vmem:[%s1 + $0x90] sm:$0xff]
  %v54 = vld [vmem:[%s1 + $0x98] sm:$0xff]
  %v55 = vld [vmem:[%s1 + $0xa0] sm:$0xff]
  %v56 = vld [vmem:[%s1 + $0xa8] sm:$0xff]
  %v57 = vld [vmem:[%s1 + $0xb0] sm:$0xff]
  %v58 = vld [vmem:[%s1 + $0xb8] sm:$0xff]
  %v59 = vld [vmem:[%s1 + $0xc0] sm:$0xff]
  %v60 = vld [vmem:[%s1 + $0xc8] sm:$0xff]
  %v61 = vld [vmem:[%s1 + $0xd0] sm:$0xff]
  %v62 = vld [vmem:[%s1 + $0xd8] sm:$0xff]
  %v63 = vld [vmem:[%s1 + $0xe0] sm:$0xff]
  %v64 = vld [vmem:[%s1 + $0xe8] sm:$0xff]
  %v65 = vld [vmem:[%s1 + $0xf0] sm:$0xff]
  %v66 = vld [vmem:[%s1 + $0xf8] sm:$0xff]
  %v99 = vunpack.c.l.b16 %v35
  %v100 = vunpack.c.h.b16 %v35
  %v101 = vunpack.c.l.b16 %v36
  %v102 = vunpack.c.h.b16 %v36
  %v103 = vunpack.c.l.b16 %v37
  %v104 = vunpack.c.h.b16 %v37
  %v105 = vunpack.c.l.b16 %v38
  %v106 = vunpack.c.h.b16 %v38
  %v107 = vunpack.c.l.b16 %v39
  %v108 = vunpack.c.h.b16 %v39
  %v109 = vunpack.c.l.b16 %v40
  %v110 = vunpack.c.h.b16 %v40
  %v111 = vunpack.c.l.b16 %v41
  %v112 = vunpack.c.h.b16 %v41
  %v113 = vunpack.c.l.b16 %v42
  %v114 = vunpack.c.h.b16 %v42
  %v115 = vunpack.c.l.b16 %v43
  %v116 = vunpack.c.h.b16 %v43
  %v117 = vunpack.c.l.b16 %v44
  %v118 = vunpack.c.h.b16 %v44
  %v119 = vunpack.c.l.b16 %v45
  %v120 = vunpack.c.h.b16 %v45
  %v121 = vunpack.c.l.b16 %v46
  %v122 = vunpack.c.h.b16 %v46
  %v123 = vunpack.c.l.b16 %v47
  %v124 = vunpack.c.h.b16 %v47
  %v125 = vunpack.c.l.b16 %v48
  %v126 = vunpack.c.h.b16 %v48
  %v127 = vunpack.c.l.b16 %v49
  %v128 = vunpack.c.h.b16 %v49
  %v129 = vunpack.c.l.b16 %v50
  %v130 = vunpack.c.h.b16 %v50
  %v131 = vunpack.c.l.b16 %v51
  %v132 = vunpack.c.h.b16 %v51
  %v133 = vunpack.c.l.b16 %v52
  %v134 = vunpack.c.h.b16 %v52
  %v135 = vunpack.c.l.b16 %v53
  %v136 = vunpack.c.h.b16 %v53
  %v137 = vunpack.c.l.b16 %v54
  %v138 = vunpack.c.h.b16 %v54
  %v139 = vunpack.c.l.b16 %v55
  %v140 = vunpack.c.h.b16 %v55
  %v141 = vunpack.c.l.b16 %v56
  %v142 = vunpack.c.h.b16 %v56
  %v143 = vunpack.c.l.b16 %v57
  %v144 = vunpack.c.h.b16 %v57
  %v145 = vunpack.c.l.b16 %v58
  %v146 = vunpack.c.h.b16 %v58
  %v147 = vunpack.c.l.b16 %v59
  %v148 = vunpack.c.h.b16 %v59
  %v149 = vunpack.c.l.b16 %v60
  %v150 = vunpack.c.h.b16 %v60
  %v151 = vunpack.c.l.b16 %v61
  %v152 = vunpack.c.h.b16 %v61
  %v153 = vunpack.c.l.b16 %v62
  %v154 = vunpack.c.h.b16 %v62
  %v155 = vunpack.c.l.b16 %v63
  %v156 = vunpack.c.h.b16 %v63
  %v157 = vunpack.c.l.b16 %v64
  %v158 = vunpack.c.h.b16 %v64
  %v159 = vunpack.c.l.b16 %v65
  %v160 = vunpack.c.h.b16 %v65
  %v161 = vunpack.c.l.b16 %v66
  %v162 = vunpack.c.h.b16 %v66
  %v163 = vpack.c.b16 %v103, %v99
  %v164 = vpack.c.b16 %v104, %v100
  %v165 = vpack.c.b16 %v105, %v101
  %v166 = vpack.c.b16 %v106, %v102
  %v167 = vpack.c.b16 %v111, %v107
  %v168 = vpack.c.b16 %v112, %v108
  %v169 = vpack.c.b16 %v113, %v109
  %v170 = vpack.c.b16 %v114, %v110
  %v171 = vpack.c.b16 %v119, %v115
  %v172 = vpack.c.b16 %v120, %v116
  %v173 = vpack.c.b16 %v121, %v117
  %v174 = vpack.c.b16 %v122, %v118
  %v175 = vpack.c.b16 %v127, %v123
  %v176 = vpack.c.b16 %v128, %v124
  %v177 = vpack.c.b16 %v129, %v125
  %v178 = vpack.c.b16 %v130, %v126
  %v179 = vpack.c.b16 %v135, %v131
  %v180 = vpack.c.b16 %v136, %v132
  %v181 = vpack.c.b16 %v137, %v133
  %v182 = vpack.c.b16 %v138, %v134
  %v183 = vpack.c.b16 %v143, %v139
  %v184 = vpack.c.b16 %v144, %v140
  %v185 = vpack.c.b16 %v145, %v141
  %v186 = vpack.c.b16 %v146, %v142
  %v187 = vpack.c.b16 %v151, %v147
  %v188 = vpack.c.b16 %v152, %v148
  %v189 = vpack.c.b16 %v153, %v149
  %v190 = vpack.c.b16 %v154, %v150
  %v191 = vpack.c.b16 %v159, %v155
  %v192 = vpack.c.b16 %v160, %v156
  %v193 = vpack.c.b16 %v161, %v157
  %v194 = vpack.c.b16 %v162, %v158
  %227 = vmatprep.subr.bf16.mxu0 %v192
  %228 = vmatpush1.bf16.msra.mxu0 %v191
  %229 = vmatprep.subr.bf16.mxu0 %v188
  %230 = vmatpush1.bf16.msra.mxu0 %v187
  %231 = vmatprep.subr.bf16.mxu0 %v184
  %232 = vmatpush1.bf16.msra.mxu0 %v183
  %233 = vmatprep.subr.bf16.mxu0 %v180
  %234 = vmatpush1.bf16.msra.mxu0 %v179
  %235 = vmatprep.subr.bf16.mxu0 %v176
  %236 = vmatpush1.bf16.msra.mxu0 %v175
  %237 = vmatprep.subr.bf16.mxu0 %v172
  %238 = vmatpush1.bf16.msra.mxu0 %v171
  %239 = vmatprep.subr.bf16.mxu0 %v168
  %240 = vmatpush1.bf16.msra.mxu0 %v167
  %241 = vmatprep.subr.bf16.mxu0 %v164
  %242 = vmatpush1.bf16.msra.mxu0 %v163
  %243 = vmatprep.subr.bf16.mxu0 0
  %244 = vmatpush2.bf16.msra.mxu0 0
  %245 = vmatprep.subr.bf16.mxu0 0
  %246 = vmatpush2.bf16.msra.mxu0 0
  %247 = vmatprep.subr.bf16.mxu0 0
  %248 = vmatpush2.bf16.msra.mxu0 0
  %249 = vmatprep.subr.bf16.mxu0 0
  %250 = vmatpush2.bf16.msra.mxu0 0
  %251 = vmatprep.subr.bf16.mxu0 0
  %252 = vmatpush2.bf16.msra.mxu0 0
  %253 = vmatprep.subr.bf16.mxu0 0
  %254 = vmatpush2.bf16.msra.mxu0 0
  %255 = vmatprep.subr.bf16.mxu0 0
  %256 = vmatpush2.bf16.msra.mxu0 0
  %257 = vmatprep.subr.bf16.mxu0 0
  %258 = vmatpush2.bf16.msra.mxu0 0
  %259 = vmatprep.mubr.bf16.mxu0 0
  %260 = vmatmul.mubr.bf16.gmra.mxu0 %v34
  %v261 = vpop.f32.mrf.mxu0
  %v262 = vadd.f32 0.0, %v261
  %v263 = vpop.f32.mrf.mxu0
  %v264 = vadd.f32 0.0, %v263
  %v265 = vpop.f32.mrf.mxu0
  %v266 = vpop.f32.mrf.mxu0
  %267 = vdwg.mxu0
  %268 = vmatprep.subr.bf16.mxu0 %v194
  %269 = vmatpush1.bf16.msra.mxu0 %v193
  %270 = vmatprep.subr.bf16.mxu0 %v190
  %271 = vmatpush1.bf16.msra.mxu0 %v189
  %272 = vmatprep.subr.bf16.mxu0 %v186
  %273 = vmatpush1.bf16.msra.mxu0 %v185
  %274 = vmatprep.subr.bf16.mxu0 %v182
  %275 = vmatpush1.bf16.msra.mxu0 %v181
  %276 = vmatprep.subr.bf16.mxu0 %v178
  %277 = vmatpush1.bf16.msra.mxu0 %v177
  %278 = vmatprep.subr.bf16.mxu0 %v174
  %279 = vmatpush1.bf16.msra.mxu0 %v173
  %280 = vmatprep.subr.bf16.mxu0 %v170
  %281 = vmatpush1.bf16.msra.mxu0 %v169
  %282 = vmatprep.subr.bf16.mxu0 %v166
  %283 = vmatpush1.bf16.msra.mxu0 %v165
  %284 = vmatprep.subr.bf16.mxu0 0
  %285 = vmatpush2.bf16.msra.mxu0 0
  %286 = vmatprep.subr.bf16.mxu0 0
  %287 = vmatpush2.bf16.msra.mxu0 0
  %288 = vmatprep.subr.bf16.mxu0 0
  %289 = vmatpush2.bf16.msra.mxu0 0
  %290 = vmatprep.subr.bf16.mxu0 0
  %291 = vmatpush2.bf16.msra.mxu0 0
  %292 = vmatprep.subr.bf16.mxu0 0
  %293 = vmatpush2.bf16.msra.mxu0 0
  %294 = vmatprep.subr.bf16.mxu0 0
  %295 = vmatpush2.bf16.msra.mxu0 0
  %296 = vmatprep.subr.bf16.mxu0 0
  %297 = vmatpush2.bf16.msra.mxu0 0
  %298 = vmatprep.subr.bf16.mxu0 0
  %299 = vmatpush2.bf16.msra.mxu0 0
  %300 = vmatprep.mubr.bf16.mxu0 0
  %301 = vmatmul.mubr.bf16.gmra.mxu0 %v34
  %v302 = vpop.f32.mrf.mxu0
  %v303 = vadd.f32 0.0, %v302
  %v304 = vpop.f32.mrf.mxu0
  %v305 = vadd.f32 0.0, %v304
  %v306 = vpop.f32.mrf.mxu0
  %v307 = vpop.f32.mrf.mxu0
  %308 = vdwg.mxu0
  %v313 = vrot.slane %v262, 1
  %v314 = vrot.slane %v264, 1
  %v315 = vrot.slane %v303, 1
  %v316 = vrot.slane %v305, 1
  %v325 = vadd.f32 %v26, %v262
  %v326 = vadd.f32 %v27, %v264
  %v327 = vadd.f32 %v28, %v303
  %v328 = vadd.f32 %v29, %v305
  %v329 = vadd.f32 %v30, %v313
  %v330 = vadd.f32 %v31, %v314
  %v331 = vadd.f32 %v32, %v315
  %v332 = vadd.f32 %v33, %v316
  %v333 = vmul.f32 %v325, 0.5
  %v334 = vmul.f32 %v329, 0.5
  %v335 = vtanh.pop %v333
  %v336 = vtanh.pop %v334
  %v337 = vmul.f32 %v335, 0.5
  %v338 = vmul.f32 %v336, 0.5
  %v339 = vadd.f32 %v337, 0.5
  %v340 = vadd.f32 %v338, 0.5
  %v341 = vmul.f32 %v326, 0.5
  %v342 = vmul.f32 %v330, 0.5
  %v343 = vtanh.pop %v341
  %v344 = vtanh.pop %v342
  %v345 = vmul.f32 %v343, 0.5
  %v346 = vmul.f32 %v344, 0.5
  %v347 = vadd.f32 %v345, 0.5
  %v348 = vadd.f32 %v346, 0.5
  %v349 = vtanh.pop %v327
  %v350 = vtanh.pop %v331
  %v351 = vmul.f32 %v328, 0.5
  %v352 = vmul.f32 %v332, 0.5
  %v353 = vtanh.pop %v351
  %v354 = vtanh.pop %v352
  %v355 = vmul.f32 %v353, 0.5
  %v356 = vmul.f32 %v354, 0.5
  %v357 = vadd.f32 %v355, 0.5
  %v358 = vadd.f32 %v356, 0.5
  %v360 = vrot.slane %v21, 1
  %v363 = vmul.f32 %v347, %v21
  %v364 = vmul.f32 %v348, %v360
  %v365 = vmul.f32 %v339, %v349
  %v366 = vmul.f32 %v340, %v350
  %v367 = vadd.f32 %v363, %v365
  %v368 = vadd.f32 %v364, %v366
  %v369 = vtanh.pop %v367
  %v370 = vtanh.pop %v368
  %v371 = vmul.f32 %v357, %v369
  %v372 = vmul.f32 %v358, %v370
  %v373 = vpack.c.bf16 %v371, %v371
  %v374 = vpack.c.bf16 %v372, %v372
  %v377 = vunpack.c.l.b16 %v373
  %v378 = vunpack.c.l.b16 %v374
  %v379 = vrot.slane %v378, 7
  %vm380 = vcmask 1041409
  %v381 = vsel %vm380, %v379, %v377
  %v382 = vpack.c.b16 %v381, %v381
  %384 = vmatprep.subr.bf16.mxu0 %v192
  %385 = vmatpush1.bf16.msra.mxu0 %v191
  %386 = vmatprep.subr.bf16.mxu0 %v188
  %387 = vmatpush1.bf16.msra.mxu0 %v187
  %388 = vmatprep.subr.bf16.mxu0 %v184
  %389 = vmatpush1.bf16.msra.mxu0 %v183
  %390 = vmatprep.subr.bf16.mxu0 %v180
  %391 = vmatpush1.bf16.msra.mxu0 %v179
  %392 = vmatprep.subr.bf16.mxu0 %v176
  %393 = vmatpush1.bf16.msra.mxu0 %v175
  %394 = vmatprep.subr.bf16.mxu0 %v172
  %395 = vmatpush1.bf16.msra.mxu0 %v171
  %396 = vmatprep.subr.bf16.mxu0 %v168
  %397 = vmatpush1.bf16.msra.mxu0 %v167
  %398 = vmatprep.subr.bf16.mxu0 %v164
  %399 = vmatpush1.bf16.msra.mxu0 %v163
  %400 = vmatprep.subr.bf16.mxu0 0
  %401 = vmatpush2.bf16.msra.mxu0 0
  %402 = vmatprep.subr.bf16.mxu0 0
  %403 = vmatpush2.bf16.msra.mxu0 0
  %404 = vmatprep.subr.bf16.mxu0 0
  %405 = vmatpush2.bf16.msra.mxu0 0
  %406 = vmatprep.subr.bf16.mxu0 0
  %407 = vmatpush2.bf16.msra.mxu0 0
  %408 = vmatprep.subr.bf16.mxu0 0
  %409 = vmatpush2.bf16.msra.mxu0 0
  %410 = vmatprep.subr.bf16.mxu0 0
  %411 = vmatpush2.bf16.msra.mxu0 0
  %412 = vmatprep.subr.bf16.mxu0 0
  %413 = vmatpush2.bf16.msra.mxu0 0
  %414 = vmatprep.subr.bf16.mxu0 0
  %415 = vmatpush2.bf16.msra.mxu0 0
  %416 = vmatprep.mubr.bf16.mxu0 0
  %417 = vmatmul.mubr.bf16.gmra.mxu0 %v382
  %v418 = vpop.f32.mrf.mxu0
  %v419 = vadd.f32 0.0, %v418
  %v420 = vpop.f32.mrf.mxu0
  %v421 = vadd.f32 0.0, %v420
  %v422 = vpop.f32.mrf.mxu0
  %v423 = vpop.f32.mrf.mxu0
  %424 = vdwg.mxu0
  %425 = vmatprep.subr.bf16.mxu0 %v194
  %426 = vmatpush1.bf16.msra.mxu0 %v193
  %427 = vmatprep.subr.bf16.mxu0 %v190
  %428 = vmatpush1.bf16.msra.mxu0 %v189
  %429 = vmatprep.subr.bf16.mxu0 %v186
  %430 = vmatpush1.bf16.msra.mxu0 %v185
  %431 = vmatprep.subr.bf16.mxu0 %v182
  %432 = vmatpush1.bf16.msra.mxu0 %v181
  %433 = vmatprep.subr.bf16.mxu0 %v178
  %434 = vmatpush1.bf16.msra.mxu0 %v177
  %435 = vmatprep.subr.bf16.mxu0 %v174
  %436 = vmatpush1.bf16.msra.mxu0 %v173
  %437 = vmatprep.subr.bf16.mxu0 %v170
  %438 = vmatpush1.bf16.msra.mxu0 %v169
  %439 = vmatprep.subr.bf16.mxu0 %v166
  %440 = vmatpush1.bf16.msra.mxu0 %v165
  %441 = vmatprep.subr.bf16.mxu0 0
  %442 = vmatpush2.bf16.msra.mxu0 0
  %443 = vmatprep.subr.bf16.mxu0 0
  %444 = vmatpush2.bf16.msra.mxu0 0
  %445 = vmatprep.subr.bf16.mxu0 0
  %446 = vmatpush2.bf16.msra.mxu0 0
  %447 = vmatprep.subr.bf16.mxu0 0
  %448 = vmatpush2.bf16.msra.mxu0 0
  %449 = vmatprep.subr.bf16.mxu0 0
  %450 = vmatpush2.bf16.msra.mxu0 0
  %451 = vmatprep.subr.bf16.mxu0 0
  %452 = vmatpush2.bf16.msra.mxu0 0
  %453 = vmatprep.subr.bf16.mxu0 0
  %454 = vmatpush2.bf16.msra.mxu0 0
  %455 = vmatprep.subr.bf16.mxu0 0
  %456 = vmatpush2.bf16.msra.mxu0 0
  %457 = vmatprep.mubr.bf16.mxu0 0
  %458 = vmatmul.mubr.bf16.gmra.mxu0 %v382
  %v459 = vpop.f32.mrf.mxu0
  %v460 = vadd.f32 0.0, %v459
  %v461 = vpop.f32.mrf.mxu0
  %v462 = vadd.f32 0.0, %v461
  %v463 = vpop.f32.mrf.mxu0
  %v464 = vpop.f32.mrf.mxu0
  %465 = vdwg.mxu0
  %v470 = vrot.slane %v419, 7
  %v471 = vrot.slane %v421, 7
  %v472 = vrot.slane %v460, 7
  %v473 = vrot.slane %v462, 7
  %v482 = vadd.f32 %v26, %v470
  %v483 = vadd.f32 %v27, %v471
  %v484 = vadd.f32 %v28, %v472
  %v485 = vadd.f32 %v29, %v473
  %v486 = vadd.f32 %v30, %v419
  %v487 = vadd.f32 %v31, %v421
  %v488 = vadd.f32 %v32, %v460
  %v489 = vadd.f32 %v33, %v462
  %v490 = vmul.f32 %v482, 0.5
  %v491 = vmul.f32 %v486, 0.5
  %v492 = vtanh.pop %v490
  %v493 = vtanh.pop %v491
  %v494 = vmul.f32 %v492, 0.5
  %v495 = vmul.f32 %v493, 0.5
  %v496 = vadd.f32 %v494, 0.5
  %v497 = vadd.f32 %v495, 0.5
  %v498 = vmul.f32 %v483, 0.5
  %v499 = vmul.f32 %v487, 0.5
  %v500 = vtanh.pop %v498
  %v501 = vtanh.pop %v499
  %v502 = vmul.f32 %v500, 0.5
  %v503 = vmul.f32 %v501, 0.5
  %v504 = vadd.f32 %v502, 0.5
  %v505 = vadd.f32 %v503, 0.5
  %v506 = vtanh.pop %v484
  %v507 = vtanh.pop %v488
  %v508 = vmul.f32 %v485, 0.5
  %v509 = vmul.f32 %v489, 0.5
  %v510 = vtanh.pop %v508
  %v511 = vtanh.pop %v509
  %v512 = vmul.f32 %v510, 0.5
  %v513 = vmul.f32 %v511, 0.5
  %v514 = vadd.f32 %v512, 0.5
  %v515 = vadd.f32 %v513, 0.5
  %v518 = vrot.slane %v367, 7
  %v519 = vrot.slane %v368, 7
  %v522 = vmul.f32 %v504, %v518
  %v523 = vmul.f32 %v505, %v519
  %v524 = vmul.f32 %v496, %v506
  %v525 = vmul.f32 %v497, %v507
  %v526 = vadd.f32 %v522, %v524
  %v527 = vadd.f32 %v523, %v525
  %v528 = vtanh.pop %v526
  %v529 = vtanh.pop %v527
  %v530 = vmul.f32 %v514, %v528
  %v531 = vmul.f32 %v515, %v529
  %v532 = vld [vmem:[%s0] sm:$0x22]
  %v533 = vld [vmem:[%s0 + $0x8] sm:$0x22]
  %v534 = vld [vmem:[%s0 + $0x20] sm:$0x22]
  %v535 = vld [vmem:[%s0 + $0x28] sm:$0x22]
  %v536 = vunpack.c.l.bf16 %v532
  %v537 = vunpack.c.h.bf16 %v532
  %v538 = vunpack.c.l.bf16 %v533
  %v539 = vunpack.c.h.bf16 %v533
  %v540 = vunpack.c.l.bf16 %v534
  %v541 = vunpack.c.h.bf16 %v534
  %v542 = vunpack.c.l.bf16 %v535
  %v543 = vunpack.c.h.bf16 %v535
  %v544 = vpack.c.bf16 %v530, %v530
  %v545 = vpack.c.bf16 %v531, %v531
  %v548 = vunpack.c.l.b16 %v544
  %v549 = vunpack.c.l.b16 %v545
  %v550 = vrot.slane %v548, 1
  %v551 = vsel %vm380, %v549, %v550
  %v552 = vpack.c.b16 %v551, %v551
  %554 = vmatprep.subr.bf16.mxu0 %v192
  %555 = vmatpush1.bf16.msra.mxu0 %v191
  %556 = vmatprep.subr.bf16.mxu0 %v188
  %557 = vmatpush1.bf16.msra.mxu0 %v187
  %558 = vmatprep.subr.bf16.mxu0 %v184
  %559 = vmatpush1.bf16.msra.mxu0 %v183
  %560 = vmatprep.subr.bf16.mxu0 %v180
  %561 = vmatpush1.bf16.msra.mxu0 %v179
  %562 = vmatprep.subr.bf16.mxu0 %v176
  %563 = vmatpush1.bf16.msra.mxu0 %v175
  %564 = vmatprep.subr.bf16.mxu0 %v172
  %565 = vmatpush1.bf16.msra.mxu0 %v171
  %566 = vmatprep.subr.bf16.mxu0 %v168
  %567 = vmatpush1.bf16.msra.mxu0 %v167
  %568 = vmatprep.subr.bf16.mxu0 %v164
  %569 = vmatpush1.bf16.msra.mxu0 %v163
  %570 = vmatprep.subr.bf16.mxu0 0
  %571 = vmatpush2.bf16.msra.mxu0 0
  %572 = vmatprep.subr.bf16.mxu0 0
  %573 = vmatpush2.bf16.msra.mxu0 0
  %574 = vmatprep.subr.bf16.mxu0 0
  %575 = vmatpush2.bf16.msra.mxu0 0
  %576 = vmatprep.subr.bf16.mxu0 0
  %577 = vmatpush2.bf16.msra.mxu0 0
  %578 = vmatprep.subr.bf16.mxu0 0
  %579 = vmatpush2.bf16.msra.mxu0 0
  %580 = vmatprep.subr.bf16.mxu0 0
  %581 = vmatpush2.bf16.msra.mxu0 0
  %582 = vmatprep.subr.bf16.mxu0 0
  %583 = vmatpush2.bf16.msra.mxu0 0
  %584 = vmatprep.subr.bf16.mxu0 0
  %585 = vmatpush2.bf16.msra.mxu0 0
  %586 = vmatprep.mubr.bf16.mxu0 0
  %587 = vmatmul.mubr.bf16.gmra.mxu0 %v552
  %v588 = vpop.f32.mrf.mxu0
  %v589 = vadd.f32 0.0, %v588
  %v590 = vpop.f32.mrf.mxu0
  %v591 = vadd.f32 0.0, %v590
  %v592 = vpop.f32.mrf.mxu0
  %v593 = vpop.f32.mrf.mxu0
  %594 = vdwg.mxu0
  %595 = vmatprep.subr.bf16.mxu0 %v194
  %596 = vmatpush1.bf16.msra.mxu0 %v193
  %597 = vmatprep.subr.bf16.mxu0 %v190
  %598 = vmatpush1.bf16.msra.mxu0 %v189
  %599 = vmatprep.subr.bf16.mxu0 %v186
  %600 = vmatpush1.bf16.msra.mxu0 %v185
  %601 = vmatprep.subr.bf16.mxu0 %v182
  %602 = vmatpush1.bf16.msra.mxu0 %v181
  %603 = vmatprep.subr.bf16.mxu0 %v178
  %604 = vmatpush1.bf16.msra.mxu0 %v177
  %605 = vmatprep.subr.bf16.mxu0 %v174
  %606 = vmatpush1.bf16.msra.mxu0 %v173
  %607 = vmatprep.subr.bf16.mxu0 %v170
  %608 = vmatpush1.bf16.msra.mxu0 %v169
  %609 = vmatprep.subr.bf16.mxu0 %v166
  %610 = vmatpush1.bf16.msra.mxu0 %v165
  %611 = vmatprep.subr.bf16.mxu0 0
  %612 = vmatpush2.bf16.msra.mxu0 0
  %613 = vmatprep.subr.bf16.mxu0 0
  %614 = vmatpush2.bf16.msra.mxu0 0
  %615 = vmatprep.subr.bf16.mxu0 0
  %616 = vmatpush2.bf16.msra.mxu0 0
  %617 = vmatprep.subr.bf16.mxu0 0
  %618 = vmatpush2.bf16.msra.mxu0 0
  %619 = vmatprep.subr.bf16.mxu0 0
  %620 = vmatpush2.bf16.msra.mxu0 0
  %621 = vmatprep.subr.bf16.mxu0 0
  %622 = vmatpush2.bf16.msra.mxu0 0
  %623 = vmatprep.subr.bf16.mxu0 0
  %624 = vmatpush2.bf16.msra.mxu0 0
  %625 = vmatprep.subr.bf16.mxu0 0
  %626 = vmatpush2.bf16.msra.mxu0 0
  %627 = vmatprep.mubr.bf16.mxu0 0
  %628 = vmatmul.mubr.bf16.gmra.mxu0 %v552
  %v629 = vpop.f32.mrf.mxu0
  %v630 = vadd.f32 0.0, %v629
  %v631 = vpop.f32.mrf.mxu0
  %v632 = vadd.f32 0.0, %v631
  %v633 = vpop.f32.mrf.mxu0
  %v634 = vpop.f32.mrf.mxu0
  %635 = vdwg.mxu0
  %v640 = vrot.slane %v589, 6
  %v641 = vrot.slane %v591, 6
  %v642 = vrot.slane %v630, 6
  %v643 = vrot.slane %v632, 6
  %v644 = vrot.slane %v589, 7
  %v645 = vrot.slane %v591, 7
  %v646 = vrot.slane %v630, 7
  %v647 = vrot.slane %v632, 7
  %v656 = vadd.f32 %v536, %v640
  %v657 = vadd.f32 %v537, %v641
  %v658 = vadd.f32 %v538, %v642
  %v659 = vadd.f32 %v539, %v643
  %v660 = vadd.f32 %v540, %v644
  %v661 = vadd.f32 %v541, %v645
  %v662 = vadd.f32 %v542, %v646
  %v663 = vadd.f32 %v543, %v647
  %v664 = vmul.f32 %v656, 0.5
  %v665 = vmul.f32 %v660, 0.5
  %v666 = vtanh.pop %v664
  %v667 = vtanh.pop %v665
  %v668 = vmul.f32 %v666, 0.5
  %v669 = vmul.f32 %v667, 0.5
  %v670 = vadd.f32 %v668, 0.5
  %v671 = vadd.f32 %v669, 0.5
  %v672 = vmul.f32 %v657, 0.5
  %v673 = vmul.f32 %v661, 0.5
  %v674 = vtanh.pop %v672
  %v675 = vtanh.pop %v673
  %v676 = vmul.f32 %v674, 0.5
  %v677 = vmul.f32 %v675, 0.5
  %v678 = vadd.f32 %v676, 0.5
  %v679 = vadd.f32 %v677, 0.5
  %v680 = vtanh.pop %v658
  %v681 = vtanh.pop %v662
  %v682 = vmul.f32 %v659, 0.5
  %v683 = vmul.f32 %v663, 0.5
  %v684 = vtanh.pop %v682
  %v685 = vtanh.pop %v683
  %v686 = vmul.f32 %v684, 0.5
  %v687 = vmul.f32 %v685, 0.5
  %v688 = vadd.f32 %v686, 0.5
  %v689 = vadd.f32 %v687, 0.5
  %v692 = vrot.slane %v526, 7
  %v693 = vrot.slane %v527, 7
  %v696 = vmul.f32 %v678, %v692
  %v697 = vmul.f32 %v679, %v693
  %v698 = vmul.f32 %v670, %v680
  %v699 = vmul.f32 %v671, %v681
  %v700 = vadd.f32 %v696, %v698
  %v701 = vadd.f32 %v697, %v699
  %v702 = vtanh.pop %v700
  %v703 = vtanh.pop %v701
  %v704 = vmul.f32 %v688, %v702
  %v705 = vmul.f32 %v689, %v703
  %v706 = vpack.c.bf16 %v704, %v704
  %v707 = vpack.c.bf16 %v705, %v705
  %v710 = vunpack.c.l.b16 %v706
  %v711 = vunpack.c.l.b16 %v707
  %v712 = vrot.slane %v710, 2
  %v713 = vrot.slane %v711, 1
  %v714 = vsel %vm380, %v713, %v712
  %v715 = vpack.c.b16 %v714, %v714
  %717 = vmatprep.subr.bf16.mxu0 %v192
  %718 = vmatpush1.bf16.msra.mxu0 %v191
  %719 = vmatprep.subr.bf16.mxu0 %v188
  %720 = vmatpush1.bf16.msra.mxu0 %v187
  %721 = vmatprep.subr.bf16.mxu0 %v184
  %722 = vmatpush1.bf16.msra.mxu0 %v183
  %723 = vmatprep.subr.bf16.mxu0 %v180
  %724 = vmatpush1.bf16.msra.mxu0 %v179
  %725 = vmatprep.subr.bf16.mxu0 %v176
  %726 = vmatpush1.bf16.msra.mxu0 %v175
  %727 = vmatprep.subr.bf16.mxu0 %v172
  %728 = vmatpush1.bf16.msra.mxu0 %v171
  %729 = vmatprep.subr.bf16.mxu0 %v168
  %730 = vmatpush1.bf16.msra.mxu0 %v167
  %731 = vmatprep.subr.bf16.mxu0 %v164
  %732 = vmatpush1.bf16.msra.mxu0 %v163
  %733 = vmatprep.subr.bf16.mxu0 0
  %734 = vmatpush2.bf16.msra.mxu0 0
  %735 = vmatprep.subr.bf16.mxu0 0
  %736 = vmatpush2.bf16.msra.mxu0 0
  %737 = vmatprep.subr.bf16.mxu0 0
  %738 = vmatpush2.bf16.msra.mxu0 0
  %739 = vmatprep.subr.bf16.mxu0 0
  %740 = vmatpush2.bf16.msra.mxu0 0
  %741 = vmatprep.subr.bf16.mxu0 0
  %742 = vmatpush2.bf16.msra.mxu0 0
  %743 = vmatprep.subr.bf16.mxu0 0
  %744 = vmatpush2.bf16.msra.mxu0 0
  %745 = vmatprep.subr.bf16.mxu0 0
  %746 = vmatpush2.bf16.msra.mxu0 0
  %747 = vmatprep.subr.bf16.mxu0 0
  %748 = vmatpush2.bf16.msra.mxu0 0
  %749 = vmatprep.mubr.bf16.mxu0 0
  %750 = vmatmul.mubr.bf16.gmra.mxu0 %v715
  %v751 = vpop.f32.mrf.mxu0
  %v752 = vadd.f32 0.0, %v751
  %v753 = vpop.f32.mrf.mxu0
  %v754 = vadd.f32 0.0, %v753
  %v755 = vpop.f32.mrf.mxu0
  %v756 = vpop.f32.mrf.mxu0
  %757 = vdwg.mxu0
  %758 = vmatprep.subr.bf16.mxu0 %v194
  %759 = vmatpush1.bf16.msra.mxu0 %v193
  %760 = vmatprep.subr.bf16.mxu0 %v190
  %761 = vmatpush1.bf16.msra.mxu0 %v189
  %762 = vmatprep.subr.bf16.mxu0 %v186
  %763 = vmatpush1.bf16.msra.mxu0 %v185
  %764 = vmatprep.subr.bf16.mxu0 %v182
  %765 = vmatpush1.bf16.msra.mxu0 %v181
  %766 = vmatprep.subr.bf16.mxu0 %v178
  %767 = vmatpush1.bf16.msra.mxu0 %v177
  %768 = vmatprep.subr.bf16.mxu0 %v174
  %769 = vmatpush1.bf16.msra.mxu0 %v173
  %770 = vmatprep.subr.bf16.mxu0 %v170
  %771 = vmatpush1.bf16.msra.mxu0 %v169
  %772 = vmatprep.subr.bf16.mxu0 %v166
  %773 = vmatpush1.bf16.msra.mxu0 %v165
  %774 = vmatprep.subr.bf16.mxu0 0
  %775 = vmatpush2.bf16.msra.mxu0 0
  %776 = vmatprep.subr.bf16.mxu0 0
  %777 = vmatpush2.bf16.msra.mxu0 0
  %778 = vmatprep.subr.bf16.mxu0 0
  %779 = vmatpush2.bf16.msra.mxu0 0
  %780 = vmatprep.subr.bf16.mxu0 0
  %781 = vmatpush2.bf16.msra.mxu0 0
  %782 = vmatprep.subr.bf16.mxu0 0
  %783 = vmatpush2.bf16.msra.mxu0 0
  %784 = vmatprep.subr.bf16.mxu0 0
  %785 = vmatpush2.bf16.msra.mxu0 0
  %786 = vmatprep.subr.bf16.mxu0 0
  %787 = vmatpush2.bf16.msra.mxu0 0
  %788 = vmatprep.subr.bf16.mxu0 0
  %789 = vmatpush2.bf16.msra.mxu0 0
  %790 = vmatprep.mubr.bf16.mxu0 0
  %791 = vmatmul.mubr.bf16.gmra.mxu0 %v715
  %v792 = vpop.f32.mrf.mxu0
  %v793 = vadd.f32 0.0, %v792
  %v794 = vpop.f32.mrf.mxu0
  %v795 = vadd.f32 0.0, %v794
  %v796 = vpop.f32.mrf.mxu0
  %v797 = vpop.f32.mrf.mxu0
  %798 = vdwg.mxu0
  %v803 = vrot.slane %v752, 5
  %v804 = vrot.slane %v754, 5
  %v805 = vrot.slane %v793, 5
  %v806 = vrot.slane %v795, 5
  %v807 = vrot.slane %v752, 6
  %v808 = vrot.slane %v754, 6
  %v809 = vrot.slane %v793, 6
  %v810 = vrot.slane %v795, 6
  %v819 = vadd.f32 %v536, %v803
  %v820 = vadd.f32 %v537, %v804
  %v821 = vadd.f32 %v538, %v805
  %v822 = vadd.f32 %v539, %v806
  %v823 = vadd.f32 %v540, %v807
  %v824 = vadd.f32 %v541, %v808
  %v825 = vadd.f32 %v542, %v809
  %v826 = vadd.f32 %v543, %v810
  %v827 = vmul.f32 %v819, 0.5
  %v828 = vmul.f32 %v823, 0.5
  %v829 = vtanh.pop %v827
  %v830 = vtanh.pop %v828
  %v831 = vmul.f32 %v829, 0.5
  %v832 = vmul.f32 %v830, 0.5
  %v833 = vadd.f32 %v831, 0.5
  %v834 = vadd.f32 %v832, 0.5
  %v835 = vmul.f32 %v820, 0.5
  %v836 = vmul.f32 %v824, 0.5
  %v837 = vtanh.pop %v835
  %v838 = vtanh.pop %v836
  %v839 = vmul.f32 %v837, 0.5
  %v840 = vmul.f32 %v838, 0.5
  %v841 = vadd.f32 %v839, 0.5
  %v842 = vadd.f32 %v840, 0.5
  %v843 = vtanh.pop %v821
  %v844 = vtanh.pop %v825
  %v845 = vmul.f32 %v822, 0.5
  %v846 = vmul.f32 %v826, 0.5
  %v847 = vtanh.pop %v845
  %v848 = vtanh.pop %v846
  %v849 = vmul.f32 %v847, 0.5
  %v850 = vmul.f32 %v848, 0.5
  %v851 = vadd.f32 %v849, 0.5
  %v852 = vadd.f32 %v850, 0.5
  %v855 = vrot.slane %v700, 7
  %v856 = vrot.slane %v701, 7
  %v859 = vmul.f32 %v841, %v855
  %v860 = vmul.f32 %v842, %v856
  %v861 = vmul.f32 %v833, %v843
  %v862 = vmul.f32 %v834, %v844
  %v863 = vadd.f32 %v859, %v861
  %v864 = vadd.f32 %v860, %v862
  %v865 = vtanh.pop %v863
  %v866 = vtanh.pop %v864
  %v867 = vmul.f32 %v851, %v865
  %v868 = vmul.f32 %v852, %v866
  %v869 = vld [vmem:[%s0] sm:$0x44]
  %v870 = vld [vmem:[%s0 + $0x8] sm:$0x44]
  %v871 = vld [vmem:[%s0 + $0x20] sm:$0x44]
  %v872 = vld [vmem:[%s0 + $0x28] sm:$0x44]
  %v873 = vunpack.c.l.bf16 %v869
  %v874 = vunpack.c.h.bf16 %v869
  %v875 = vunpack.c.l.bf16 %v870
  %v876 = vunpack.c.h.bf16 %v870
  %v877 = vunpack.c.l.bf16 %v871
  %v878 = vunpack.c.h.bf16 %v871
  %v879 = vunpack.c.l.bf16 %v872
  %v880 = vunpack.c.h.bf16 %v872
  %v881 = vpack.c.bf16 %v867, %v867
  %v882 = vpack.c.bf16 %v868, %v868
  %v885 = vunpack.c.l.b16 %v881
  %v886 = vunpack.c.l.b16 %v882
  %v887 = vrot.slane %v885, 3
  %v888 = vrot.slane %v886, 2
  %v889 = vsel %vm380, %v888, %v887
  %v890 = vpack.c.b16 %v889, %v889
  %892 = vmatprep.subr.bf16.mxu0 %v192
  %893 = vmatpush1.bf16.msra.mxu0 %v191
  %894 = vmatprep.subr.bf16.mxu0 %v188
  %895 = vmatpush1.bf16.msra.mxu0 %v187
  %896 = vmatprep.subr.bf16.mxu0 %v184
  %897 = vmatpush1.bf16.msra.mxu0 %v183
  %898 = vmatprep.subr.bf16.mxu0 %v180
  %899 = vmatpush1.bf16.msra.mxu0 %v179
  %900 = vmatprep.subr.bf16.mxu0 %v176
  %901 = vmatpush1.bf16.msra.mxu0 %v175
  %902 = vmatprep.subr.bf16.mxu0 %v172
  %903 = vmatpush1.bf16.msra.mxu0 %v171
  %904 = vmatprep.subr.bf16.mxu0 %v168
  %905 = vmatpush1.bf16.msra.mxu0 %v167
  %906 = vmatprep.subr.bf16.mxu0 %v164
  %907 = vmatpush1.bf16.msra.mxu0 %v163
  %908 = vmatprep.subr.bf16.mxu0 0
  %909 = vmatpush2.bf16.msra.mxu0 0
  %910 = vmatprep.subr.bf16.mxu0 0
  %911 = vmatpush2.bf16.msra.mxu0 0
  %912 = vmatprep.subr.bf16.mxu0 0
  %913 = vmatpush2.bf16.msra.mxu0 0
  %914 = vmatprep.subr.bf16.mxu0 0
  %915 = vmatpush2.bf16.msra.mxu0 0
  %916 = vmatprep.subr.bf16.mxu0 0
  %917 = vmatpush2.bf16.msra.mxu0 0
  %918 = vmatprep.subr.bf16.mxu0 0
  %919 = vmatpush2.bf16.msra.mxu0 0
  %920 = vmatprep.subr.bf16.mxu0 0
  %921 = vmatpush2.bf16.msra.mxu0 0
  %922 = vmatprep.subr.bf16.mxu0 0
  %923 = vmatpush2.bf16.msra.mxu0 0
  %924 = vmatprep.mubr.bf16.mxu0 0
  %925 = vmatmul.mubr.bf16.gmra.mxu0 %v890
  %v926 = vpop.f32.mrf.mxu0
  %v927 = vadd.f32 0.0, %v926
  %v928 = vpop.f32.mrf.mxu0
  %v929 = vadd.f32 0.0, %v928
  %v930 = vpop.f32.mrf.mxu0
  %v931 = vpop.f32.mrf.mxu0
  %932 = vdwg.mxu0
  %933 = vmatprep.subr.bf16.mxu0 %v194
  %934 = vmatpush1.bf16.msra.mxu0 %v193
  %935 = vmatprep.subr.bf16.mxu0 %v190
  %936 = vmatpush1.bf16.msra.mxu0 %v189
  %937 = vmatprep.subr.bf16.mxu0 %v186
  %938 = vmatpush1.bf16.msra.mxu0 %v185
  %939 = vmatprep.subr.bf16.mxu0 %v182
  %940 = vmatpush1.bf16.msra.mxu0 %v181
  %941 = vmatprep.subr.bf16.mxu0 %v178
  %942 = vmatpush1.bf16.msra.mxu0 %v177
  %943 = vmatprep.subr.bf16.mxu0 %v174
  %944 = vmatpush1.bf16.msra.mxu0 %v173
  %945 = vmatprep.subr.bf16.mxu0 %v170
  %946 = vmatpush1.bf16.msra.mxu0 %v169
  %947 = vmatprep.subr.bf16.mxu0 %v166
  %948 = vmatpush1.bf16.msra.mxu0 %v165
  %949 = vmatprep.subr.bf16.mxu0 0
  %950 = vmatpush2.bf16.msra.mxu0 0
  %951 = vmatprep.subr.bf16.mxu0 0
  %952 = vmatpush2.bf16.msra.mxu0 0
  %953 = vmatprep.subr.bf16.mxu0 0
  %954 = vmatpush2.bf16.msra.mxu0 0
  %955 = vmatprep.subr.bf16.mxu0 0
  %956 = vmatpush2.bf16.msra.mxu0 0
  %957 = vmatprep.subr.bf16.mxu0 0
  %958 = vmatpush2.bf16.msra.mxu0 0
  %959 = vmatprep.subr.bf16.mxu0 0
  %960 = vmatpush2.bf16.msra.mxu0 0
  %961 = vmatprep.subr.bf16.mxu0 0
  %962 = vmatpush2.bf16.msra.mxu0 0
  %963 = vmatprep.subr.bf16.mxu0 0
  %964 = vmatpush2.bf16.msra.mxu0 0
  %965 = vmatprep.mubr.bf16.mxu0 0
  %966 = vmatmul.mubr.bf16.gmra.mxu0 %v890
  %v967 = vpop.f32.mrf.mxu0
  %v968 = vadd.f32 0.0, %v967
  %v969 = vpop.f32.mrf.mxu0
  %v970 = vadd.f32 0.0, %v969
  %v971 = vpop.f32.mrf.mxu0
  %v972 = vpop.f32.mrf.mxu0
  %973 = vdwg.mxu0
  %v978 = vrot.slane %v927, 4
  %v979 = vrot.slane %v929, 4
  %v980 = vrot.slane %v968, 4
  %v981 = vrot.slane %v970, 4
  %v982 = vrot.slane %v927, 5
  %v983 = vrot.slane %v929, 5
  %v984 = vrot.slane %v968, 5
  %v985 = vrot.slane %v970, 5
  %v994 = vadd.f32 %v873, %v978
  %v995 = vadd.f32 %v874, %v979
  %v996 = vadd.f32 %v875, %v980
  %v997 = vadd.f32 %v876, %v981
  %v998 = vadd.f32 %v877, %v982
  %v999 = vadd.f32 %v878, %v983
  %v1000 = vadd.f32 %v879, %v984
  %v1001 = vadd.f32 %v880, %v985
  %v1002 = vmul.f32 %v994, 0.5
  %v1003 = vmul.f32 %v998, 0.5
  %v1004 = vtanh.pop %v1002
  %v1005 = vtanh.pop %v1003
  %v1006 = vmul.f32 %v1004, 0.5
  %v1007 = vmul.f32 %v1005, 0.5
  %v1008 = vadd.f32 %v1006, 0.5
  %v1009 = vadd.f32 %v1007, 0.5
  %v1010 = vmul.f32 %v995, 0.5
  %v1011 = vmul.f32 %v999, 0.5
  %v1012 = vtanh.pop %v1010
  %v1013 = vtanh.pop %v1011
  %v1014 = vmul.f32 %v1012, 0.5
  %v1015 = vmul.f32 %v1013, 0.5
  %v1016 = vadd.f32 %v1014, 0.5
  %v1017 = vadd.f32 %v1015, 0.5
  %v1018 = vtanh.pop %v996
  %v1019 = vtanh.pop %v1000
  %v1020 = vmul.f32 %v997, 0.5
  %v1021 = vmul.f32 %v1001, 0.5
  %v1022 = vtanh.pop %v1020
  %v1023 = vtanh.pop %v1021
  %v1024 = vmul.f32 %v1022, 0.5
  %v1025 = vmul.f32 %v1023, 0.5
  %v1026 = vadd.f32 %v1024, 0.5
  %v1027 = vadd.f32 %v1025, 0.5
  %v1030 = vrot.slane %v863, 7
  %v1031 = vrot.slane %v864, 7
  %v1034 = vmul.f32 %v1016, %v1030
  %v1035 = vmul.f32 %v1017, %v1031
  %v1036 = vmul.f32 %v1008, %v1018
  %v1037 = vmul.f32 %v1009, %v1019
  %v1038 = vadd.f32 %v1034, %v1036
  %v1039 = vadd.f32 %v1035, %v1037
  %v1040 = vtanh.pop %v1038
  %v1041 = vtanh.pop %v1039
  %v1042 = vmul.f32 %v1026, %v1040
  %v1043 = vmul.f32 %v1027, %v1041
  %v1044 = vpack.c.bf16 %v1042, %v1042
  %v1045 = vpack.c.bf16 %v1043, %v1043
  %v1048 = vunpack.c.l.b16 %v1044
  %v1049 = vunpack.c.l.b16 %v1045
  %v1050 = vrot.slane %v1048, 4
  %v1051 = vrot.slane %v1049, 3
  %v1052 = vsel %vm380, %v1051, %v1050
  %v1053 = vpack.c.b16 %v1052, %v1052
  %1055 = vmatprep.subr.bf16.mxu0 %v192
  %1056 = vmatpush1.bf16.msra.mxu0 %v191
  %1057 = vmatprep.subr.bf16.mxu0 %v188
  %1058 = vmatpush1.bf16.msra.mxu0 %v187
  %1059 = vmatprep.subr.bf16.mxu0 %v184
  %1060 = vmatpush1.bf16.msra.mxu0 %v183
  %1061 = vmatprep.subr.bf16.mxu0 %v180
  %1062 = vmatpush1.bf16.msra.mxu0 %v179
  %1063 = vmatprep.subr.bf16.mxu0 %v176
  %1064 = vmatpush1.bf16.msra.mxu0 %v175
  %1065 = vmatprep.subr.bf16.mxu0 %v172
  %1066 = vmatpush1.bf16.msra.mxu0 %v171
  %1067 = vmatprep.subr.bf16.mxu0 %v168
  %1068 = vmatpush1.bf16.msra.mxu0 %v167
  %1069 = vmatprep.subr.bf16.mxu0 %v164
  %1070 = vmatpush1.bf16.msra.mxu0 %v163
  %1071 = vmatprep.subr.bf16.mxu0 0
  %1072 = vmatpush2.bf16.msra.mxu0 0
  %1073 = vmatprep.subr.bf16.mxu0 0
  %1074 = vmatpush2.bf16.msra.mxu0 0
  %1075 = vmatprep.subr.bf16.mxu0 0
  %1076 = vmatpush2.bf16.msra.mxu0 0
  %1077 = vmatprep.subr.bf16.mxu0 0
  %1078 = vmatpush2.bf16.msra.mxu0 0
  %1079 = vmatprep.subr.bf16.mxu0 0
  %1080 = vmatpush2.bf16.msra.mxu0 0
  %1081 = vmatprep.subr.bf16.mxu0 0
  %1082 = vmatpush2.bf16.msra.mxu0 0
  %1083 = vmatprep.subr.bf16.mxu0 0
  %1084 = vmatpush2.bf16.msra.mxu0 0
  %1085 = vmatprep.subr.bf16.mxu0 0
  %1086 = vmatpush2.bf16.msra.mxu0 0
  %1087 = vmatprep.mubr.bf16.mxu0 0
  %1088 = vmatmul.mubr.bf16.gmra.mxu0 %v1053
  %v1089 = vpop.f32.mrf.mxu0
  %v1090 = vadd.f32 0.0, %v1089
  %v1091 = vpop.f32.mrf.mxu0
  %v1092 = vadd.f32 0.0, %v1091
  %v1093 = vpop.f32.mrf.mxu0
  %v1094 = vpop.f32.mrf.mxu0
  %1095 = vdwg.mxu0
  %1096 = vmatprep.subr.bf16.mxu0 %v194
  %1097 = vmatpush1.bf16.msra.mxu0 %v193
  %1098 = vmatprep.subr.bf16.mxu0 %v190
  %1099 = vmatpush1.bf16.msra.mxu0 %v189
  %1100 = vmatprep.subr.bf16.mxu0 %v186
  %1101 = vmatpush1.bf16.msra.mxu0 %v185
  %1102 = vmatprep.subr.bf16.mxu0 %v182
  %1103 = vmatpush1.bf16.msra.mxu0 %v181
  %1104 = vmatprep.subr.bf16.mxu0 %v178
  %1105 = vmatpush1.bf16.msra.mxu0 %v177
  %1106 = vmatprep.subr.bf16.mxu0 %v174
  %1107 = vmatpush1.bf16.msra.mxu0 %v173
  %1108 = vmatprep.subr.bf16.mxu0 %v170
  %1109 = vmatpush1.bf16.msra.mxu0 %v169
  %1110 = vmatprep.subr.bf16.mxu0 %v166
  %1111 = vmatpush1.bf16.msra.mxu0 %v165
  %1112 = vmatprep.subr.bf16.mxu0 0
  %1113 = vmatpush2.bf16.msra.mxu0 0
  %1114 = vmatprep.subr.bf16.mxu0 0
  %1115 = vmatpush2.bf16.msra.mxu0 0
  %1116 = vmatprep.subr.bf16.mxu0 0
  %1117 = vmatpush2.bf16.msra.mxu0 0
  %1118 = vmatprep.subr.bf16.mxu0 0
  %1119 = vmatpush2.bf16.msra.mxu0 0
  %1120 = vmatprep.subr.bf16.mxu0 0
  %1121 = vmatpush2.bf16.msra.mxu0 0
  %1122 = vmatprep.subr.bf16.mxu0 0
  %1123 = vmatpush2.bf16.msra.mxu0 0
  %1124 = vmatprep.subr.bf16.mxu0 0
  %1125 = vmatpush2.bf16.msra.mxu0 0
  %1126 = vmatprep.subr.bf16.mxu0 0
  %1127 = vmatpush2.bf16.msra.mxu0 0
  %1128 = vmatprep.mubr.bf16.mxu0 0
  %1129 = vmatmul.mubr.bf16.gmra.mxu0 %v1053
  %v1130 = vpop.f32.mrf.mxu0
  %v1131 = vadd.f32 0.0, %v1130
  %v1132 = vpop.f32.mrf.mxu0
  %v1133 = vadd.f32 0.0, %v1132
  %v1134 = vpop.f32.mrf.mxu0
  %v1135 = vpop.f32.mrf.mxu0
  %1136 = vdwg.mxu0
  %v1141 = vrot.slane %v1090, 3
  %v1142 = vrot.slane %v1092, 3
  %v1143 = vrot.slane %v1131, 3
  %v1144 = vrot.slane %v1133, 3
  %v1145 = vrot.slane %v1090, 4
  %v1146 = vrot.slane %v1092, 4
  %v1147 = vrot.slane %v1131, 4
  %v1148 = vrot.slane %v1133, 4
  %v1157 = vadd.f32 %v873, %v1141
  %v1158 = vadd.f32 %v874, %v1142
  %v1159 = vadd.f32 %v875, %v1143
  %v1160 = vadd.f32 %v876, %v1144
  %v1161 = vadd.f32 %v877, %v1145
  %v1162 = vadd.f32 %v878, %v1146
  %v1163 = vadd.f32 %v879, %v1147
  %v1164 = vadd.f32 %v880, %v1148
  %v1165 = vmul.f32 %v1157, 0.5
  %v1166 = vmul.f32 %v1161, 0.5
  %v1167 = vtanh.pop %v1165
  %v1168 = vtanh.pop %v1166
  %v1169 = vmul.f32 %v1167, 0.5
  %v1170 = vmul.f32 %v1168, 0.5
  %v1171 = vadd.f32 %v1169, 0.5
  %v1172 = vadd.f32 %v1170, 0.5
  %v1173 = vmul.f32 %v1158, 0.5
  %v1174 = vmul.f32 %v1162, 0.5
  %v1175 = vtanh.pop %v1173
  %v1176 = vtanh.pop %v1174
  %v1177 = vmul.f32 %v1175, 0.5
  %v1178 = vmul.f32 %v1176, 0.5
  %v1179 = vadd.f32 %v1177, 0.5
  %v1180 = vadd.f32 %v1178, 0.5
  %v1181 = vtanh.pop %v1159
  %v1182 = vtanh.pop %v1163
  %v1183 = vmul.f32 %v1160, 0.5
  %v1184 = vmul.f32 %v1164, 0.5
  %v1185 = vtanh.pop %v1183
  %v1186 = vtanh.pop %v1184
  %v1187 = vmul.f32 %v1185, 0.5
  %v1188 = vmul.f32 %v1186, 0.5
  %v1189 = vadd.f32 %v1187, 0.5
  %v1190 = vadd.f32 %v1188, 0.5
  %v1193 = vrot.slane %v1038, 7
  %v1194 = vrot.slane %v1039, 7
  %v1197 = vmul.f32 %v1179, %v1193
  %v1198 = vmul.f32 %v1180, %v1194
  %v1199 = vmul.f32 %v1171, %v1181
  %v1200 = vmul.f32 %v1172, %v1182
  %v1201 = vadd.f32 %v1197, %v1199
  %v1202 = vadd.f32 %v1198, %v1200
  %v1203 = vtanh.pop %v1201
  %v1204 = vtanh.pop %v1202
  %v1205 = vmul.f32 %v1189, %v1203
  %v1206 = vmul.f32 %v1190, %v1204
  %v1207 = vld [vmem:[%s0] sm:$0x88]
  %v1208 = vld [vmem:[%s0 + $0x8] sm:$0x88]
  %v1209 = vld [vmem:[%s0 + $0x20] sm:$0x88]
  %v1210 = vld [vmem:[%s0 + $0x28] sm:$0x88]
  %v1211 = vunpack.c.l.bf16 %v1207
  %v1212 = vunpack.c.h.bf16 %v1207
  %v1213 = vunpack.c.l.bf16 %v1208
  %v1214 = vunpack.c.h.bf16 %v1208
  %v1215 = vunpack.c.l.bf16 %v1209
  %v1216 = vunpack.c.h.bf16 %v1209
  %v1217 = vunpack.c.l.bf16 %v1210
  %v1218 = vunpack.c.h.bf16 %v1210
  %v1219 = vpack.c.bf16 %v1205, %v1205
  %v1220 = vpack.c.bf16 %v1206, %v1206
  %v1223 = vunpack.c.l.b16 %v1219
  %v1224 = vunpack.c.l.b16 %v1220
  %v1225 = vrot.slane %v1223, 5
  %v1226 = vrot.slane %v1224, 4
  %v1227 = vsel %vm380, %v1226, %v1225
  %v1228 = vpack.c.b16 %v1227, %v1227
  %1230 = vmatprep.subr.bf16.mxu0 %v192
  %1231 = vmatpush1.bf16.msra.mxu0 %v191
  %1232 = vmatprep.subr.bf16.mxu0 %v188
  %1233 = vmatpush1.bf16.msra.mxu0 %v187
  %1234 = vmatprep.subr.bf16.mxu0 %v184
  %1235 = vmatpush1.bf16.msra.mxu0 %v183
  %1236 = vmatprep.subr.bf16.mxu0 %v180
  %1237 = vmatpush1.bf16.msra.mxu0 %v179
  %1238 = vmatprep.subr.bf16.mxu0 %v176
  %1239 = vmatpush1.bf16.msra.mxu0 %v175
  %1240 = vmatprep.subr.bf16.mxu0 %v172
  %1241 = vmatpush1.bf16.msra.mxu0 %v171
  %1242 = vmatprep.subr.bf16.mxu0 %v168
  %1243 = vmatpush1.bf16.msra.mxu0 %v167
  %1244 = vmatprep.subr.bf16.mxu0 %v164
  %1245 = vmatpush1.bf16.msra.mxu0 %v163
  %1246 = vmatprep.subr.bf16.mxu0 0
  %1247 = vmatpush2.bf16.msra.mxu0 0
  %1248 = vmatprep.subr.bf16.mxu0 0
  %1249 = vmatpush2.bf16.msra.mxu0 0
  %1250 = vmatprep.subr.bf16.mxu0 0
  %1251 = vmatpush2.bf16.msra.mxu0 0
  %1252 = vmatprep.subr.bf16.mxu0 0
  %1253 = vmatpush2.bf16.msra.mxu0 0
  %1254 = vmatprep.subr.bf16.mxu0 0
  %1255 = vmatpush2.bf16.msra.mxu0 0
  %1256 = vmatprep.subr.bf16.mxu0 0
  %1257 = vmatpush2.bf16.msra.mxu0 0
  %1258 = vmatprep.subr.bf16.mxu0 0
  %1259 = vmatpush2.bf16.msra.mxu0 0
  %1260 = vmatprep.subr.bf16.mxu0 0
  %1261 = vmatpush2.bf16.msra.mxu0 0
  %1262 = vmatprep.mubr.bf16.mxu0 0
  %1263 = vmatmul.mubr.bf16.gmra.mxu0 %v1228
  %v1264 = vpop.f32.mrf.mxu0
  %v1265 = vadd.f32 0.0, %v1264
  %v1266 = vpop.f32.mrf.mxu0
  %v1267 = vadd.f32 0.0, %v1266
  %v1268 = vpop.f32.mrf.mxu0
  %v1269 = vpop.f32.mrf.mxu0
  %1270 = vdwg.mxu0
  %1271 = vmatprep.subr.bf16.mxu0 %v194
  %1272 = vmatpush1.bf16.msra.mxu0 %v193
  %1273 = vmatprep.subr.bf16.mxu0 %v190
  %1274 = vmatpush1.bf16.msra.mxu0 %v189
  %1275 = vmatprep.subr.bf16.mxu0 %v186
  %1276 = vmatpush1.bf16.msra.mxu0 %v185
  %1277 = vmatprep.subr.bf16.mxu0 %v182
  %1278 = vmatpush1.bf16.msra.mxu0 %v181
  %1279 = vmatprep.subr.bf16.mxu0 %v178
  %1280 = vmatpush1.bf16.msra.mxu0 %v177
  %1281 = vmatprep.subr.bf16.mxu0 %v174
  %1282 = vmatpush1.bf16.msra.mxu0 %v173
  %1283 = vmatprep.subr.bf16.mxu0 %v170
  %1284 = vmatpush1.bf16.msra.mxu0 %v169
  %1285 = vmatprep.subr.bf16.mxu0 %v166
  %1286 = vmatpush1.bf16.msra.mxu0 %v165
  %1287 = vmatprep.subr.bf16.mxu0 0
  %1288 = vmatpush2.bf16.msra.mxu0 0
  %1289 = vmatprep.subr.bf16.mxu0 0
  %1290 = vmatpush2.bf16.msra.mxu0 0
  %1291 = vmatprep.subr.bf16.mxu0 0
  %1292 = vmatpush2.bf16.msra.mxu0 0
  %1293 = vmatprep.subr.bf16.mxu0 0
  %1294 = vmatpush2.bf16.msra.mxu0 0
  %1295 = vmatprep.subr.bf16.mxu0 0
  %1296 = vmatpush2.bf16.msra.mxu0 0
  %1297 = vmatprep.subr.bf16.mxu0 0
  %1298 = vmatpush2.bf16.msra.mxu0 0
  %1299 = vmatprep.subr.bf16.mxu0 0
  %1300 = vmatpush2.bf16.msra.mxu0 0
  %1301 = vmatprep.subr.bf16.mxu0 0
  %1302 = vmatpush2.bf16.msra.mxu0 0
  %1303 = vmatprep.mubr.bf16.mxu0 0
  %1304 = vmatmul.mubr.bf16.gmra.mxu0 %v1228
  %v1305 = vpop.f32.mrf.mxu0
  %v1306 = vadd.f32 0.0, %v1305
  %v1307 = vpop.f32.mrf.mxu0
  %v1308 = vadd.f32 0.0, %v1307
  %v1309 = vpop.f32.mrf.mxu0
  %v1310 = vpop.f32.mrf.mxu0
  %1311 = vdwg.mxu0
  %v1316 = vrot.slane %v1265, 2
  %v1317 = vrot.slane %v1267, 2
  %v1318 = vrot.slane %v1306, 2
  %v1319 = vrot.slane %v1308, 2
  %v1320 = vrot.slane %v1265, 3
  %v1321 = vrot.slane %v1267, 3
  %v1322 = vrot.slane %v1306, 3
  %v1323 = vrot.slane %v1308, 3
  %v1332 = vadd.f32 %v1211, %v1316
  %v1333 = vadd.f32 %v1212, %v1317
  %v1334 = vadd.f32 %v1213, %v1318
  %v1335 = vadd.f32 %v1214, %v1319
  %v1336 = vadd.f32 %v1215, %v1320
  %v1337 = vadd.f32 %v1216, %v1321
  %v1338 = vadd.f32 %v1217, %v1322
  %v1339 = vadd.f32 %v1218, %v1323
  %v1340 = vmul.f32 %v1332, 0.5
  %v1341 = vmul.f32 %v1336, 0.5
  %v1342 = vtanh.pop %v1340
  %v1343 = vtanh.pop %v1341
  %v1344 = vmul.f32 %v1342, 0.5
  %v1345 = vmul.f32 %v1343, 0.5
  %v1346 = vadd.f32 %v1344, 0.5
  %v1347 = vadd.f32 %v1345, 0.5
  %v1348 = vmul.f32 %v1333, 0.5
  %v1349 = vmul.f32 %v1337, 0.5
  %v1350 = vtanh.pop %v1348
  %v1351 = vtanh.pop %v1349
  %v1352 = vmul.f32 %v1350, 0.5
  %v1353 = vmul.f32 %v1351, 0.5
  %v1354 = vadd.f32 %v1352, 0.5
  %v1355 = vadd.f32 %v1353, 0.5
  %v1356 = vtanh.pop %v1334
  %v1357 = vtanh.pop %v1338
  %v1358 = vmul.f32 %v1335, 0.5
  %v1359 = vmul.f32 %v1339, 0.5
  %v1360 = vtanh.pop %v1358
  %v1361 = vtanh.pop %v1359
  %v1362 = vmul.f32 %v1360, 0.5
  %v1363 = vmul.f32 %v1361, 0.5
  %v1364 = vadd.f32 %v1362, 0.5
  %v1365 = vadd.f32 %v1363, 0.5
  %v1368 = vrot.slane %v1201, 7
  %v1369 = vrot.slane %v1202, 7
  %v1372 = vmul.f32 %v1354, %v1368
  %v1373 = vmul.f32 %v1355, %v1369
  %v1374 = vmul.f32 %v1346, %v1356
  %v1375 = vmul.f32 %v1347, %v1357
  %v1376 = vadd.f32 %v1372, %v1374
  %v1377 = vadd.f32 %v1373, %v1375
  %v1378 = vtanh.pop %v1376
  %v1379 = vtanh.pop %v1377
  %v1380 = vmul.f32 %v1364, %v1378
  %v1381 = vmul.f32 %v1365, %v1379
  %v1382 = vpack.c.bf16 %v1380, %v1380
  %v1383 = vpack.c.bf16 %v1381, %v1381
  %v1386 = vunpack.c.l.b16 %v1382
  %v1387 = vunpack.c.l.b16 %v1383
  %v1388 = vrot.slane %v1386, 6
  %v1389 = vrot.slane %v1387, 5
  %v1390 = vsel %vm380, %v1389, %v1388
  %v1391 = vpack.c.b16 %v1390, %v1390
  %1393 = vmatprep.subr.bf16.mxu0 %v192
  %1394 = vmatpush1.bf16.msra.mxu0 %v191
  %1395 = vmatprep.subr.bf16.mxu0 %v188
  %1396 = vmatpush1.bf16.msra.mxu0 %v187
  %1397 = vmatprep.subr.bf16.mxu0 %v184
  %1398 = vmatpush1.bf16.msra.mxu0 %v183
  %1399 = vmatprep.subr.bf16.mxu0 %v180
  %1400 = vmatpush1.bf16.msra.mxu0 %v179
  %1401 = vmatprep.subr.bf16.mxu0 %v176
  %1402 = vmatpush1.bf16.msra.mxu0 %v175
  %1403 = vmatprep.subr.bf16.mxu0 %v172
  %1404 = vmatpush1.bf16.msra.mxu0 %v171
  %1405 = vmatprep.subr.bf16.mxu0 %v168
  %1406 = vmatpush1.bf16.msra.mxu0 %v167
  %1407 = vmatprep.subr.bf16.mxu0 %v164
  %1408 = vmatpush1.bf16.msra.mxu0 %v163
  %1409 = vmatprep.subr.bf16.mxu0 0
  %1410 = vmatpush2.bf16.msra.mxu0 0
  %1411 = vmatprep.subr.bf16.mxu0 0
  %1412 = vmatpush2.bf16.msra.mxu0 0
  %1413 = vmatprep.subr.bf16.mxu0 0
  %1414 = vmatpush2.bf16.msra.mxu0 0
  %1415 = vmatprep.subr.bf16.mxu0 0
  %1416 = vmatpush2.bf16.msra.mxu0 0
  %1417 = vmatprep.subr.bf16.mxu0 0
  %1418 = vmatpush2.bf16.msra.mxu0 0
  %1419 = vmatprep.subr.bf16.mxu0 0
  %1420 = vmatpush2.bf16.msra.mxu0 0
  %1421 = vmatprep.subr.bf16.mxu0 0
  %1422 = vmatpush2.bf16.msra.mxu0 0
  %1423 = vmatprep.subr.bf16.mxu0 0
  %1424 = vmatpush2.bf16.msra.mxu0 0
  %1425 = vmatprep.mubr.bf16.mxu0 0
  %1426 = vmatmul.mubr.bf16.gmra.mxu0 %v1391
  %v1427 = vpop.f32.mrf.mxu0
  %v1428 = vadd.f32 0.0, %v1427
  %v1429 = vpop.f32.mrf.mxu0
  %v1430 = vadd.f32 0.0, %v1429
  %v1431 = vpop.f32.mrf.mxu0
  %v1432 = vpop.f32.mrf.mxu0
  %1433 = vdwg.mxu0
  %1434 = vmatprep.subr.bf16.mxu0 %v194
  %1435 = vmatpush1.bf16.msra.mxu0 %v193
  %1436 = vmatprep.subr.bf16.mxu0 %v190
  %1437 = vmatpush1.bf16.msra.mxu0 %v189
  %1438 = vmatprep.subr.bf16.mxu0 %v186
  %1439 = vmatpush1.bf16.msra.mxu0 %v185
  %1440 = vmatprep.subr.bf16.mxu0 %v182
  %1441 = vmatpush1.bf16.msra.mxu0 %v181
  %1442 = vmatprep.subr.bf16.mxu0 %v178
  %1443 = vmatpush1.bf16.msra.mxu0 %v177
  %1444 = vmatprep.subr.bf16.mxu0 %v174
  %1445 = vmatpush1.bf16.msra.mxu0 %v173
  %1446 = vmatprep.subr.bf16.mxu0 %v170
  %1447 = vmatpush1.bf16.msra.mxu0 %v169
  %1448 = vmatprep.subr.bf16.mxu0 %v166
  %1449 = vmatpush1.bf16.msra.mxu0 %v165
  %1450 = vmatprep.subr.bf16.mxu0 0
  %1451 = vmatpush2.bf16.msra.mxu0 0
  %1452 = vmatprep.subr.bf16.mxu0 0
  %1453 = vmatpush2.bf16.msra.mxu0 0
  %1454 = vmatprep.subr.bf16.mxu0 0
  %1455 = vmatpush2.bf16.msra.mxu0 0
  %1456 = vmatprep.subr.bf16.mxu0 0
  %1457 = vmatpush2.bf16.msra.mxu0 0
  %1458 = vmatprep.subr.bf16.mxu0 0
  %1459 = vmatpush2.bf16.msra.mxu0 0
  %1460 = vmatprep.subr.bf16.mxu0 0
  %1461 = vmatpush2.bf16.msra.mxu0 0
  %1462 = vmatprep.subr.bf16.mxu0 0
  %1463 = vmatpush2.bf16.msra.mxu0 0
  %1464 = vmatprep.subr.bf16.mxu0 0
  %1465 = vmatpush2.bf16.msra.mxu0 0
  %1466 = vmatprep.mubr.bf16.mxu0 0
  %1467 = vmatmul.mubr.bf16.gmra.mxu0 %v1391
  %v1468 = vpop.f32.mrf.mxu0
  %v1469 = vadd.f32 0.0, %v1468
  %v1470 = vpop.f32.mrf.mxu0
  %v1471 = vadd.f32 0.0, %v1470
  %v1472 = vpop.f32.mrf.mxu0
  %v1473 = vpop.f32.mrf.mxu0
  %1474 = vdwg.mxu0
  %v1479 = vrot.slane %v1428, 1
  %v1480 = vrot.slane %v1430, 1
  %v1481 = vrot.slane %v1469, 1
  %v1482 = vrot.slane %v1471, 1
  %v1483 = vrot.slane %v1428, 2
  %v1484 = vrot.slane %v1430, 2
  %v1485 = vrot.slane %v1469, 2
  %v1486 = vrot.slane %v1471, 2
  %v1495 = vadd.f32 %v1211, %v1479
  %v1496 = vadd.f32 %v1212, %v1480
  %v1497 = vadd.f32 %v1213, %v1481
  %v1498 = vadd.f32 %v1214, %v1482
  %v1499 = vadd.f32 %v1215, %v1483
  %v1500 = vadd.f32 %v1216, %v1484
  %v1501 = vadd.f32 %v1217, %v1485
  %v1502 = vadd.f32 %v1218, %v1486
  %v1503 = vmul.f32 %v1495, 0.5
  %v1504 = vmul.f32 %v1499, 0.5
  %v1505 = vtanh.pop %v1503
  %v1506 = vtanh.pop %v1504
  %v1507 = vmul.f32 %v1505, 0.5
  %v1508 = vmul.f32 %v1506, 0.5
  %v1509 = vadd.f32 %v1507, 0.5
  %v1510 = vadd.f32 %v1508, 0.5
  %v1511 = vmul.f32 %v1496, 0.5
  %v1512 = vmul.f32 %v1500, 0.5
  %v1513 = vtanh.pop %v1511
  %v1514 = vtanh.pop %v1512
  %v1515 = vmul.f32 %v1513, 0.5
  %v1516 = vmul.f32 %v1514, 0.5
  %v1517 = vadd.f32 %v1515, 0.5
  %v1518 = vadd.f32 %v1516, 0.5
  %v1519 = vtanh.pop %v1497
  %v1520 = vtanh.pop %v1501
  %v1521 = vmul.f32 %v1498, 0.5
  %v1522 = vmul.f32 %v1502, 0.5
  %v1523 = vtanh.pop %v1521
  %v1524 = vtanh.pop %v1522
  %v1525 = vmul.f32 %v1523, 0.5
  %v1526 = vmul.f32 %v1524, 0.5
  %v1527 = vadd.f32 %v1525, 0.5
  %v1528 = vadd.f32 %v1526, 0.5
  %v1531 = vrot.slane %v1376, 7
  %v1532 = vrot.slane %v1377, 7
  %v1535 = vmul.f32 %v1517, %v1531
  %v1536 = vmul.f32 %v1518, %v1532
  %v1537 = vmul.f32 %v1509, %v1519
  %v1538 = vmul.f32 %v1510, %v1520
  %v1539 = vadd.f32 %v1535, %v1537
  %v1540 = vadd.f32 %v1536, %v1538
  %v1541 = vtanh.pop %v1539
  %v1542 = vtanh.pop %v1540
  %v1543 = vmul.f32 %v1527, %v1541
  %v1544 = vmul.f32 %v1528, %v1542
  %v1545 = vld [vmem:[%s0 + $0x10] sm:$0x11]
  %v1546 = vld [vmem:[%s0 + $0x18] sm:$0x11]
  %v1547 = vld [vmem:[%s0 + $0x30] sm:$0x11]
  %v1548 = vld [vmem:[%s0 + $0x38] sm:$0x11]
  %v1549 = vunpack.c.l.bf16 %v1545
  %v1550 = vunpack.c.h.bf16 %v1545
  %v1551 = vunpack.c.l.bf16 %v1546
  %v1552 = vunpack.c.h.bf16 %v1546
  %v1553 = vunpack.c.l.bf16 %v1547
  %v1554 = vunpack.c.h.bf16 %v1547
  %v1555 = vunpack.c.l.bf16 %v1548
  %v1556 = vunpack.c.h.bf16 %v1548
  %v1557 = vpack.c.bf16 %v1543, %v1543
  %v1558 = vpack.c.bf16 %v1544, %v1544
  %v1561 = vunpack.c.l.b16 %v1557
  %v1562 = vunpack.c.l.b16 %v1558
  %v1563 = vrot.slane %v1561, 7
  %v1564 = vrot.slane %v1562, 6
  %v1565 = vsel %vm380, %v1564, %v1563
  %v1566 = vpack.c.b16 %v1565, %v1565
  %1568 = vmatprep.subr.bf16.mxu0 %v192
  %1569 = vmatpush1.bf16.msra.mxu0 %v191
  %1570 = vmatprep.subr.bf16.mxu0 %v188
  %1571 = vmatpush1.bf16.msra.mxu0 %v187
  %1572 = vmatprep.subr.bf16.mxu0 %v184
  %1573 = vmatpush1.bf16.msra.mxu0 %v183
  %1574 = vmatprep.subr.bf16.mxu0 %v180
  %1575 = vmatpush1.bf16.msra.mxu0 %v179
  %1576 = vmatprep.subr.bf16.mxu0 %v176
  %1577 = vmatpush1.bf16.msra.mxu0 %v175
  %1578 = vmatprep.subr.bf16.mxu0 %v172
  %1579 = vmatpush1.bf16.msra.mxu0 %v171
  %1580 = vmatprep.subr.bf16.mxu0 %v168
  %1581 = vmatpush1.bf16.msra.mxu0 %v167
  %1582 = vmatprep.subr.bf16.mxu0 %v164
  %1583 = vmatpush1.bf16.msra.mxu0 %v163
  %1584 = vmatprep.subr.bf16.mxu0 0
  %1585 = vmatpush2.bf16.msra.mxu0 0
  %1586 = vmatprep.subr.bf16.mxu0 0
  %1587 = vmatpush2.bf16.msra.mxu0 0
  %1588 = vmatprep.subr.bf16.mxu0 0
  %1589 = vmatpush2.bf16.msra.mxu0 0
  %1590 = vmatprep.subr.bf16.mxu0 0
  %1591 = vmatpush2.bf16.msra.mxu0 0
  %1592 = vmatprep.subr.bf16.mxu0 0
  %1593 = vmatpush2.bf16.msra.mxu0 0
  %1594 = vmatprep.subr.bf16.mxu0 0
  %1595 = vmatpush2.bf16.msra.mxu0 0
  %1596 = vmatprep.subr.bf16.mxu0 0
  %1597 = vmatpush2.bf16.msra.mxu0 0
  %1598 = vmatprep.subr.bf16.mxu0 0
  %1599 = vmatpush2.bf16.msra.mxu0 0
  %1600 = vmatprep.mubr.bf16.mxu0 0
  %1601 = vmatmul.mubr.bf16.gmra.mxu0 %v1566
  %v1602 = vpop.f32.mrf.mxu0
  %v1603 = vadd.f32 0.0, %v1602
  %v1604 = vpop.f32.mrf.mxu0
  %v1605 = vadd.f32 0.0, %v1604
  %v1606 = vpop.f32.mrf.mxu0
  %v1607 = vpop.f32.mrf.mxu0
  %1608 = vdwg.mxu0
  %1609 = vmatprep.subr.bf16.mxu0 %v194
  %1610 = vmatpush1.bf16.msra.mxu0 %v193
  %1611 = vmatprep.subr.bf16.mxu0 %v190
  %1612 = vmatpush1.bf16.msra.mxu0 %v189
  %1613 = vmatprep.subr.bf16.mxu0 %v186
  %1614 = vmatpush1.bf16.msra.mxu0 %v185
  %1615 = vmatprep.subr.bf16.mxu0 %v182
  %1616 = vmatpush1.bf16.msra.mxu0 %v181
  %1617 = vmatprep.subr.bf16.mxu0 %v178
  %1618 = vmatpush1.bf16.msra.mxu0 %v177
  %1619 = vmatprep.subr.bf16.mxu0 %v174
  %1620 = vmatpush1.bf16.msra.mxu0 %v173
  %1621 = vmatprep.subr.bf16.mxu0 %v170
  %1622 = vmatpush1.bf16.msra.mxu0 %v169
  %1623 = vmatprep.subr.bf16.mxu0 %v166
  %1624 = vmatpush1.bf16.msra.mxu0 %v165
  %1625 = vmatprep.subr.bf16.mxu0 0
  %1626 = vmatpush2.bf16.msra.mxu0 0
  %1627 = vmatprep.subr.bf16.mxu0 0
  %1628 = vmatpush2.bf16.msra.mxu0 0
  %1629 = vmatprep.subr.bf16.mxu0 0
  %1630 = vmatpush2.bf16.msra.mxu0 0
  %1631 = vmatprep.subr.bf16.mxu0 0
  %1632 = vmatpush2.bf16.msra.mxu0 0
  %1633 = vmatprep.subr.bf16.mxu0 0
  %1634 = vmatpush2.bf16.msra.mxu0 0
  %1635 = vmatprep.subr.bf16.mxu0 0
  %1636 = vmatpush2.bf16.msra.mxu0 0
  %1637 = vmatprep.subr.bf16.mxu0 0
  %1638 = vmatpush2.bf16.msra.mxu0 0
  %1639 = vmatprep.subr.bf16.mxu0 0
  %1640 = vmatpush2.bf16.msra.mxu0 0
  %1641 = vmatprep.mubr.bf16.mxu0 0
  %1642 = vmatmul.mubr.bf16.gmra.mxu0 %v1566
  %v1643 = vpop.f32.mrf.mxu0
  %v1644 = vadd.f32 0.0, %v1643
  %v1645 = vpop.f32.mrf.mxu0
  %v1646 = vadd.f32 0.0, %v1645
  %v1647 = vpop.f32.mrf.mxu0
  %v1648 = vpop.f32.mrf.mxu0
  %1649 = vdwg.mxu0
  %v1654 = vrot.slane %v1603, 1
  %v1655 = vrot.slane %v1605, 1
  %v1656 = vrot.slane %v1644, 1
  %v1657 = vrot.slane %v1646, 1
  %v1666 = vadd.f32 %v1549, %v1603
  %v1667 = vadd.f32 %v1550, %v1605
  %v1668 = vadd.f32 %v1551, %v1644
  %v1669 = vadd.f32 %v1552, %v1646
  %v1670 = vadd.f32 %v1553, %v1654
  %v1671 = vadd.f32 %v1554, %v1655
  %v1672 = vadd.f32 %v1555, %v1656
  %v1673 = vadd.f32 %v1556, %v1657
  %v1674 = vmul.f32 %v1666, 0.5
  %v1675 = vmul.f32 %v1670, 0.5
  %v1676 = vtanh.pop %v1674
  %v1677 = vtanh.pop %v1675
  %v1678 = vmul.f32 %v1676, 0.5
  %v1679 = vmul.f32 %v1677, 0.5
  %v1680 = vadd.f32 %v1678, 0.5
  %v1681 = vadd.f32 %v1679, 0.5
  %v1682 = vmul.f32 %v1667, 0.5
  %v1683 = vmul.f32 %v1671, 0.5
  %v1684 = vtanh.pop %v1682
  %v1685 = vtanh.pop %v1683
  %v1686 = vmul.f32 %v1684, 0.5
  %v1687 = vmul.f32 %v1685, 0.5
  %v1688 = vadd.f32 %v1686, 0.5
  %v1689 = vadd.f32 %v1687, 0.5
  %v1690 = vtanh.pop %v1668
  %v1691 = vtanh.pop %v1672
  %v1692 = vmul.f32 %v1669, 0.5
  %v1693 = vmul.f32 %v1673, 0.5
  %v1694 = vtanh.pop %v1692
  %v1695 = vtanh.pop %v1693
  %v1696 = vmul.f32 %v1694, 0.5
  %v1697 = vmul.f32 %v1695, 0.5
  %v1698 = vadd.f32 %v1696, 0.5
  %v1699 = vadd.f32 %v1697, 0.5
  %v1702 = vrot.slane %v1539, 7
  %v1703 = vrot.slane %v1540, 7
  %v1706 = vmul.f32 %v1688, %v1702
  %v1707 = vmul.f32 %v1689, %v1703
  %v1708 = vmul.f32 %v1680, %v1690
  %v1709 = vmul.f32 %v1681, %v1691
  %v1710 = vadd.f32 %v1706, %v1708
  %v1711 = vadd.f32 %v1707, %v1709
  %v1712 = vtanh.pop %v1710
  %v1713 = vtanh.pop %v1711
  %v1714 = vmul.f32 %v1698, %v1712
  %v1715 = vmul.f32 %v1699, %v1713
  %v1716 = vpack.c.bf16 %v1714, %v1714
  %v1717 = vpack.c.bf16 %v1715, %v1715
  %v1720 = vunpack.c.l.b16 %v1716
  %v1721 = vunpack.c.l.b16 %v1717
  %v1722 = vrot.slane %v1721, 7
  %v1723 = vsel %vm380, %v1722, %v1720
  %v1724 = vpack.c.b16 %v1723, %v1723
  %1726 = vmatprep.subr.bf16.mxu0 %v192
  %1727 = vmatpush1.bf16.msra.mxu0 %v191
  %1728 = vmatprep.subr.bf16.mxu0 %v188
  %1729 = vmatpush1.bf16.msra.mxu0 %v187
  %1730 = vmatprep.subr.bf16.mxu0 %v184
  %1731 = vmatpush1.bf16.msra.mxu0 %v183
  %1732 = vmatprep.subr.bf16.mxu0 %v180
  %1733 = vmatpush1.bf16.msra.mxu0 %v179
  %1734 = vmatprep.subr.bf16.mxu0 %v176
  %1735 = vmatpush1.bf16.msra.mxu0 %v175
  %1736 = vmatprep.subr.bf16.mxu0 %v172
  %1737 = vmatpush1.bf16.msra.mxu0 %v171
  %1738 = vmatprep.subr.bf16.mxu0 %v168
  %1739 = vmatpush1.bf16.msra.mxu0 %v167
  %1740 = vmatprep.subr.bf16.mxu0 %v164
  %1741 = vmatpush1.bf16.msra.mxu0 %v163
  %1742 = vmatprep.subr.bf16.mxu0 0
  %1743 = vmatpush2.bf16.msra.mxu0 0
  %1744 = vmatprep.subr.bf16.mxu0 0
  %1745 = vmatpush2.bf16.msra.mxu0 0
  %1746 = vmatprep.subr.bf16.mxu0 0
  %1747 = vmatpush2.bf16.msra.mxu0 0
  %1748 = vmatprep.subr.bf16.mxu0 0
  %1749 = vmatpush2.bf16.msra.mxu0 0
  %1750 = vmatprep.subr.bf16.mxu0 0
  %1751 = vmatpush2.bf16.msra.mxu0 0
  %1752 = vmatprep.subr.bf16.mxu0 0
  %1753 = vmatpush2.bf16.msra.mxu0 0
  %1754 = vmatprep.subr.bf16.mxu0 0
  %1755 = vmatpush2.bf16.msra.mxu0 0
  %1756 = vmatprep.subr.bf16.mxu0 0
  %1757 = vmatpush2.bf16.msra.mxu0 0
  %1758 = vmatprep.mubr.bf16.mxu0 0
  %1759 = vmatmul.mubr.bf16.gmra.mxu0 %v1724
  %v1760 = vpop.f32.mrf.mxu0
  %v1761 = vadd.f32 0.0, %v1760
  %v1762 = vpop.f32.mrf.mxu0
  %v1763 = vadd.f32 0.0, %v1762
  %v1764 = vpop.f32.mrf.mxu0
  %v1765 = vpop.f32.mrf.mxu0
  %1766 = vdwg.mxu0
  %1767 = vmatprep.subr.bf16.mxu0 %v194
  %1768 = vmatpush1.bf16.msra.mxu0 %v193
  %1769 = vmatprep.subr.bf16.mxu0 %v190
  %1770 = vmatpush1.bf16.msra.mxu0 %v189
  %1771 = vmatprep.subr.bf16.mxu0 %v186
  %1772 = vmatpush1.bf16.msra.mxu0 %v185
  %1773 = vmatprep.subr.bf16.mxu0 %v182
  %1774 = vmatpush1.bf16.msra.mxu0 %v181
  %1775 = vmatprep.subr.bf16.mxu0 %v178
  %1776 = vmatpush1.bf16.msra.mxu0 %v177
  %1777 = vmatprep.subr.bf16.mxu0 %v174
  %1778 = vmatpush1.bf16.msra.mxu0 %v173
  %1779 = vmatprep.subr.bf16.mxu0 %v170
  %1780 = vmatpush1.bf16.msra.mxu0 %v169
  %1781 = vmatprep.subr.bf16.mxu0 %v166
  %1782 = vmatpush1.bf16.msra.mxu0 %v165
  %1783 = vmatprep.subr.bf16.mxu0 0
  %1784 = vmatpush2.bf16.msra.mxu0 0
  %1785 = vmatprep.subr.bf16.mxu0 0
  %1786 = vmatpush2.bf16.msra.mxu0 0
  %1787 = vmatprep.subr.bf16.mxu0 0
  %1788 = vmatpush2.bf16.msra.mxu0 0
  %1789 = vmatprep.subr.bf16.mxu0 0
  %1790 = vmatpush2.bf16.msra.mxu0 0
  %1791 = vmatprep.subr.bf16.mxu0 0
  %1792 = vmatpush2.bf16.msra.mxu0 0
  %1793 = vmatprep.subr.bf16.mxu0 0
  %1794 = vmatpush2.bf16.msra.mxu0 0
  %1795 = vmatprep.subr.bf16.mxu0 0
  %1796 = vmatpush2.bf16.msra.mxu0 0
  %1797 = vmatprep.subr.bf16.mxu0 0
  %1798 = vmatpush2.bf16.msra.mxu0 0
  %1799 = vmatprep.mubr.bf16.mxu0 0
  %1800 = vmatmul.mubr.bf16.gmra.mxu0 %v1724
  %v1801 = vpop.f32.mrf.mxu0
  %v1802 = vadd.f32 0.0, %v1801
  %v1803 = vpop.f32.mrf.mxu0
  %v1804 = vadd.f32 0.0, %v1803
  %v1805 = vpop.f32.mrf.mxu0
  %v1806 = vpop.f32.mrf.mxu0
  %1807 = vdwg.mxu0
  %v1812 = vrot.slane %v1761, 7
  %v1813 = vrot.slane %v1763, 7
  %v1814 = vrot.slane %v1802, 7
  %v1815 = vrot.slane %v1804, 7
  %v1824 = vadd.f32 %v1549, %v1812
  %v1825 = vadd.f32 %v1550, %v1813
  %v1826 = vadd.f32 %v1551, %v1814
  %v1827 = vadd.f32 %v1552, %v1815
  %v1828 = vadd.f32 %v1553, %v1761
  %v1829 = vadd.f32 %v1554, %v1763
  %v1830 = vadd.f32 %v1555, %v1802
  %v1831 = vadd.f32 %v1556, %v1804
  %v1832 = vmul.f32 %v1824, 0.5
  %v1833 = vmul.f32 %v1828, 0.5
  %v1834 = vtanh.pop %v1832
  %v1835 = vtanh.pop %v1833
  %v1836 = vmul.f32 %v1834, 0.5
  %v1837 = vmul.f32 %v1835, 0.5
  %v1838 = vadd.f32 %v1836, 0.5
  %v1839 = vadd.f32 %v1837, 0.5
  %v1840 = vmul.f32 %v1825, 0.5
  %v1841 = vmul.f32 %v1829, 0.5
  %v1842 = vtanh.pop %v1840
  %v1843 = vtanh.pop %v1841
  %v1844 = vmul.f32 %v1842, 0.5
  %v1845 = vmul.f32 %v1843, 0.5
  %v1846 = vadd.f32 %v1844, 0.5
  %v1847 = vadd.f32 %v1845, 0.5
  %v1848 = vtanh.pop %v1826
  %v1849 = vtanh.pop %v1830
  %v1850 = vmul.f32 %v1827, 0.5
  %v1851 = vmul.f32 %v1831, 0.5
  %v1852 = vtanh.pop %v1850
  %v1853 = vtanh.pop %v1851
  %v1854 = vmul.f32 %v1852, 0.5
  %v1855 = vmul.f32 %v1853, 0.5
  %v1856 = vadd.f32 %v1854, 0.5
  %v1857 = vadd.f32 %v1855, 0.5
  %v1860 = vrot.slane %v1710, 7
  %v1861 = vrot.slane %v1711, 7
  %v1864 = vmul.f32 %v1846, %v1860
  %v1865 = vmul.f32 %v1847, %v1861
  %v1866 = vmul.f32 %v1838, %v1848
  %v1867 = vmul.f32 %v1839, %v1849
  %v1868 = vadd.f32 %v1864, %v1866
  %v1869 = vadd.f32 %v1865, %v1867
  %v1870 = vtanh.pop %v1868
  %v1871 = vtanh.pop %v1869
  %v1872 = vmul.f32 %v1856, %v1870
  %v1873 = vmul.f32 %v1857, %v1871
  %v1874 = vld [vmem:[%s0 + $0x10] sm:$0x22]
  %v1875 = vld [vmem:[%s0 + $0x18] sm:$0x22]
  %v1876 = vld [vmem:[%s0 + $0x30] sm:$0x22]
  %v1877 = vld [vmem:[%s0 + $0x38] sm:$0x22]
  %v1878 = vunpack.c.l.bf16 %v1874
  %v1879 = vunpack.c.h.bf16 %v1874
  %v1880 = vunpack.c.l.bf16 %v1875
  %v1881 = vunpack.c.h.bf16 %v1875
  %v1882 = vunpack.c.l.bf16 %v1876
  %v1883 = vunpack.c.h.bf16 %v1876
  %v1884 = vunpack.c.l.bf16 %v1877
  %v1885 = vunpack.c.h.bf16 %v1877
  %v1886 = vpack.c.bf16 %v1872, %v1872
  %v1887 = vpack.c.bf16 %v1873, %v1873
  %v1890 = vunpack.c.l.b16 %v1886
  %v1891 = vunpack.c.l.b16 %v1887
  %v1892 = vrot.slane %v1890, 1
  %v1893 = vsel %vm380, %v1891, %v1892
  %v1894 = vpack.c.b16 %v1893, %v1893
  %1896 = vmatprep.subr.bf16.mxu0 %v192
  %1897 = vmatpush1.bf16.msra.mxu0 %v191
  %1898 = vmatprep.subr.bf16.mxu0 %v188
  %1899 = vmatpush1.bf16.msra.mxu0 %v187
  %1900 = vmatprep.subr.bf16.mxu0 %v184
  %1901 = vmatpush1.bf16.msra.mxu0 %v183
  %1902 = vmatprep.subr.bf16.mxu0 %v180
  %1903 = vmatpush1.bf16.msra.mxu0 %v179
  %1904 = vmatprep.subr.bf16.mxu0 %v176
  %1905 = vmatpush1.bf16.msra.mxu0 %v175
  %1906 = vmatprep.subr.bf16.mxu0 %v172
  %1907 = vmatpush1.bf16.msra.mxu0 %v171
  %1908 = vmatprep.subr.bf16.mxu0 %v168
  %1909 = vmatpush1.bf16.msra.mxu0 %v167
  %1910 = vmatprep.subr.bf16.mxu0 %v164
  %1911 = vmatpush1.bf16.msra.mxu0 %v163
  %1912 = vmatprep.subr.bf16.mxu0 0
  %1913 = vmatpush2.bf16.msra.mxu0 0
  %1914 = vmatprep.subr.bf16.mxu0 0
  %1915 = vmatpush2.bf16.msra.mxu0 0
  %1916 = vmatprep.subr.bf16.mxu0 0
  %1917 = vmatpush2.bf16.msra.mxu0 0
  %1918 = vmatprep.subr.bf16.mxu0 0
  %1919 = vmatpush2.bf16.msra.mxu0 0
  %1920 = vmatprep.subr.bf16.mxu0 0
  %1921 = vmatpush2.bf16.msra.mxu0 0
  %1922 = vmatprep.subr.bf16.mxu0 0
  %1923 = vmatpush2.bf16.msra.mxu0 0
  %1924 = vmatprep.subr.bf16.mxu0 0
  %1925 = vmatpush2.bf16.msra.mxu0 0
  %1926 = vmatprep.subr.bf16.mxu0 0
  %1927 = vmatpush2.bf16.msra.mxu0 0
  %1928 = vmatprep.mubr.bf16.mxu0 0
  %1929 = vmatmul.mubr.bf16.gmra.mxu0 %v1894
  %v1930 = vpop.f32.mrf.mxu0
  %v1931 = vadd.f32 0.0, %v1930
  %v1932 = vpop.f32.mrf.mxu0
  %v1933 = vadd.f32 0.0, %v1932
  %v1934 = vpop.f32.mrf.mxu0
  %v1935 = vpop.f32.mrf.mxu0
  %1936 = vdwg.mxu0
  %1937 = vmatprep.subr.bf16.mxu0 %v194
  %1938 = vmatpush1.bf16.msra.mxu0 %v193
  %1939 = vmatprep.subr.bf16.mxu0 %v190
  %1940 = vmatpush1.bf16.msra.mxu0 %v189
  %1941 = vmatprep.subr.bf16.mxu0 %v186
  %1942 = vmatpush1.bf16.msra.mxu0 %v185
  %1943 = vmatprep.subr.bf16.mxu0 %v182
  %1944 = vmatpush1.bf16.msra.mxu0 %v181
  %1945 = vmatprep.subr.bf16.mxu0 %v178
  %1946 = vmatpush1.bf16.msra.mxu0 %v177
  %1947 = vmatprep.subr.bf16.mxu0 %v174
  %1948 = vmatpush1.bf16.msra.mxu0 %v173
  %1949 = vmatprep.subr.bf16.mxu0 %v170
  %1950 = vmatpush1.bf16.msra.mxu0 %v169
  %1951 = vmatprep.subr.bf16.mxu0 %v166
  %1952 = vmatpush1.bf16.msra.mxu0 %v165
  %1953 = vmatprep.subr.bf16.mxu0 0
  %1954 = vmatpush2.bf16.msra.mxu0 0
  %1955 = vmatprep.subr.bf16.mxu0 0
  %1956 = vmatpush2.bf16.msra.mxu0 0
  %1957 = vmatprep.subr.bf16.mxu0 0
  %1958 = vmatpush2.bf16.msra.mxu0 0
  %1959 = vmatprep.subr.bf16.mxu0 0
  %1960 = vmatpush2.bf16.msra.mxu0 0
  %1961 = vmatprep.subr.bf16.mxu0 0
  %1962 = vmatpush2.bf16.msra.mxu0 0
  %1963 = vmatprep.subr.bf16.mxu0 0
  %1964 = vmatpush2.bf16.msra.mxu0 0
  %1965 = vmatprep.subr.bf16.mxu0 0
  %1966 = vmatpush2.bf16.msra.mxu0 0
  %1967 = vmatprep.subr.bf16.mxu0 0
  %1968 = vmatpush2.bf16.msra.mxu0 0
  %1969 = vmatprep.mubr.bf16.mxu0 0
  %1970 = vmatmul.mubr.bf16.gmra.mxu0 %v1894
  %v1971 = vpop.f32.mrf.mxu0
  %v1972 = vadd.f32 0.0, %v1971
  %v1973 = vpop.f32.mrf.mxu0
  %v1974 = vadd.f32 0.0, %v1973
  %v1975 = vpop.f32.mrf.mxu0
  %v1976 = vpop.f32.mrf.mxu0
  %1977 = vdwg.mxu0
  %v1982 = vrot.slane %v1931, 6
  %v1983 = vrot.slane %v1933, 6
  %v1984 = vrot.slane %v1972, 6
  %v1985 = vrot.slane %v1974, 6
  %v1986 = vrot.slane %v1931, 7
  %v1987 = vrot.slane %v1933, 7
  %v1988 = vrot.slane %v1972, 7
  %v1989 = vrot.slane %v1974, 7
  %v1998 = vadd.f32 %v1878, %v1982
  %v1999 = vadd.f32 %v1879, %v1983
  %v2000 = vadd.f32 %v1880, %v1984
  %v2001 = vadd.f32 %v1881, %v1985
  %v2002 = vadd.f32 %v1882, %v1986
  %v2003 = vadd.f32 %v1883, %v1987
  %v2004 = vadd.f32 %v1884, %v1988
  %v2005 = vadd.f32 %v1885, %v1989
  %v2006 = vmul.f32 %v1998, 0.5
  %v2007 = vmul.f32 %v2002, 0.5
  %v2008 = vtanh.pop %v2006
  %v2009 = vtanh.pop %v2007
  %v2010 = vmul.f32 %v2008, 0.5
  %v2011 = vmul.f32 %v2009, 0.5
  %v2012 = vadd.f32 %v2010, 0.5
  %v2013 = vadd.f32 %v2011, 0.5
  %v2014 = vmul.f32 %v1999, 0.5
  %v2015 = vmul.f32 %v2003, 0.5
  %v2016 = vtanh.pop %v2014
  %v2017 = vtanh.pop %v2015
  %v2018 = vmul.f32 %v2016, 0.5
  %v2019 = vmul.f32 %v2017, 0.5
  %v2020 = vadd.f32 %v2018, 0.5
  %v2021 = vadd.f32 %v2019, 0.5
  %v2022 = vtanh.pop %v2000
  %v2023 = vtanh.pop %v2004
  %v2024 = vmul.f32 %v2001, 0.5
  %v2025 = vmul.f32 %v2005, 0.5
  %v2026 = vtanh.pop %v2024
  %v2027 = vtanh.pop %v2025
  %v2028 = vmul.f32 %v2026, 0.5
  %v2029 = vmul.f32 %v2027, 0.5
  %v2030 = vadd.f32 %v2028, 0.5
  %v2031 = vadd.f32 %v2029, 0.5
  %v2034 = vrot.slane %v1868, 7
  %v2035 = vrot.slane %v1869, 7
  %v2038 = vmul.f32 %v2020, %v2034
  %v2039 = vmul.f32 %v2021, %v2035
  %v2040 = vmul.f32 %v2012, %v2022
  %v2041 = vmul.f32 %v2013, %v2023
  %v2042 = vadd.f32 %v2038, %v2040
  %v2043 = vadd.f32 %v2039, %v2041
  %v2044 = vtanh.pop %v2042
  %v2045 = vtanh.pop %v2043
  %v2046 = vmul.f32 %v2030, %v2044
  %v2047 = vmul.f32 %v2031, %v2045
  %v2048 = vpack.c.bf16 %v2046, %v2046
  %v2049 = vpack.c.bf16 %v2047, %v2047
  %v2052 = vunpack.c.l.b16 %v2048
  %v2053 = vunpack.c.l.b16 %v2049
  %v2054 = vrot.slane %v2052, 2
  %v2055 = vrot.slane %v2053, 1
  %v2056 = vsel %vm380, %v2055, %v2054
  %v2057 = vpack.c.b16 %v2056, %v2056
  %2059 = vmatprep.subr.bf16.mxu0 %v192
  %2060 = vmatpush1.bf16.msra.mxu0 %v191
  %2061 = vmatprep.subr.bf16.mxu0 %v188
  %2062 = vmatpush1.bf16.msra.mxu0 %v187
  %2063 = vmatprep.subr.bf16.mxu0 %v184
  %2064 = vmatpush1.bf16.msra.mxu0 %v183
  %2065 = vmatprep.subr.bf16.mxu0 %v180
  %2066 = vmatpush1.bf16.msra.mxu0 %v179
  %2067 = vmatprep.subr.bf16.mxu0 %v176
  %2068 = vmatpush1.bf16.msra.mxu0 %v175
  %2069 = vmatprep.subr.bf16.mxu0 %v172
  %2070 = vmatpush1.bf16.msra.mxu0 %v171
  %2071 = vmatprep.subr.bf16.mxu0 %v168
  %2072 = vmatpush1.bf16.msra.mxu0 %v167
  %2073 = vmatprep.subr.bf16.mxu0 %v164
  %2074 = vmatpush1.bf16.msra.mxu0 %v163
  %2075 = vmatprep.subr.bf16.mxu0 0
  %2076 = vmatpush2.bf16.msra.mxu0 0
  %2077 = vmatprep.subr.bf16.mxu0 0
  %2078 = vmatpush2.bf16.msra.mxu0 0
  %2079 = vmatprep.subr.bf16.mxu0 0
  %2080 = vmatpush2.bf16.msra.mxu0 0
  %2081 = vmatprep.subr.bf16.mxu0 0
  %2082 = vmatpush2.bf16.msra.mxu0 0
  %2083 = vmatprep.subr.bf16.mxu0 0
  %2084 = vmatpush2.bf16.msra.mxu0 0
  %2085 = vmatprep.subr.bf16.mxu0 0
  %2086 = vmatpush2.bf16.msra.mxu0 0
  %2087 = vmatprep.subr.bf16.mxu0 0
  %2088 = vmatpush2.bf16.msra.mxu0 0
  %2089 = vmatprep.subr.bf16.mxu0 0
  %2090 = vmatpush2.bf16.msra.mxu0 0
  %2091 = vmatprep.mubr.bf16.mxu0 0
  %2092 = vmatmul.mubr.bf16.gmra.mxu0 %v2057
  %v2093 = vpop.f32.mrf.mxu0
  %v2094 = vadd.f32 0.0, %v2093
  %v2095 = vpop.f32.mrf.mxu0
  %v2096 = vadd.f32 0.0, %v2095
  %v2097 = vpop.f32.mrf.mxu0
  %v2098 = vpop.f32.mrf.mxu0
  %2099 = vdwg.mxu0
  %2100 = vmatprep.subr.bf16.mxu0 %v194
  %2101 = vmatpush1.bf16.msra.mxu0 %v193
  %2102 = vmatprep.subr.bf16.mxu0 %v190
  %2103 = vmatpush1.bf16.msra.mxu0 %v189
  %2104 = vmatprep.subr.bf16.mxu0 %v186
  %2105 = vmatpush1.bf16.msra.mxu0 %v185
  %2106 = vmatprep.subr.bf16.mxu0 %v182
  %2107 = vmatpush1.bf16.msra.mxu0 %v181
  %2108 = vmatprep.subr.bf16.mxu0 %v178
  %2109 = vmatpush1.bf16.msra.mxu0 %v177
  %2110 = vmatprep.subr.bf16.mxu0 %v174
  %2111 = vmatpush1.bf16.msra.mxu0 %v173
  %2112 = vmatprep.subr.bf16.mxu0 %v170
  %2113 = vmatpush1.bf16.msra.mxu0 %v169
  %2114 = vmatprep.subr.bf16.mxu0 %v166
  %2115 = vmatpush1.bf16.msra.mxu0 %v165
  %2116 = vmatprep.subr.bf16.mxu0 0
  %2117 = vmatpush2.bf16.msra.mxu0 0
  %2118 = vmatprep.subr.bf16.mxu0 0
  %2119 = vmatpush2.bf16.msra.mxu0 0
  %2120 = vmatprep.subr.bf16.mxu0 0
  %2121 = vmatpush2.bf16.msra.mxu0 0
  %2122 = vmatprep.subr.bf16.mxu0 0
  %2123 = vmatpush2.bf16.msra.mxu0 0
  %2124 = vmatprep.subr.bf16.mxu0 0
  %2125 = vmatpush2.bf16.msra.mxu0 0
  %2126 = vmatprep.subr.bf16.mxu0 0
  %2127 = vmatpush2.bf16.msra.mxu0 0
  %2128 = vmatprep.subr.bf16.mxu0 0
  %2129 = vmatpush2.bf16.msra.mxu0 0
  %2130 = vmatprep.subr.bf16.mxu0 0
  %2131 = vmatpush2.bf16.msra.mxu0 0
  %2132 = vmatprep.mubr.bf16.mxu0 0
  %2133 = vmatmul.mubr.bf16.gmra.mxu0 %v2057
  %v2134 = vpop.f32.mrf.mxu0
  %v2135 = vadd.f32 0.0, %v2134
  %v2136 = vpop.f32.mrf.mxu0
  %v2137 = vadd.f32 0.0, %v2136
  %v2138 = vpop.f32.mrf.mxu0
  %v2139 = vpop.f32.mrf.mxu0
  %2140 = vdwg.mxu0
  %v2145 = vrot.slane %v2094, 5
  %v2146 = vrot.slane %v2096, 5
  %v2147 = vrot.slane %v2135, 5
  %v2148 = vrot.slane %v2137, 5
  %v2149 = vrot.slane %v2094, 6
  %v2150 = vrot.slane %v2096, 6
  %v2151 = vrot.slane %v2135, 6
  %v2152 = vrot.slane %v2137, 6
  %v2161 = vadd.f32 %v1878, %v2145
  %v2162 = vadd.f32 %v1879, %v2146
  %v2163 = vadd.f32 %v1880, %v2147
  %v2164 = vadd.f32 %v1881, %v2148
  %v2165 = vadd.f32 %v1882, %v2149
  %v2166 = vadd.f32 %v1883, %v2150
  %v2167 = vadd.f32 %v1884, %v2151
  %v2168 = vadd.f32 %v1885, %v2152
  %v2169 = vmul.f32 %v2161, 0.5
  %v2170 = vmul.f32 %v2165, 0.5
  %v2171 = vtanh.pop %v2169
  %v2172 = vtanh.pop %v2170
  %v2173 = vmul.f32 %v2171, 0.5
  %v2174 = vmul.f32 %v2172, 0.5
  %v2175 = vadd.f32 %v2173, 0.5
  %v2176 = vadd.f32 %v2174, 0.5
  %v2177 = vmul.f32 %v2162, 0.5
  %v2178 = vmul.f32 %v2166, 0.5
  %v2179 = vtanh.pop %v2177
  %v2180 = vtanh.pop %v2178
  %v2181 = vmul.f32 %v2179, 0.5
  %v2182 = vmul.f32 %v2180, 0.5
  %v2183 = vadd.f32 %v2181, 0.5
  %v2184 = vadd.f32 %v2182, 0.5
  %v2185 = vtanh.pop %v2163
  %v2186 = vtanh.pop %v2167
  %v2187 = vmul.f32 %v2164, 0.5
  %v2188 = vmul.f32 %v2168, 0.5
  %v2189 = vtanh.pop %v2187
  %v2190 = vtanh.pop %v2188
  %v2191 = vmul.f32 %v2189, 0.5
  %v2192 = vmul.f32 %v2190, 0.5
  %v2193 = vadd.f32 %v2191, 0.5
  %v2194 = vadd.f32 %v2192, 0.5
  %v2197 = vrot.slane %v2042, 7
  %v2198 = vrot.slane %v2043, 7
  %v2201 = vmul.f32 %v2183, %v2197
  %v2202 = vmul.f32 %v2184, %v2198
  %v2203 = vmul.f32 %v2175, %v2185
  %v2204 = vmul.f32 %v2176, %v2186
  %v2205 = vadd.f32 %v2201, %v2203
  %v2206 = vadd.f32 %v2202, %v2204
  %v2207 = vtanh.pop %v2205
  %v2208 = vtanh.pop %v2206
  %v2209 = vmul.f32 %v2193, %v2207
  %v2210 = vmul.f32 %v2194, %v2208
  %v2211 = vld [vmem:[%s0 + $0x10] sm:$0x44]
  %v2212 = vld [vmem:[%s0 + $0x18] sm:$0x44]
  %v2213 = vld [vmem:[%s0 + $0x30] sm:$0x44]
  %v2214 = vld [vmem:[%s0 + $0x38] sm:$0x44]
  %v2215 = vunpack.c.l.bf16 %v2211
  %v2216 = vunpack.c.h.bf16 %v2211
  %v2217 = vunpack.c.l.bf16 %v2212
  %v2218 = vunpack.c.h.bf16 %v2212
  %v2219 = vunpack.c.l.bf16 %v2213
  %v2220 = vunpack.c.h.bf16 %v2213
  %v2221 = vunpack.c.l.bf16 %v2214
  %v2222 = vunpack.c.h.bf16 %v2214
  %v2223 = vpack.c.bf16 %v2209, %v2209
  %v2224 = vpack.c.bf16 %v2210, %v2210
  %v2227 = vunpack.c.l.b16 %v2223
  %v2228 = vunpack.c.l.b16 %v2224
  %v2229 = vrot.slane %v2227, 3
  %v2230 = vrot.slane %v2228, 2
  %v2231 = vsel %vm380, %v2230, %v2229
  %v2232 = vpack.c.b16 %v2231, %v2231
  %2234 = vmatprep.subr.bf16.mxu0 %v192
  %2235 = vmatpush1.bf16.msra.mxu0 %v191
  %2236 = vmatprep.subr.bf16.mxu0 %v188
  %2237 = vmatpush1.bf16.msra.mxu0 %v187
  %2238 = vmatprep.subr.bf16.mxu0 %v184
  %2239 = vmatpush1.bf16.msra.mxu0 %v183
  %2240 = vmatprep.subr.bf16.mxu0 %v180
  %2241 = vmatpush1.bf16.msra.mxu0 %v179
  %2242 = vmatprep.subr.bf16.mxu0 %v176
  %2243 = vmatpush1.bf16.msra.mxu0 %v175
  %2244 = vmatprep.subr.bf16.mxu0 %v172
  %2245 = vmatpush1.bf16.msra.mxu0 %v171
  %2246 = vmatprep.subr.bf16.mxu0 %v168
  %2247 = vmatpush1.bf16.msra.mxu0 %v167
  %2248 = vmatprep.subr.bf16.mxu0 %v164
  %2249 = vmatpush1.bf16.msra.mxu0 %v163
  %2250 = vmatprep.subr.bf16.mxu0 0
  %2251 = vmatpush2.bf16.msra.mxu0 0
  %2252 = vmatprep.subr.bf16.mxu0 0
  %2253 = vmatpush2.bf16.msra.mxu0 0
  %2254 = vmatprep.subr.bf16.mxu0 0
  %2255 = vmatpush2.bf16.msra.mxu0 0
  %2256 = vmatprep.subr.bf16.mxu0 0
  %2257 = vmatpush2.bf16.msra.mxu0 0
  %2258 = vmatprep.subr.bf16.mxu0 0
  %2259 = vmatpush2.bf16.msra.mxu0 0
  %2260 = vmatprep.subr.bf16.mxu0 0
  %2261 = vmatpush2.bf16.msra.mxu0 0
  %2262 = vmatprep.subr.bf16.mxu0 0
  %2263 = vmatpush2.bf16.msra.mxu0 0
  %2264 = vmatprep.subr.bf16.mxu0 0
  %2265 = vmatpush2.bf16.msra.mxu0 0
  %2266 = vmatprep.mubr.bf16.mxu0 0
  %2267 = vmatmul.mubr.bf16.gmra.mxu0 %v2232
  %v2268 = vpop.f32.mrf.mxu0
  %v2269 = vadd.f32 0.0, %v2268
  %v2270 = vpop.f32.mrf.mxu0
  %v2271 = vadd.f32 0.0, %v2270
  %v2272 = vpop.f32.mrf.mxu0
  %v2273 = vpop.f32.mrf.mxu0
  %2274 = vdwg.mxu0
  %2275 = vmatprep.subr.bf16.mxu0 %v194
  %2276 = vmatpush1.bf16.msra.mxu0 %v193
  %2277 = vmatprep.subr.bf16.mxu0 %v190
  %2278 = vmatpush1.bf16.msra.mxu0 %v189
  %2279 = vmatprep.subr.bf16.mxu0 %v186
  %2280 = vmatpush1.bf16.msra.mxu0 %v185
  %2281 = vmatprep.subr.bf16.mxu0 %v182
  %2282 = vmatpush1.bf16.msra.mxu0 %v181
  %2283 = vmatprep.subr.bf16.mxu0 %v178
  %2284 = vmatpush1.bf16.msra.mxu0 %v177
  %2285 = vmatprep.subr.bf16.mxu0 %v174
  %2286 = vmatpush1.bf16.msra.mxu0 %v173
  %2287 = vmatprep.subr.bf16.mxu0 %v170
  %2288 = vmatpush1.bf16.msra.mxu0 %v169
  %2289 = vmatprep.subr.bf16.mxu0 %v166
  %2290 = vmatpush1.bf16.msra.mxu0 %v165
  %2291 = vmatprep.subr.bf16.mxu0 0
  %2292 = vmatpush2.bf16.msra.mxu0 0
  %2293 = vmatprep.subr.bf16.mxu0 0
  %2294 = vmatpush2.bf16.msra.mxu0 0
  %2295 = vmatprep.subr.bf16.mxu0 0
  %2296 = vmatpush2.bf16.msra.mxu0 0
  %2297 = vmatprep.subr.bf16.mxu0 0
  %2298 = vmatpush2.bf16.msra.mxu0 0
  %2299 = vmatprep.subr.bf16.mxu0 0
  %2300 = vmatpush2.bf16.msra.mxu0 0
  %2301 = vmatprep.subr.bf16.mxu0 0
  %2302 = vmatpush2.bf16.msra.mxu0 0
  %2303 = vmatprep.subr.bf16.mxu0 0
  %2304 = vmatpush2.bf16.msra.mxu0 0
  %2305 = vmatprep.subr.bf16.mxu0 0
  %2306 = vmatpush2.bf16.msra.mxu0 0
  %2307 = vmatprep.mubr.bf16.mxu0 0
  %2308 = vmatmul.mubr.bf16.gmra.mxu0 %v2232
  %v2309 = vpop.f32.mrf.mxu0
  %v2310 = vadd.f32 0.0, %v2309
  %v2311 = vpop.f32.mrf.mxu0
  %v2312 = vadd.f32 0.0, %v2311
  %v2313 = vpop.f32.mrf.mxu0
  %v2314 = vpop.f32.mrf.mxu0
  %2315 = vdwg.mxu0
  %v2320 = vrot.slane %v2269, 4
  %v2321 = vrot.slane %v2271, 4
  %v2322 = vrot.slane %v2310, 4
  %v2323 = vrot.slane %v2312, 4
  %v2324 = vrot.slane %v2269, 5
  %v2325 = vrot.slane %v2271, 5
  %v2326 = vrot.slane %v2310, 5
  %v2327 = vrot.slane %v2312, 5
  %v2336 = vadd.f32 %v2215, %v2320
  %v2337 = vadd.f32 %v2216, %v2321
  %v2338 = vadd.f32 %v2217, %v2322
  %v2339 = vadd.f32 %v2218, %v2323
  %v2340 = vadd.f32 %v2219, %v2324
  %v2341 = vadd.f32 %v2220, %v2325
  %v2342 = vadd.f32 %v2221, %v2326
  %v2343 = vadd.f32 %v2222, %v2327
  %v2344 = vmul.f32 %v2336, 0.5
  %v2345 = vmul.f32 %v2340, 0.5
  %v2346 = vtanh.pop %v2344
  %v2347 = vtanh.pop %v2345
  %v2348 = vmul.f32 %v2346, 0.5
  %v2349 = vmul.f32 %v2347, 0.5
  %v2350 = vadd.f32 %v2348, 0.5
  %v2351 = vadd.f32 %v2349, 0.5
  %v2352 = vmul.f32 %v2337, 0.5
  %v2353 = vmul.f32 %v2341, 0.5
  %v2354 = vtanh.pop %v2352
  %v2355 = vtanh.pop %v2353
  %v2356 = vmul.f32 %v2354, 0.5
  %v2357 = vmul.f32 %v2355, 0.5
  %v2358 = vadd.f32 %v2356, 0.5
  %v2359 = vadd.f32 %v2357, 0.5
  %v2360 = vtanh.pop %v2338
  %v2361 = vtanh.pop %v2342
  %v2362 = vmul.f32 %v2339, 0.5
  %v2363 = vmul.f32 %v2343, 0.5
  %v2364 = vtanh.pop %v2362
  %v2365 = vtanh.pop %v2363
  %v2366 = vmul.f32 %v2364, 0.5
  %v2367 = vmul.f32 %v2365, 0.5
  %v2368 = vadd.f32 %v2366, 0.5
  %v2369 = vadd.f32 %v2367, 0.5
  %v2372 = vrot.slane %v2205, 7
  %v2373 = vrot.slane %v2206, 7
  %v2376 = vmul.f32 %v2358, %v2372
  %v2377 = vmul.f32 %v2359, %v2373
  %v2378 = vmul.f32 %v2350, %v2360
  %v2379 = vmul.f32 %v2351, %v2361
  %v2380 = vadd.f32 %v2376, %v2378
  %v2381 = vadd.f32 %v2377, %v2379
  %v2382 = vtanh.pop %v2380
  %v2383 = vtanh.pop %v2381
  %v2384 = vmul.f32 %v2368, %v2382
  %v2385 = vmul.f32 %v2369, %v2383
  %v2386 = vpack.c.bf16 %v2384, %v2384
  %v2387 = vpack.c.bf16 %v2385, %v2385
  %v2390 = vunpack.c.l.b16 %v2386
  %v2391 = vunpack.c.l.b16 %v2387
  %v2392 = vrot.slane %v2390, 4
  %v2393 = vrot.slane %v2391, 3
  %v2394 = vsel %vm380, %v2393, %v2392
  %v2395 = vpack.c.b16 %v2394, %v2394
  %2397 = vmatprep.subr.bf16.mxu0 %v192
  %2398 = vmatpush1.bf16.msra.mxu0 %v191
  %2399 = vmatprep.subr.bf16.mxu0 %v188
  %2400 = vmatpush1.bf16.msra.mxu0 %v187
  %2401 = vmatprep.subr.bf16.mxu0 %v184
  %2402 = vmatpush1.bf16.msra.mxu0 %v183
  %2403 = vmatprep.subr.bf16.mxu0 %v180
  %2404 = vmatpush1.bf16.msra.mxu0 %v179
  %2405 = vmatprep.subr.bf16.mxu0 %v176
  %2406 = vmatpush1.bf16.msra.mxu0 %v175
  %2407 = vmatprep.subr.bf16.mxu0 %v172
  %2408 = vmatpush1.bf16.msra.mxu0 %v171
  %2409 = vmatprep.subr.bf16.mxu0 %v168
  %2410 = vmatpush1.bf16.msra.mxu0 %v167
  %2411 = vmatprep.subr.bf16.mxu0 %v164
  %2412 = vmatpush1.bf16.msra.mxu0 %v163
  %2413 = vmatprep.subr.bf16.mxu0 0
  %2414 = vmatpush2.bf16.msra.mxu0 0
  %2415 = vmatprep.subr.bf16.mxu0 0
  %2416 = vmatpush2.bf16.msra.mxu0 0
  %2417 = vmatprep.subr.bf16.mxu0 0
  %2418 = vmatpush2.bf16.msra.mxu0 0
  %2419 = vmatprep.subr.bf16.mxu0 0
  %2420 = vmatpush2.bf16.msra.mxu0 0
  %2421 = vmatprep.subr.bf16.mxu0 0
  %2422 = vmatpush2.bf16.msra.mxu0 0
  %2423 = vmatprep.subr.bf16.mxu0 0
  %2424 = vmatpush2.bf16.msra.mxu0 0
  %2425 = vmatprep.subr.bf16.mxu0 0
  %2426 = vmatpush2.bf16.msra.mxu0 0
  %2427 = vmatprep.subr.bf16.mxu0 0
  %2428 = vmatpush2.bf16.msra.mxu0 0
  %2429 = vmatprep.mubr.bf16.mxu0 0
  %2430 = vmatmul.mubr.bf16.gmra.mxu0 %v2395
  %v2431 = vpop.f32.mrf.mxu0
  %v2432 = vadd.f32 0.0, %v2431
  %v2433 = vpop.f32.mrf.mxu0
  %v2434 = vadd.f32 0.0, %v2433
  %v2435 = vpop.f32.mrf.mxu0
  %v2436 = vpop.f32.mrf.mxu0
  %2437 = vdwg.mxu0
  %2438 = vmatprep.subr.bf16.mxu0 %v194
  %2439 = vmatpush1.bf16.msra.mxu0 %v193
  %2440 = vmatprep.subr.bf16.mxu0 %v190
  %2441 = vmatpush1.bf16.msra.mxu0 %v189
  %2442 = vmatprep.subr.bf16.mxu0 %v186
  %2443 = vmatpush1.bf16.msra.mxu0 %v185
  %2444 = vmatprep.subr.bf16.mxu0 %v182
  %2445 = vmatpush1.bf16.msra.mxu0 %v181
  %2446 = vmatprep.subr.bf16.mxu0 %v178
  %2447 = vmatpush1.bf16.msra.mxu0 %v177
  %2448 = vmatprep.subr.bf16.mxu0 %v174
  %2449 = vmatpush1.bf16.msra.mxu0 %v173
  %2450 = vmatprep.subr.bf16.mxu0 %v170
  %2451 = vmatpush1.bf16.msra.mxu0 %v169
  %2452 = vmatprep.subr.bf16.mxu0 %v166
  %2453 = vmatpush1.bf16.msra.mxu0 %v165
  %2454 = vmatprep.subr.bf16.mxu0 0
  %2455 = vmatpush2.bf16.msra.mxu0 0
  %2456 = vmatprep.subr.bf16.mxu0 0
  %2457 = vmatpush2.bf16.msra.mxu0 0
  %2458 = vmatprep.subr.bf16.mxu0 0
  %2459 = vmatpush2.bf16.msra.mxu0 0
  %2460 = vmatprep.subr.bf16.mxu0 0
  %2461 = vmatpush2.bf16.msra.mxu0 0
  %2462 = vmatprep.subr.bf16.mxu0 0
  %2463 = vmatpush2.bf16.msra.mxu0 0
  %2464 = vmatprep.subr.bf16.mxu0 0
  %2465 = vmatpush2.bf16.msra.mxu0 0
  %2466 = vmatprep.subr.bf16.mxu0 0
  %2467 = vmatpush2.bf16.msra.mxu0 0
  %2468 = vmatprep.subr.bf16.mxu0 0
  %2469 = vmatpush2.bf16.msra.mxu0 0
  %2470 = vmatprep.mubr.bf16.mxu0 0
  %2471 = vmatmul.mubr.bf16.gmra.mxu0 %v2395
  %v2472 = vpop.f32.mrf.mxu0
  %v2473 = vadd.f32 0.0, %v2472
  %v2474 = vpop.f32.mrf.mxu0
  %v2475 = vadd.f32 0.0, %v2474
  %v2476 = vpop.f32.mrf.mxu0
  %v2477 = vpop.f32.mrf.mxu0
  %2478 = vdwg.mxu0
  %v2483 = vrot.slane %v2432, 3
  %v2484 = vrot.slane %v2434, 3
  %v2485 = vrot.slane %v2473, 3
  %v2486 = vrot.slane %v2475, 3
  %v2487 = vrot.slane %v2432, 4
  %v2488 = vrot.slane %v2434, 4
  %v2489 = vrot.slane %v2473, 4
  %v2490 = vrot.slane %v2475, 4
  %v2499 = vadd.f32 %v2215, %v2483
  %v2500 = vadd.f32 %v2216, %v2484
  %v2501 = vadd.f32 %v2217, %v2485
  %v2502 = vadd.f32 %v2218, %v2486
  %v2503 = vadd.f32 %v2219, %v2487
  %v2504 = vadd.f32 %v2220, %v2488
  %v2505 = vadd.f32 %v2221, %v2489
  %v2506 = vadd.f32 %v2222, %v2490
  %v2507 = vmul.f32 %v2499, 0.5
  %v2508 = vmul.f32 %v2503, 0.5
  %v2509 = vtanh.pop %v2507
  %v2510 = vtanh.pop %v2508
  %v2511 = vmul.f32 %v2509, 0.5
  %v2512 = vmul.f32 %v2510, 0.5
  %v2513 = vadd.f32 %v2511, 0.5
  %v2514 = vadd.f32 %v2512, 0.5
  %v2515 = vmul.f32 %v2500, 0.5
  %v2516 = vmul.f32 %v2504, 0.5
  %v2517 = vtanh.pop %v2515
  %v2518 = vtanh.pop %v2516
  %v2519 = vmul.f32 %v2517, 0.5
  %v2520 = vmul.f32 %v2518, 0.5
  %v2521 = vadd.f32 %v2519, 0.5
  %v2522 = vadd.f32 %v2520, 0.5
  %v2523 = vtanh.pop %v2501
  %v2524 = vtanh.pop %v2505
  %v2525 = vmul.f32 %v2502, 0.5
  %v2526 = vmul.f32 %v2506, 0.5
  %v2527 = vtanh.pop %v2525
  %v2528 = vtanh.pop %v2526
  %v2529 = vmul.f32 %v2527, 0.5
  %v2530 = vmul.f32 %v2528, 0.5
  %v2531 = vadd.f32 %v2529, 0.5
  %v2532 = vadd.f32 %v2530, 0.5
  %v2535 = vrot.slane %v2380, 7
  %v2536 = vrot.slane %v2381, 7
  %v2539 = vmul.f32 %v2521, %v2535
  %v2540 = vmul.f32 %v2522, %v2536
  %v2541 = vmul.f32 %v2513, %v2523
  %v2542 = vmul.f32 %v2514, %v2524
  %v2543 = vadd.f32 %v2539, %v2541
  %v2544 = vadd.f32 %v2540, %v2542
  %v2545 = vtanh.pop %v2543
  %v2546 = vtanh.pop %v2544
  %v2547 = vmul.f32 %v2531, %v2545
  %v2548 = vmul.f32 %v2532, %v2546
  %v2549 = vld [vmem:[%s0 + $0x10] sm:$0x88]
  %v2550 = vld [vmem:[%s0 + $0x18] sm:$0x88]
  %v2551 = vld [vmem:[%s0 + $0x30] sm:$0x88]
  %v2552 = vld [vmem:[%s0 + $0x38] sm:$0x88]
  %v2553 = vunpack.c.l.bf16 %v2549
  %v2554 = vunpack.c.h.bf16 %v2549
  %v2555 = vunpack.c.l.bf16 %v2550
  %v2556 = vunpack.c.h.bf16 %v2550
  %v2557 = vunpack.c.l.bf16 %v2551
  %v2558 = vunpack.c.h.bf16 %v2551
  %v2559 = vunpack.c.l.bf16 %v2552
  %v2560 = vunpack.c.h.bf16 %v2552
  %v2561 = vpack.c.bf16 %v2547, %v2547
  %v2562 = vpack.c.bf16 %v2548, %v2548
  %v2565 = vunpack.c.l.b16 %v2561
  %v2566 = vunpack.c.l.b16 %v2562
  %v2567 = vrot.slane %v2565, 5
  %v2568 = vrot.slane %v2566, 4
  %v2569 = vsel %vm380, %v2568, %v2567
  %v2570 = vpack.c.b16 %v2569, %v2569
  %2572 = vmatprep.subr.bf16.mxu0 %v192
  %2573 = vmatpush1.bf16.msra.mxu0 %v191
  %2574 = vmatprep.subr.bf16.mxu0 %v188
  %2575 = vmatpush1.bf16.msra.mxu0 %v187
  %2576 = vmatprep.subr.bf16.mxu0 %v184
  %2577 = vmatpush1.bf16.msra.mxu0 %v183
  %2578 = vmatprep.subr.bf16.mxu0 %v180
  %2579 = vmatpush1.bf16.msra.mxu0 %v179
  %2580 = vmatprep.subr.bf16.mxu0 %v176
  %2581 = vmatpush1.bf16.msra.mxu0 %v175
  %2582 = vmatprep.subr.bf16.mxu0 %v172
  %2583 = vmatpush1.bf16.msra.mxu0 %v171
  %2584 = vmatprep.subr.bf16.mxu0 %v168
  %2585 = vmatpush1.bf16.msra.mxu0 %v167
  %2586 = vmatprep.subr.bf16.mxu0 %v164
  %2587 = vmatpush1.bf16.msra.mxu0 %v163
  %2588 = vmatprep.subr.bf16.mxu0 0
  %2589 = vmatpush2.bf16.msra.mxu0 0
  %2590 = vmatprep.subr.bf16.mxu0 0
  %2591 = vmatpush2.bf16.msra.mxu0 0
  %2592 = vmatprep.subr.bf16.mxu0 0
  %2593 = vmatpush2.bf16.msra.mxu0 0
  %2594 = vmatprep.subr.bf16.mxu0 0
  %2595 = vmatpush2.bf16.msra.mxu0 0
  %2596 = vmatprep.subr.bf16.mxu0 0
  %2597 = vmatpush2.bf16.msra.mxu0 0
  %2598 = vmatprep.subr.bf16.mxu0 0
  %2599 = vmatpush2.bf16.msra.mxu0 0
  %2600 = vmatprep.subr.bf16.mxu0 0
  %2601 = vmatpush2.bf16.msra.mxu0 0
  %2602 = vmatprep.subr.bf16.mxu0 0
  %2603 = vmatpush2.bf16.msra.mxu0 0
  %2604 = vmatprep.mubr.bf16.mxu0 0
  %2605 = vmatmul.mubr.bf16.gmra.mxu0 %v2570
  %v2606 = vpop.f32.mrf.mxu0
  %v2607 = vadd.f32 0.0, %v2606
  %v2608 = vpop.f32.mrf.mxu0
  %v2609 = vadd.f32 0.0, %v2608
  %v2610 = vpop.f32.mrf.mxu0
  %v2611 = vpop.f32.mrf.mxu0
  %2612 = vdwg.mxu0
  %2613 = vmatprep.subr.bf16.mxu0 %v194
  %2614 = vmatpush1.bf16.msra.mxu0 %v193
  %2615 = vmatprep.subr.bf16.mxu0 %v190
  %2616 = vmatpush1.bf16.msra.mxu0 %v189
  %2617 = vmatprep.subr.bf16.mxu0 %v186
  %2618 = vmatpush1.bf16.msra.mxu0 %v185
  %2619 = vmatprep.subr.bf16.mxu0 %v182
  %2620 = vmatpush1.bf16.msra.mxu0 %v181
  %2621 = vmatprep.subr.bf16.mxu0 %v178
  %2622 = vmatpush1.bf16.msra.mxu0 %v177
  %2623 = vmatprep.subr.bf16.mxu0 %v174
  %2624 = vmatpush1.bf16.msra.mxu0 %v173
  %2625 = vmatprep.subr.bf16.mxu0 %v170
  %2626 = vmatpush1.bf16.msra.mxu0 %v169
  %2627 = vmatprep.subr.bf16.mxu0 %v166
  %2628 = vmatpush1.bf16.msra.mxu0 %v165
  %2629 = vmatprep.subr.bf16.mxu0 0
  %2630 = vmatpush2.bf16.msra.mxu0 0
  %2631 = vmatprep.subr.bf16.mxu0 0
  %2632 = vmatpush2.bf16.msra.mxu0 0
  %2633 = vmatprep.subr.bf16.mxu0 0
  %2634 = vmatpush2.bf16.msra.mxu0 0
  %2635 = vmatprep.subr.bf16.mxu0 0
  %2636 = vmatpush2.bf16.msra.mxu0 0
  %2637 = vmatprep.subr.bf16.mxu0 0
  %2638 = vmatpush2.bf16.msra.mxu0 0
  %2639 = vmatprep.subr.bf16.mxu0 0
  %2640 = vmatpush2.bf16.msra.mxu0 0
  %2641 = vmatprep.subr.bf16.mxu0 0
  %2642 = vmatpush2.bf16.msra.mxu0 0
  %2643 = vmatprep.subr.bf16.mxu0 0
  %2644 = vmatpush2.bf16.msra.mxu0 0
  %2645 = vmatprep.mubr.bf16.mxu0 0
  %2646 = vmatmul.mubr.bf16.gmra.mxu0 %v2570
  %v2647 = vpop.f32.mrf.mxu0
  %v2648 = vadd.f32 0.0, %v2647
  %v2649 = vpop.f32.mrf.mxu0
  %v2650 = vadd.f32 0.0, %v2649
  %v2651 = vpop.f32.mrf.mxu0
  %v2652 = vpop.f32.mrf.mxu0
  %2653 = vdwg.mxu0
  %v2658 = vrot.slane %v2607, 2
  %v2659 = vrot.slane %v2609, 2
  %v2660 = vrot.slane %v2648, 2
  %v2661 = vrot.slane %v2650, 2
  %v2662 = vrot.slane %v2607, 3
  %v2663 = vrot.slane %v2609, 3
  %v2664 = vrot.slane %v2648, 3
  %v2665 = vrot.slane %v2650, 3
  %v2674 = vadd.f32 %v2553, %v2658
  %v2675 = vadd.f32 %v2554, %v2659
  %v2676 = vadd.f32 %v2555, %v2660
  %v2677 = vadd.f32 %v2556, %v2661
  %v2678 = vadd.f32 %v2557, %v2662
  %v2679 = vadd.f32 %v2558, %v2663
  %v2680 = vadd.f32 %v2559, %v2664
  %v2681 = vadd.f32 %v2560, %v2665
  %v2682 = vmul.f32 %v2674, 0.5
  %v2683 = vmul.f32 %v2678, 0.5
  %v2684 = vtanh.pop %v2682
  %v2685 = vtanh.pop %v2683
  %v2686 = vmul.f32 %v2684, 0.5
  %v2687 = vmul.f32 %v2685, 0.5
  %v2688 = vadd.f32 %v2686, 0.5
  %v2689 = vadd.f32 %v2687, 0.5
  %v2690 = vmul.f32 %v2675, 0.5
  %v2691 = vmul.f32 %v2679, 0.5
  %v2692 = vtanh.pop %v2690
  %v2693 = vtanh.pop %v2691
  %v2694 = vmul.f32 %v2692, 0.5
  %v2695 = vmul.f32 %v2693, 0.5
  %v2696 = vadd.f32 %v2694, 0.5
  %v2697 = vadd.f32 %v2695, 0.5
  %v2698 = vtanh.pop %v2676
  %v2699 = vtanh.pop %v2680
  %v2700 = vmul.f32 %v2677, 0.5
  %v2701 = vmul.f32 %v2681, 0.5
  %v2702 = vtanh.pop %v2700
  %v2703 = vtanh.pop %v2701
  %v2704 = vmul.f32 %v2702, 0.5
  %v2705 = vmul.f32 %v2703, 0.5
  %v2706 = vadd.f32 %v2704, 0.5
  %v2707 = vadd.f32 %v2705, 0.5
  %v2710 = vrot.slane %v2543, 7
  %v2711 = vrot.slane %v2544, 7
  %v2714 = vmul.f32 %v2696, %v2710
  %v2715 = vmul.f32 %v2697, %v2711
  %v2716 = vmul.f32 %v2688, %v2698
  %v2717 = vmul.f32 %v2689, %v2699
  %v2718 = vadd.f32 %v2714, %v2716
  %v2719 = vadd.f32 %v2715, %v2717
  %v2720 = vtanh.pop %v2718
  %v2721 = vtanh.pop %v2719
  %v2722 = vmul.f32 %v2706, %v2720
  %v2723 = vmul.f32 %v2707, %v2721
  %v2724 = vpack.c.bf16 %v2722, %v2722
  %v2725 = vpack.c.bf16 %v2723, %v2723
  %v2728 = vunpack.c.l.b16 %v2724
  %v2729 = vunpack.c.l.b16 %v2725
  %v2730 = vrot.slane %v2728, 6
  %v2731 = vrot.slane %v2729, 5
  %v2732 = vsel %vm380, %v2731, %v2730
  %v2733 = vpack.c.b16 %v2732, %v2732
  %2735 = vmatprep.subr.bf16.mxu0 %v192
  %2736 = vmatpush1.bf16.msra.mxu0 %v191
  %2737 = vmatprep.subr.bf16.mxu0 %v188
  %2738 = vmatpush1.bf16.msra.mxu0 %v187
  %2739 = vmatprep.subr.bf16.mxu0 %v184
  %2740 = vmatpush1.bf16.msra.mxu0 %v183
  %2741 = vmatprep.subr.bf16.mxu0 %v180
  %2742 = vmatpush1.bf16.msra.mxu0 %v179
  %2743 = vmatprep.subr.bf16.mxu0 %v176
  %2744 = vmatpush1.bf16.msra.mxu0 %v175
  %2745 = vmatprep.subr.bf16.mxu0 %v172
  %2746 = vmatpush1.bf16.msra.mxu0 %v171
  %2747 = vmatprep.subr.bf16.mxu0 %v168
  %2748 = vmatpush1.bf16.msra.mxu0 %v167
  %2749 = vmatprep.subr.bf16.mxu0 %v164
  %2750 = vmatpush1.bf16.msra.mxu0 %v163
  %2751 = vmatprep.subr.bf16.mxu0 0
  %2752 = vmatpush2.bf16.msra.mxu0 0
  %2753 = vmatprep.subr.bf16.mxu0 0
  %2754 = vmatpush2.bf16.msra.mxu0 0
  %2755 = vmatprep.subr.bf16.mxu0 0
  %2756 = vmatpush2.bf16.msra.mxu0 0
  %2757 = vmatprep.subr.bf16.mxu0 0
  %2758 = vmatpush2.bf16.msra.mxu0 0
  %2759 = vmatprep.subr.bf16.mxu0 0
  %2760 = vmatpush2.bf16.msra.mxu0 0
  %2761 = vmatprep.subr.bf16.mxu0 0
  %2762 = vmatpush2.bf16.msra.mxu0 0
  %2763 = vmatprep.subr.bf16.mxu0 0
  %2764 = vmatpush2.bf16.msra.mxu0 0
  %2765 = vmatprep.subr.bf16.mxu0 0
  %2766 = vmatpush2.bf16.msra.mxu0 0
  %2767 = vmatprep.mubr.bf16.mxu0 0
  %2768 = vmatmul.mubr.bf16.gmra.mxu0 %v2733
  %v2769 = vpop.f32.mrf.mxu0
  %v2770 = vadd.f32 0.0, %v2769
  %v2771 = vpop.f32.mrf.mxu0
  %v2772 = vadd.f32 0.0, %v2771
  %v2773 = vpop.f32.mrf.mxu0
  %v2774 = vpop.f32.mrf.mxu0
  %2775 = vdwg.mxu0
  %2776 = vmatprep.subr.bf16.mxu0 %v194
  %2777 = vmatpush1.bf16.msra.mxu0 %v193
  %2778 = vmatprep.subr.bf16.mxu0 %v190
  %2779 = vmatpush1.bf16.msra.mxu0 %v189
  %2780 = vmatprep.subr.bf16.mxu0 %v186
  %2781 = vmatpush1.bf16.msra.mxu0 %v185
  %2782 = vmatprep.subr.bf16.mxu0 %v182
  %2783 = vmatpush1.bf16.msra.mxu0 %v181
  %2784 = vmatprep.subr.bf16.mxu0 %v178
  %2785 = vmatpush1.bf16.msra.mxu0 %v177
  %2786 = vmatprep.subr.bf16.mxu0 %v174
  %2787 = vmatpush1.bf16.msra.mxu0 %v173
  %2788 = vmatprep.subr.bf16.mxu0 %v170
  %2789 = vmatpush1.bf16.msra.mxu0 %v169
  %2790 = vmatprep.subr.bf16.mxu0 %v166
  %2791 = vmatpush1.bf16.msra.mxu0 %v165
  %2792 = vmatprep.subr.bf16.mxu0 0
  %2793 = vmatpush2.bf16.msra.mxu0 0
  %2794 = vmatprep.subr.bf16.mxu0 0
  %2795 = vmatpush2.bf16.msra.mxu0 0
  %2796 = vmatprep.subr.bf16.mxu0 0
  %2797 = vmatpush2.bf16.msra.mxu0 0
  %2798 = vmatprep.subr.bf16.mxu0 0
  %2799 = vmatpush2.bf16.msra.mxu0 0
  %2800 = vmatprep.subr.bf16.mxu0 0
  %2801 = vmatpush2.bf16.msra.mxu0 0
  %2802 = vmatprep.subr.bf16.mxu0 0
  %2803 = vmatpush2.bf16.msra.mxu0 0
  %2804 = vmatprep.subr.bf16.mxu0 0
  %2805 = vmatpush2.bf16.msra.mxu0 0
  %2806 = vmatprep.subr.bf16.mxu0 0
  %2807 = vmatpush2.bf16.msra.mxu0 0
  %2808 = vmatprep.mubr.bf16.mxu0 0
  %2809 = vmatmul.mubr.bf16.gmra.mxu0 %v2733
  %v2810 = vpop.f32.mrf.mxu0
  %v2811 = vadd.f32 0.0, %v2810
  %v2812 = vpop.f32.mrf.mxu0
  %v2813 = vadd.f32 0.0, %v2812
  %v2814 = vpop.f32.mrf.mxu0
  %v2815 = vpop.f32.mrf.mxu0
  %2816 = vdwg.mxu0
  %v2821 = vrot.slane %v2770, 1
  %v2822 = vrot.slane %v2772, 1
  %v2823 = vrot.slane %v2811, 1
  %v2824 = vrot.slane %v2813, 1
  %v2825 = vrot.slane %v2770, 2
  %v2826 = vrot.slane %v2772, 2
  %v2827 = vrot.slane %v2811, 2
  %v2828 = vrot.slane %v2813, 2
  %v2837 = vadd.f32 %v2553, %v2821
  %v2838 = vadd.f32 %v2554, %v2822
  %v2839 = vadd.f32 %v2555, %v2823
  %v2840 = vadd.f32 %v2556, %v2824
  %v2841 = vadd.f32 %v2557, %v2825
  %v2842 = vadd.f32 %v2558, %v2826
  %v2843 = vadd.f32 %v2559, %v2827
  %v2844 = vadd.f32 %v2560, %v2828
  %v2845 = vmul.f32 %v2837, 0.5
  %v2846 = vmul.f32 %v2841, 0.5
  %v2847 = vtanh.pop %v2845
  %v2848 = vtanh.pop %v2846
  %v2849 = vmul.f32 %v2847, 0.5
  %v2850 = vmul.f32 %v2848, 0.5
  %v2851 = vadd.f32 %v2849, 0.5
  %v2852 = vadd.f32 %v2850, 0.5
  %v2853 = vmul.f32 %v2838, 0.5
  %v2854 = vmul.f32 %v2842, 0.5
  %v2855 = vtanh.pop %v2853
  %v2856 = vtanh.pop %v2854
  %v2857 = vmul.f32 %v2855, 0.5
  %v2858 = vmul.f32 %v2856, 0.5
  %v2859 = vadd.f32 %v2857, 0.5
  %v2860 = vadd.f32 %v2858, 0.5
  %v2861 = vtanh.pop %v2839
  %v2862 = vtanh.pop %v2843
  %v2863 = vmul.f32 %v2840, 0.5
  %v2864 = vmul.f32 %v2844, 0.5
  %v2865 = vtanh.pop %v2863
  %v2866 = vtanh.pop %v2864
  %v2867 = vmul.f32 %v2865, 0.5
  %v2868 = vmul.f32 %v2866, 0.5
  %v2869 = vadd.f32 %v2867, 0.5
  %v2870 = vadd.f32 %v2868, 0.5
  %v2873 = vrot.slane %v2718, 7
  %v2874 = vrot.slane %v2719, 7
  %v2877 = vmul.f32 %v2859, %v2873
  %v2878 = vmul.f32 %v2860, %v2874
  %v2879 = vmul.f32 %v2851, %v2861
  %v2880 = vmul.f32 %v2852, %v2862
  %v2881 = vadd.f32 %v2877, %v2879
  %v2882 = vadd.f32 %v2878, %v2880
  %v2883 = vtanh.pop %v2881
  %v2884 = vtanh.pop %v2882
  %v2885 = vmul.f32 %v2869, %v2883
  %v2886 = vmul.f32 %v2870, %v2884
  // Predicated region
  $region14: #{protein_lstm_layer.1} parent=0 // pred_check
    %p2887 = pneg %p14
  $region15: #{protein_lstm_layer.1} parent=0 // pred_check_branch
    %2889 = sbr.rel (%p2887) target = $region17
  $region16: #{protein_lstm_layer.1} parent=0 // pred_region
    %v2892 = vrot.slane %v2882, 7
    %2895 = vst [vmem:[%s3 - $0x7] sm:$0x80] %v2881
    %2896 = vst [vmem:[%s3 + $0x1] sm:$0x1] %v2892
  $region17: #{protein_lstm_layer.1} parent=0 // pred_fallthru
    _
  %vm2897 = vcmask 1040384
  %v2898 = vsel %vm2897, %v371, %v530
  %v2899 = vsel %vm2897, %v372, %v531
  %vm2900 = vcmask 1041408
  %v2901 = vsel %vm2900, %v2898, %v704
  %v2902 = vsel %vm2900, %v2899, %v705
  %vm2903 = vcmask 1042432
  %v2904 = vsel %vm2903, %v2901, %v867
  %v2905 = vsel %vm2903, %v2902, %v868
  %vm2906 = vcmask 1043456
  %v2907 = vsel %vm2906, %v2904, %v1042
  %v2908 = vsel %vm2906, %v2905, %v1043
  %vm2909 = vcmask 1044480
  %v2910 = vsel %vm2909, %v2907, %v1205
  %v2911 = vsel %vm2909, %v2908, %v1206
  %vm2912 = vcmask 1045504
  %v2913 = vsel %vm2912, %v2910, %v1380
  %v2914 = vsel %vm2912, %v2911, %v1381
  %vm2915 = vcmask 1046528
  %v2916 = vsel %vm2915, %v2913, %v1543
  %v2917 = vsel %vm2915, %v2914, %v1544
  %v2918 = vsel %vm2897, %v1714, %v1872
  %v2919 = vsel %vm2897, %v1715, %v1873
  %v2920 = vsel %vm2900, %v2918, %v2046
  %v2921 = vsel %vm2900, %v2919, %v2047
  %v2922 = vsel %vm2903, %v2920, %v2209
  %v2923 = vsel %vm2903, %v2921, %v2210
  %v2924 = vsel %vm2906, %v2922, %v2384
  %v2925 = vsel %vm2906, %v2923, %v2385
  %v2926 = vsel %vm2909, %v2924, %v2547
  %v2927 = vsel %vm2909, %v2925, %v2548
  %v2928 = vsel %vm2912, %v2926, %v2722
  %v2929 = vsel %vm2912, %v2927, %v2723
  %v2930 = vsel %vm2915, %v2928, %v2885
  %v2931 = vsel %vm2915, %v2929, %v2886
  %2932 = vst [vmem:[%s2] sm:$0xff] %v2916
  %2933 = vst [vmem:[%s2 + $0x8] sm:$0xff] %v2930
  %2934 = vst [vmem:[%s2 + $0x10] sm:$0xff] %v2917
  %2935 = vst [vmem:[%s2 + $0x18] sm:$0xff] %v2931
  %v2938 = vrot.slane %v2886, 7
  %2941 = vst [vmem:[#allocation2 - $0x7] sm:$0x80] %v2885
  %2942 = vst [vmem:[#allocation2 + $0x1] sm:$0x1] %v2938
  %v2945 = vrot.slane %v2882, 7
  %2948 = vst [vmem:[#allocation3 - $0x7] sm:$0x80] %v2881
  %2949 = vst [vmem:[#allocation3 + $0x1] sm:$0x1] %v2945
  // Predicated region
  $region18: #{protein_lstm_layer.1} parent=0 // pred_check
    _
  $region19: #{protein_lstm_layer.1} parent=0 // pred_check_branch
    %2951 = sbr.rel (0) target = $region21
  $region20: #{protein_lstm_layer.1} parent=0 // pred_region
    _
  $region21: #{protein_lstm_layer.1} parent=0 // pred_fallthru
    _
  // Predicated region
  $region22: #{protein_lstm_layer.1} parent=0 // pred_check
    _
  $region23: #{protein_lstm_layer.1} parent=0 // pred_check_branch
    %2953 = sbr.rel (0) target = $region25
  $region24: #{protein_lstm_layer.1} parent=0 // pred_region
    _
  $region25: #{protein_lstm_layer.1} parent=0 // pred_fallthru
    _
  // Predicated region
  $region26: #{protein_lstm_layer.1} parent=0 // pred_check
    _
  $region27: #{protein_lstm_layer.1} parent=0 // pred_check_branch
    %2955 = sbr.rel (0) target = $region29
  $region28: #{protein_lstm_layer.1} parent=0 // pred_region
    _
  $region29: #{protein_lstm_layer.1} parent=0 // pred_fallthru
    _
  // Predicated region
  $region30: #{protein_lstm_layer.1} parent=0 // pred_check
    _
  $region31: #{protein_lstm_layer.1} parent=0 // pred_check_branch
    %2957 = sbr.rel (0) target = $region33
  $region32: #{protein_lstm_layer.1} parent=0 // pred_region
    _
  $region33: #{protein_lstm_layer.1} parent=0 // pred_fallthru
    _

</llo_original>
